<compile_context>
chip_gen: v7x
topology: tpu7x:2x2x1
jax: 0.10.0
libtpu: 0.0.40
codegen_flags: <defaults>
</compile_context>

<pallas_src>
import functools

import jax
import jax.numpy as jnp
from jax import lax
from jax.experimental import pallas as pl
from jax.experimental.pallas import tpu as pltpu

EPS = 1e-5

_VMEM_LIMIT = None


def _vmem_limit_bytes():
  """Generation-aware scoped-VMEM budget: 64 MiB on 128-MiB parts, else 32 MiB."""
  global _VMEM_LIMIT
  if _VMEM_LIMIT is None:
    phys = 64 << 20
    try:
      info_fn = getattr(pltpu, "get_tpu_info", None)
      if info_fn is not None:
        phys = int(info_fn().vmem_capacity_bytes)
    except Exception:
      phys = 64 << 20
    _VMEM_LIMIT = (64 << 20) if phys >= (128 << 20) else (32 << 20)
  return _VMEM_LIMIT


def _pick_row_tile(rows, row_bytes, vmem_budget, preferred=1024, cap=2048):
  """Largest multiple-of-8 row tile dividing `rows` whose double-buffered blocks fit
  in roughly half of the scoped-VMEM budget (prefers `preferred`)."""
  by_vmem = (vmem_budget // 2) // max(2 * row_bytes, 1)
  cap = max(8, min(cap, by_vmem))
  cap = min(cap, rows)
  target = min(preferred, cap)
  if target >= 8 and rows % target == 0:
    return target
  best = None
  t = 8
  while t <= cap:
    if rows % t == 0:
      best = t
    t += 8
  return best if best is not None else rows


# ---------------------------------------------------------------------------
# Stage 1 / 3: row-tiled 1x1 conv (matmul) with optional fused BN+ReLU on the
# input and per-tile partial sum / sum-of-squares of the output.
# ---------------------------------------------------------------------------
def _mm_stats_kernel(*refs, pre_bn_relu, mxu_dtype):
  if pre_bn_relu:
    scale_ref, shift_ref, x_ref, w_ref, y_ref, stats_ref = refs
    # BatchNorm folded into a single FMA (scale/shift precomputed) + ReLU, in f32.
    a = jnp.maximum(
        x_ref[...].astype(jnp.float32) * scale_ref[...] + shift_ref[...], 0.0)
    a = a.astype(mxu_dtype)
  else:
    x_ref, w_ref, y_ref, stats_ref = refs
    a = x_ref[...].astype(mxu_dtype)

  y = jnp.dot(a, w_ref[...], preferred_element_type=jnp.float32)
  y_ref[...] = y.astype(y_ref.dtype)

  # Per-tile partial statistics (reduced outside) -> grid axis stays "parallel".
  stats_ref[...] = jnp.concatenate(
      [jnp.sum(y, axis=0, keepdims=True),
       jnp.sum(y * y, axis=0, keepdims=True)], axis=0)


def _conv1x1_stats(x2d, w, scale=None, shift=None, *, mxu_dtype, act_dtype):
  rows, c_in = x2d.shape
  c_out = w.shape[1]
  pre = scale is not None

  vmem = _vmem_limit_bytes()
  row_bytes = (c_in * x2d.dtype.itemsize + c_out * jnp.dtype(act_dtype).itemsize)
  tr = _pick_row_tile(rows, row_bytes, vmem)
  num_tiles = rows // tr
  grid = (num_tiles,)

  const2d = lambda arr: pl.BlockSpec(arr.shape, lambda i: (0, 0))
  row_in = pl.BlockSpec((tr, c_in), lambda i: (i, 0))

  in_specs, operands = [], []
  if pre:
    in_specs += [const2d(scale), const2d(shift)]
    operands += [scale, shift]
  in_specs += [row_in, const2d(w)]
  operands += [x2d, w]

  act_b = jnp.dtype(act_dtype).itemsize
  flops = 2 * rows * c_in * c_out
  bytes_accessed = (rows * c_in * x2d.dtype.itemsize
                    + c_in * c_out * w.dtype.itemsize
                    + rows * c_out * act_b
                    + num_tiles * 2 * c_out * 4 + 8 * c_in)

  return pl.pallas_call(
      functools.partial(_mm_stats_kernel, pre_bn_relu=pre, mxu_dtype=mxu_dtype),
      grid=grid,
      in_specs=in_specs,
      out_specs=(pl.BlockSpec((tr, c_out), lambda i: (i, 0)),
                 pl.BlockSpec((None, 2, c_out), lambda i: (i, 0, 0))),
      out_shape=(jax.ShapeDtypeStruct((rows, c_out), act_dtype),
                 jax.ShapeDtypeStruct((num_tiles, 2, c_out), jnp.float32)),
      compiler_params=pltpu.CompilerParams(
          dimension_semantics=("parallel",),
          vmem_limit_bytes=vmem),
      cost_estimate=pl.CostEstimate(flops=flops, transcendentals=0,
                                    bytes_accessed=bytes_accessed),
  )(*operands)


# ---------------------------------------------------------------------------
# Stage 2: fused BN1+ReLU and 3x3 conv (per-dy im2col -> 3 accumulating matmuls)
# with per-image partial statistics.  Output is emitted flat (H*W, C).
# ---------------------------------------------------------------------------
def _conv3x3_stats_kernel(y1_ref, scale_ref, shift_ref, w2_ref, y2_ref, stats_ref,
                          *, mxu_dtype):
  H, W, C = y1_ref.shape

  # BN1 (pre-folded scale/shift) + ReLU in f32, then cast to mxu dtype BEFORE the
  # zero-pad / im2col concatenates (halves VMEM copy traffic and footprint).
  a = jnp.maximum(
      y1_ref[...].astype(jnp.float32) * scale_ref[...] + shift_ref[...], 0.0)
  a = a.astype(mxu_dtype)

  zc = jnp.zeros((H, 1, C), mxu_dtype)
  zr = jnp.zeros((1, W + 2, C), mxu_dtype)
  ap = jnp.concatenate([zc, a, zc], axis=1)          # (H, W+2, C)
  ap = jnp.concatenate([zr, ap, zr], axis=0)         # (H+2, W+2, C)

  # Per-dy im2col: 3x less activation duplication than a single 9C-wide slab.
  acc = jnp.zeros((H * W, C), jnp.float32)
  for dy in range(3):
    cols = jnp.concatenate(
        [ap[dy:dy + H, dx:dx + W, :] for dx in range(3)],
        axis=-1).reshape(H * W, 3 * C)               # (H*W, 3C) in mxu dtype
    acc = acc + jnp.dot(cols, w2_ref[dy], preferred_element_type=jnp.float32)

  y2_ref[...] = acc.astype(y2_ref.dtype)             # flat (H*W, C) -> no relayout
  stats_ref[...] = jnp.concatenate(
      [jnp.sum(acc, axis=0, keepdims=True),
       jnp.sum(acc * acc, axis=0, keepdims=True)], axis=0)


def _conv3x3_stats(y1_4d, scale, shift, w2_per_dy, *, mxu_dtype, act_dtype):
  N, H, W, C = y1_4d.shape
  vmem = _vmem_limit_bytes()
  act_b = jnp.dtype(act_dtype).itemsize
  flops = 2 * N * H * W * 9 * C * C
  bytes_accessed = (2 * N * H * W * C * act_b + 9 * C * C * w2_per_dy.dtype.itemsize
                    + N * 2 * C * 4 + 8 * C)

  return pl.pallas_call(
      functools.partial(_conv3x3_stats_kernel, mxu_dtype=mxu_dtype),
      grid=(N,),
      in_specs=[
          pl.BlockSpec((None, H, W, C), lambda n: (n, 0, 0, 0)),
          pl.BlockSpec(scale.shape, lambda n: (0, 0)),
          pl.BlockSpec(shift.shape, lambda n: (0, 0)),
          pl.BlockSpec(w2_per_dy.shape, lambda n: (0, 0, 0)),
      ],
      out_specs=(pl.BlockSpec((None, H * W, C), lambda n: (n, 0, 0)),
                 pl.BlockSpec((None, 2, C), lambda n: (n, 0, 0))),
      out_shape=(jax.ShapeDtypeStruct((N, H * W, C), act_dtype),
                 jax.ShapeDtypeStruct((N, 2, C), jnp.float32)),
      compiler_params=pltpu.CompilerParams(
          dimension_semantics=("parallel",),
          vmem_limit_bytes=vmem),
      cost_estimate=pl.CostEstimate(flops=flops, transcendentals=0,
                                    bytes_accessed=bytes_accessed),
  )(y1_4d, scale, shift, w2_per_dy)


# ---------------------------------------------------------------------------
# Stage 4: BN3 + residual add + final ReLU (fully parallel over row tiles).
# ---------------------------------------------------------------------------
def _bn_add_relu_kernel(scale_ref, shift_ref, y_ref, x_ref, o_ref):
  y = y_ref[...].astype(jnp.float32)
  o = jnp.maximum(y * scale_ref[...] + shift_ref[...]
                  + x_ref[...].astype(jnp.float32), 0.0)
  o_ref[...] = o.astype(o_ref.dtype)


def _bn_add_relu(y3, x2d, scale, shift):
  rows, c = y3.shape
  vmem = _vmem_limit_bytes()
  row_bytes = c * (y3.dtype.itemsize + 2 * x2d.dtype.itemsize)
  tr = _pick_row_tile(rows, row_bytes, vmem)

  row_y = pl.BlockSpec((tr, c), lambda i: (i, 0))
  row_x = pl.BlockSpec((tr, c), lambda i: (i, 0))
  const = lambda a: pl.BlockSpec(a.shape, lambda i: (0, 0))

  return pl.pallas_call(
      _bn_add_relu_kernel,
      grid=(rows // tr,),
      in_specs=[const(scale), const(shift), row_y, row_x],
      out_specs=pl.BlockSpec((tr, c), lambda i: (i, 0)),
      out_shape=jax.ShapeDtypeStruct((rows, c), x2d.dtype),
      compiler_params=pltpu.CompilerParams(
          dimension_semantics=("parallel",),
          vmem_limit_bytes=vmem),
      cost_estimate=pl.CostEstimate(
          flops=3 * rows * c, transcendentals=0,
          bytes_accessed=rows * c * (y3.dtype.itemsize + 2 * x2d.dtype.itemsize)
                         + 8 * c),
  )(scale, shift, y3, x2d)


# ---------------------------------------------------------------------------
# Host-side glue.
# ---------------------------------------------------------------------------
def _fold_bn(partial_stats, gamma, beta, count):
  """Reduce per-tile partial stats and fold into a per-channel (scale, shift) FMA."""
  stats = jnp.sum(partial_stats.astype(jnp.float32), axis=0)   # (2, C)
  mean = stats[0] / count
  var = jnp.maximum(stats[1] / count - mean * mean, 0.0)
  scale = gamma.reshape(-1) * lax.rsqrt(var + EPS)
  shift = beta.reshape(-1) - mean * scale
  return scale.reshape(1, -1), shift.reshape(1, -1)


@functools.partial(jax.jit, static_argnames=("mxu_dtype",))
def bottleneck_pallas(x_nhwc, params, mxu_dtype=jnp.bfloat16):
  (w1, g1, b1, w2, g2, b2, w3, g3, b3) = params
  N, H, W, Cin = x_nhwc.shape
  Cmid = w1.shape[1]
  Cout = w3.shape[1]
  assert Cout == Cin, "identity shortcut requires in_channel == out_channel*4"
  rows = N * H * W

  act_dtype = mxu_dtype                      # inter-stage activation storage dtype
  x2d = x_nhwc.reshape(rows, Cin)            # keep input dtype; contiguous view
  w1m = w1.astype(mxu_dtype)
  w3m = w3.astype(mxu_dtype)
  w2_per_dy = w2.reshape(3, 3 * Cmid, Cmid).astype(mxu_dtype)   # HWIO -> (dy, 3C, C)

  # Stage 1: 1x1 conv + partial stats of its output.
  y1, s1 = _conv1x1_stats(x2d, w1m, mxu_dtype=mxu_dtype, act_dtype=act_dtype)
  scale1, shift1 = _fold_bn(s1, g1, b1, rows)

  # Stage 2: bn1+relu fused into the 3x3 conv + partial stats.
  y2, s2 = _conv3x3_stats(y1.reshape(N, H, W, Cmid), scale1, shift1, w2_per_dy,
                          mxu_dtype=mxu_dtype, act_dtype=act_dtype)
  scale2, shift2 = _fold_bn(s2, g2, b2, rows)

  # Stage 3: bn2+relu fused into the 1x1 expansion conv + partial stats.
  y3, s3 = _conv1x1_stats(y2.reshape(rows, Cmid), w3m, scale2, shift2,
                          mxu_dtype=mxu_dtype, act_dtype=act_dtype)
  scale3, shift3 = _fold_bn(s3, g3, b3, rows)

  # Stage 4: bn3 + residual add + relu.
  out2d = _bn_add_relu(y3, x2d, scale3, shift3)
  return out2d.reshape(N, H, W, Cout).astype(x_nhwc.dtype)


# ---------------------------------------------------------------------------
# Pure-JAX reference (NHWC). `mxu_dtype` optionally emulates the kernel's
# mixed-precision matmuls (bf16 operands, f32 accumulation).
# ---------------------------------------------------------------------------
def bottleneck_reference(x_nhwc, params, mxu_dtype=None):
  (w1, g1, b1, w2, g2, b2, w3, g3, b3) = params
  if mxu_dtype is None:
    q = lambda t: t
  else:
    q = lambda t: t.astype(mxu_dtype).astype(jnp.float32)

  def bn(y, g, b):
    mean = jnp.mean(y, axis=(0, 1, 2), keepdims=True)
    var = jnp.mean((y - mean) ** 2, axis=(0, 1, 2), keepdims=True)
    return (y - mean) * lax.rsqrt(var + EPS) * g.reshape(1, 1, 1, -1) \
        + b.reshape(1, 1, 1, -1)

  y = jnp.einsum('nhwc,cd->nhwd', q(x_nhwc), q(w1))
  y = jax.nn.relu(bn(y, g1, b1))
  y = lax.conv_general_dilated(
      q(y), q(w2), window_strides=(1, 1), padding='SAME',
      dimension_numbers=('NHWC', 'HWIO', 'NHWC'))
  y = jax.nn.relu(bn(y, g2, b2))
  y = jnp.einsum('nhwc,cd->nhwd', q(y), q(w3))
  y = bn(y, g3, b3)
  return jax.nn.relu(y + x_nhwc)


def make_params(key, c_in, c_mid):
  """Deterministic synthetic parameters (shapes per the torch __init__)."""
  expansion = 4
  c_out = c_mid * expansion
  ks = jax.random.split(key, 6)
  w1 = jax.random.normal(ks[0], (c_in, c_mid), jnp.float32) * 0.1   # 1x1
  w2 = jax.random.normal(ks[1], (3, 3, c_mid, c_mid), jnp.float32) * 0.1
  w3 = jax.random.normal(ks[2], (c_mid, c_out), jnp.float32) * 0.1  # 1x1
  g1 = 1.0 + 0.1 * jax.random.normal(ks[3], (1, c_mid), jnp.float32)
  g2 = 1.0 + 0.1 * jax.random.normal(ks[4], (1, c_mid), jnp.float32)
  g3 = 1.0 + 0.1 * jax.random.normal(ks[5], (1, c_out), jnp.float32)
  b1 = jnp.full((1, c_mid), 0.05, jnp.float32)
  b2 = jnp.full((1, c_mid), -0.05, jnp.float32)
  b3 = jnp.full((1, c_out), 0.02, jnp.float32)
  return (w1, g1, b1, w2, g2, b2, w3, g3, b3)


if __name__ == "__main__":
  # Small shapes consistent with the module (stride=1, downsample=None requires
  # in_channel == out_channel * 4).  Tiny channel counts under-fill the 128 lanes;
  # the (rows, C) layout becomes lane-dense at real widths.
  N, H, W = 2, 16, 16
  out_channel = 4
  in_channel = out_channel * 4          # 16

  key = jax.random.PRNGKey(0)
  kx, kp = jax.random.split(key)
  x_nchw = jax.random.normal(kx, (N, in_channel, H, W), jnp.float32)
  params = make_params(kp, in_channel, out_channel)

  # NCHW -> NHWC once at the block boundary (inside a network keep NHWC end-to-end).
  x_nhwc = jnp.transpose(x_nchw, (0, 2, 3, 1))

  # Default (performance) path: bf16 MXU operands + bf16 inter-stage activations,
  # f32 accumulation and f32 BN statistics.  Looser tolerance covers the bf16
  # activation-storage rounding that the reference does not emulate exactly.
  out_bf16 = jax.block_until_ready(bottleneck_pallas(x_nhwc, params))
  ref_bf16 = bottleneck_reference(x_nhwc, params, mxu_dtype=jnp.bfloat16)
  err_bf16 = float(jnp.max(jnp.abs(out_bf16.astype(jnp.float32) - ref_bf16)))
  assert err_bf16 < 1e-1, err_bf16

  # Full-f32 path vs. pure-f32 reference (structural / two-phase-BN exactness).
  out_f32 = jax.block_until_ready(
      bottleneck_pallas(x_nhwc, params, mxu_dtype=jnp.float32))
  ref_f32 = bottleneck_reference(x_nhwc, params)
  err_f32 = float(jnp.max(jnp.abs(out_f32 - ref_f32)))
  assert err_f32 < 2e-3, err_f32

  out_nchw = jnp.transpose(out_bf16, (0, 3, 1, 2))
  assert out_nchw.shape == (N, in_channel, H, W)

  print("KERNEL_OK")
</pallas_src>

<mosaic_0001>
module attributes {stable_mosaic.version = 11 : i64} {
  func.func @_mm_stats_kernel(%arg0: i32, %arg1: memref<512x16xf32, #tpu.memory_space<vmem>>, %arg2: memref<16x4xbf16, #tpu.memory_space<vmem>>, %arg3: memref<512x4xbf16, #tpu.memory_space<vmem>>, %arg4: memref<1x2x4xf32, #tpu.memory_space<vmem>>) attributes {dimension_semantics = [#tpu.dimension_semantics<parallel>], iteration_bounds = array<i64: 1>, scalar_prefetch = 0 : i64, scratch_operands = 0 : i64, tpu.core_type = #tpu.core_type<tc>, window_params = [{transform_indices = @transform_0, window_bounds = array<i64: 512, 16>}, {pipeline_mode = #tpu.pipeline_mode<synchronous>, transform_indices = @transform_1, window_bounds = array<i64: 16, 4>}, {transform_indices = @transform_2, window_bounds = array<i64: 512, 4>}, {transform_indices = @transform_3, window_bounds = array<i64: 1, 2, 4>}]} {
    %c0 = arith.constant 0 : index
    %c0_0 = arith.constant 0 : index
    %0 = vector.load %arg1[%c0, %c0_0] : memref<512x16xf32, #tpu.memory_space<vmem>>, vector<512x16xf32>
    %1 = arith.truncf %0 : vector<512x16xf32> to vector<512x16xbf16>
    %c0_1 = arith.constant 0 : index
    %c0_2 = arith.constant 0 : index
    %2 = vector.load %arg2[%c0_1, %c0_2] : memref<16x4xbf16, #tpu.memory_space<vmem>>, vector<16x4xbf16>
    %cst = arith.constant dense<0.000000e+00> : vector<512x4xf32>
    %3 = tpu.matmul %1, %2, %cst {dimension_numbers = #tpu.dot_dimension_numbers<[1], [0], [0], [1], [0, 0, 1, 1], [], []>} : vector<512x16xbf16>, vector<16x4xbf16>, vector<512x4xf32> -> vector<512x4xf32>
    %4 = arith.truncf %3 : vector<512x4xf32> to vector<512x4xbf16>
    %c0_3 = arith.constant 0 : index
    %c0_4 = arith.constant 0 : index
    %5 = vector.load %arg3[%c0_3, %c0_4] : memref<512x4xbf16, #tpu.memory_space<vmem>>, vector<512x4xbf16>
    tpu.vector_store %arg3[%c0_3, %c0_4], %4 {strides = array<i32>} : memref<512x4xbf16, #tpu.memory_space<vmem>>, vector<512x4xbf16>,
    %cst_5 = arith.constant dense<0.000000e+00> : vector<4xf32>
    %6 = vector.multi_reduction <add>, %3, %cst_5 [0] : vector<512x4xf32> to vector<4xf32>
    %7 = vector.shape_cast %6 : vector<4xf32> to vector<1x4xf32>
    %8 = arith.mulf %3, %3 : vector<512x4xf32>
    %cst_6 = arith.constant dense<0.000000e+00> : vector<4xf32>
    %9 = vector.multi_reduction <add>, %8, %cst_6 [0] : vector<512x4xf32> to vector<4xf32>
    %10 = vector.shape_cast %9 : vector<4xf32> to vector<1x4xf32>
    %11 = tpu.concatenate %7, %10 in 0 : vector<1x4xf32>, vector<1x4xf32> -> vector<2x4xf32>
    %c0_7 = arith.constant 0 : index
    %c0_8 = arith.constant 0 : index
    %c0_9 = arith.constant 0 : index
    %12 = vector.load %arg4[%c0_7, %c0_8, %c0_9] : memref<1x2x4xf32, #tpu.memory_space<vmem>>, vector<1x2x4xf32>
    %13 = vector.shape_cast %12 : vector<1x2x4xf32> to vector<2x4xf32>
    %14 = vector.shape_cast %11 : vector<2x4xf32> to vector<1x2x4xf32>
    tpu.vector_store %arg4[%c0_7, %c0_8, %c0_9], %14 {strides = array<i32>} : memref<1x2x4xf32, #tpu.memory_space<vmem>>, vector<1x2x4xf32>,
    return
  }
  func.func @transform_0(%arg0: i32) -> (i32, i32) {
    %c0_i32 = arith.constant 0 : i32
    %c0_i32_0 = arith.constant 0 : i32
    return %arg0, %c0_i32 : i32, i32
  }
  func.func @transform_1(%arg0: i32) -> (i32, i32) {
    %c0_i32 = arith.constant 0 : i32
    %c0_i32_0 = arith.constant 0 : i32
    %c0_i32_1 = arith.constant 0 : i32
    return %c0_i32, %c0_i32_0 : i32, i32
  }
  func.func @transform_2(%arg0: i32) -> (i32, i32) {
    %c0_i32 = arith.constant 0 : i32
    %c0_i32_0 = arith.constant 0 : i32
    return %arg0, %c0_i32 : i32, i32
  }
  func.func @transform_3(%arg0: i32) -> (i32, i32, i32) {
    %c0_i32 = arith.constant 0 : i32
    %c0_i32_0 = arith.constant 0 : i32
    %c0_i32_1 = arith.constant 0 : i32
    return %arg0, %c0_i32, %c0_i32_0 : i32, i32, i32
  }
}

module attributes {stable_mosaic.version = 11 : i64} {
  func.func @_conv3x3_stats_kernel(%arg0: i32, %arg1: memref<1x16x16x4xbf16, #tpu.memory_space<vmem>>, %arg2: memref<1x4xf32, #tpu.memory_space<vmem>>, %arg3: memref<1x4xf32, #tpu.memory_space<vmem>>, %arg4: memref<3x12x4xbf16, #tpu.memory_space<vmem>>, %arg5: memref<1x256x4xbf16, #tpu.memory_space<vmem>>, %arg6: memref<1x2x4xf32, #tpu.memory_space<vmem>>) attributes {dimension_semantics = [#tpu.dimension_semantics<parallel>], iteration_bounds = array<i64: 2>, scalar_prefetch = 0 : i64, scratch_operands = 0 : i64, tpu.core_type = #tpu.core_type<tc>, window_params = [{transform_indices = @transform_0, window_bounds = array<i64: 1, 16, 16, 4>}, {pipeline_mode = #tpu.pipeline_mode<synchronous>, transform_indices = @transform_1, window_bounds = array<i64: 1, 4>}, {pipeline_mode = #tpu.pipeline_mode<synchronous>, transform_indices = @transform_2, window_bounds = array<i64: 1, 4>}, {pipeline_mode = #tpu.pipeline_mode<synchronous>, transform_indices = @transform_3, window_bounds = array<i64: 3, 12, 4>}, {transform_indices = @transform_4, window_bounds = array<i64: 1, 256, 4>}, {transform_indices = @transform_5, window_bounds = array<i64: 1, 2, 4>}]} {
    %c0 = arith.constant 0 : index
    %c0_0 = arith.constant 0 : index
    %c0_1 = arith.constant 0 : index
    %c0_2 = arith.constant 0 : index
    %0 = vector.load %arg1[%c0, %c0_0, %c0_1, %c0_2] : memref<1x16x16x4xbf16, #tpu.memory_space<vmem>>, vector<1x16x16x4xbf16>
    %1 = vector.shape_cast %0 : vector<1x16x16x4xbf16> to vector<16x16x4xbf16>
    %2 = arith.extf %1 : vector<16x16x4xbf16> to vector<16x16x4xf32>
    %c0_3 = arith.constant 0 : index
    %c0_4 = arith.constant 0 : index
    %3 = vector.load %arg2[%c0_3, %c0_4] : memref<1x4xf32, #tpu.memory_space<vmem>>, vector<1x4xf32>
    %4 = vector.shape_cast %3 : vector<1x4xf32> to vector<1x1x4xf32>
    %5 = vector.broadcast %4 : vector<1x1x4xf32> to vector<16x16x4xf32>
    %6 = arith.mulf %2, %5 : vector<16x16x4xf32>
    %c0_5 = arith.constant 0 : index
    %c0_6 = arith.constant 0 : index
    %7 = vector.load %arg3[%c0_5, %c0_6] : memref<1x4xf32, #tpu.memory_space<vmem>>, vector<1x4xf32>
    %8 = vector.shape_cast %7 : vector<1x4xf32> to vector<1x1x4xf32>
    %9 = vector.broadcast %8 : vector<1x1x4xf32> to vector<16x16x4xf32>
    %10 = arith.addf %6, %9 : vector<16x16x4xf32>
    %cst = arith.constant 0.000000e+00 : f32
    %11 = vector.broadcast %cst : f32 to vector<16x16x4xf32>
    %12 = arith.maximumf %10, %11 : vector<16x16x4xf32>
    %13 = arith.truncf %12 : vector<16x16x4xf32> to vector<16x16x4xbf16>
    %cst_7 = arith.constant 0.000000e+00 : bf16
    %14 = vector.broadcast %cst_7 : bf16 to vector<16x1x4xbf16>
    %cst_8 = arith.constant 0.000000e+00 : bf16
    %15 = vector.broadcast %cst_8 : bf16 to vector<1x18x4xbf16>
    %16 = tpu.concatenate %14, %13, %14 in 1 : vector<16x1x4xbf16>, vector<16x16x4xbf16>, vector<16x1x4xbf16> -> vector<16x18x4xbf16>
    %17 = tpu.concatenate %15, %16, %15 in 0 : vector<1x18x4xbf16>, vector<16x18x4xbf16>, vector<1x18x4xbf16> -> vector<18x18x4xbf16>
    %cst_9 = arith.constant 0.000000e+00 : f32
    %18 = vector.broadcast %cst_9 : f32 to vector<256x4xf32>
    %19 = vector.extract_strided_slice %17 {offsets = [0, 0, 0], sizes = [16, 16, 4], strides = [1, 1, 1]} : vector<18x18x4xbf16> to vector<16x16x4xbf16>
    %20 = vector.extract_strided_slice %17 {offsets = [0, 1, 0], sizes = [16, 16, 4], strides = [1, 1, 1]} : vector<18x18x4xbf16> to vector<16x16x4xbf16>
    %21 = vector.extract_strided_slice %17 {offsets = [0, 2, 0], sizes = [16, 16, 4], strides = [1, 1, 1]} : vector<18x18x4xbf16> to vector<16x16x4xbf16>
    %22 = tpu.concatenate %19, %20, %21 in 2 : vector<16x16x4xbf16>, vector<16x16x4xbf16>, vector<16x16x4xbf16> -> vector<16x16x12xbf16>
    %23 = vector.shape_cast %22 : vector<16x16x12xbf16> to vector<256x12xbf16>
    %c0_10 = arith.constant 0 : index
    %c0_11 = arith.constant 0 : index
    %c0_12 = arith.constant 0 : index
    %24 = vector.load %arg4[%c0_10, %c0_11, %c0_12] : memref<3x12x4xbf16, #tpu.memory_space<vmem>>, vector<1x12x4xbf16>
    %25 = vector.shape_cast %24 : vector<1x12x4xbf16> to vector<12x4xbf16>
    %cst_13 = arith.constant dense<0.000000e+00> : vector<256x4xf32>
    %26 = tpu.matmul %23, %25, %cst_13 {dimension_numbers = #tpu.dot_dimension_numbers<[1], [0], [0], [1], [0, 0, 1, 1], [], []>} : vector<256x12xbf16>, vector<12x4xbf16>, vector<256x4xf32> -> vector<256x4xf32>
    %27 = arith.addf %18, %26 : vector<256x4xf32>
    %28 = vector.extract_strided_slice %17 {offsets = [1, 0, 0], sizes = [16, 16, 4], strides = [1, 1, 1]} : vector<18x18x4xbf16> to vector<16x16x4xbf16>
    %29 = vector.extract_strided_slice %17 {offsets = [1, 1, 0], sizes = [16, 16, 4], strides = [1, 1, 1]} : vector<18x18x4xbf16> to vector<16x16x4xbf16>
    %30 = vector.extract_strided_slice %17 {offsets = [1, 2, 0], sizes = [16, 16, 4], strides = [1, 1, 1]} : vector<18x18x4xbf16> to vector<16x16x4xbf16>
    %31 = tpu.concatenate %28, %29, %30 in 2 : vector<16x16x4xbf16>, vector<16x16x4xbf16>, vector<16x16x4xbf16> -> vector<16x16x12xbf16>
    %32 = vector.shape_cast %31 : vector<16x16x12xbf16> to vector<256x12xbf16>
    %c1 = arith.constant 1 : index
    %c0_14 = arith.constant 0 : index
    %c0_15 = arith.constant 0 : index
    %33 = vector.load %arg4[%c1, %c0_14, %c0_15] : memref<3x12x4xbf16, #tpu.memory_space<vmem>>, vector<1x12x4xbf16>
    %34 = vector.shape_cast %33 : vector<1x12x4xbf16> to vector<12x4xbf16>
    %cst_16 = arith.constant dense<0.000000e+00> : vector<256x4xf32>
    %35 = tpu.matmul %32, %34, %cst_16 {dimension_numbers = #tpu.dot_dimension_numbers<[1], [0], [0], [1], [0, 0, 1, 1], [], []>} : vector<256x12xbf16>, vector<12x4xbf16>, vector<256x4xf32> -> vector<256x4xf32>
    %36 = arith.addf %27, %35 : vector<256x4xf32>
    %37 = vector.extract_strided_slice %17 {offsets = [2, 0, 0], sizes = [16, 16, 4], strides = [1, 1, 1]} : vector<18x18x4xbf16> to vector<16x16x4xbf16>
    %38 = vector.extract_strided_slice %17 {offsets = [2, 1, 0], sizes = [16, 16, 4], strides = [1, 1, 1]} : vector<18x18x4xbf16> to vector<16x16x4xbf16>
    %39 = vector.extract_strided_slice %17 {offsets = [2, 2, 0], sizes = [16, 16, 4], strides = [1, 1, 1]} : vector<18x18x4xbf16> to vector<16x16x4xbf16>
    %40 = tpu.concatenate %37, %38, %39 in 2 : vector<16x16x4xbf16>, vector<16x16x4xbf16>, vector<16x16x4xbf16> -> vector<16x16x12xbf16>
    %41 = vector.shape_cast %40 : vector<16x16x12xbf16> to vector<256x12xbf16>
    %c2 = arith.constant 2 : index
    %c0_17 = arith.constant 0 : index
    %c0_18 = arith.constant 0 : index
    %42 = vector.load %arg4[%c2, %c0_17, %c0_18] : memref<3x12x4xbf16, #tpu.memory_space<vmem>>, vector<1x12x4xbf16>
    %43 = vector.shape_cast %42 : vector<1x12x4xbf16> to vector<12x4xbf16>
    %cst_19 = arith.constant dense<0.000000e+00> : vector<256x4xf32>
    %44 = tpu.matmul %41, %43, %cst_19 {dimension_numbers = #tpu.dot_dimension_numbers<[1], [0], [0], [1], [0, 0, 1, 1], [], []>} : vector<256x12xbf16>, vector<12x4xbf16>, vector<256x4xf32> -> vector<256x4xf32>
    %45 = arith.addf %36, %44 : vector<256x4xf32>
    %46 = arith.truncf %45 : vector<256x4xf32> to vector<256x4xbf16>
    %c0_20 = arith.constant 0 : index
    %c0_21 = arith.constant 0 : index
    %c0_22 = arith.constant 0 : index
    %47 = vector.load %arg5[%c0_20, %c0_21, %c0_22] : memref<1x256x4xbf16, #tpu.memory_space<vmem>>, vector<1x256x4xbf16>
    %48 = vector.shape_cast %47 : vector<1x256x4xbf16> to vector<256x4xbf16>
    %49 = vector.shape_cast %46 : vector<256x4xbf16> to vector<1x256x4xbf16>
    tpu.vector_store %arg5[%c0_20, %c0_21, %c0_22], %49 {strides = array<i32>} : memref<1x256x4xbf16, #tpu.memory_space<vmem>>, vector<1x256x4xbf16>,
    %cst_23 = arith.constant dense<0.000000e+00> : vector<4xf32>
    %50 = vector.multi_reduction <add>, %45, %cst_23 [0] : vector<256x4xf32> to vector<4xf32>
    %51 = vector.shape_cast %50 : vector<4xf32> to vector<1x4xf32>
    %52 = arith.mulf %45, %45 : vector<256x4xf32>
    %cst_24 = arith.constant dense<0.000000e+00> : vector<4xf32>
    %53 = vector.multi_reduction <add>, %52, %cst_24 [0] : vector<256x4xf32> to vector<4xf32>
    %54 = vector.shape_cast %53 : vector<4xf32> to vector<1x4xf32>
    %55 = tpu.concatenate %51, %54 in 0 : vector<1x4xf32>, vector<1x4xf32> -> vector<2x4xf32>
    %c0_25 = arith.constant 0 : index
    %c0_26 = arith.constant 0 : index
    %c0_27 = arith.constant 0 : index
    %56 = vector.load %arg6[%c0_25, %c0_26, %c0_27] : memref<1x2x4xf32, #tpu.memory_space<vmem>>, vector<1x2x4xf32>
    %57 = vector.shape_cast %56 : vector<1x2x4xf32> to vector<2x4xf32>
    %58 = vector.shape_cast %55 : vector<2x4xf32> to vector<1x2x4xf32>
    tpu.vector_store %arg6[%c0_25, %c0_26, %c0_27], %58 {strides = array<i32>} : memref<1x2x4xf32, #tpu.memory_space<vmem>>, vector<1x2x4xf32>,
    return
  }
  func.func @transform_0(%arg0: i32) -> (i32, i32, i32, i32) {
    %c0_i32 = arith.constant 0 : i32
    %c0_i32_0 = arith.constant 0 : i32
    %c0_i32_1 = arith.constant 0 : i32
    %c0_i32_2 = arith.constant 0 : i32
    return %arg0, %c0_i32, %c0_i32_0, %c0_i32_1 : i32, i32, i32, i32
  }
  func.func @transform_1(%arg0: i32) -> (i32, i32) {
    %c0_i32 = arith.constant 0 : i32
    %c0_i32_0 = arith.constant 0 : i32
    %c0_i32_1 = arith.constant 0 : i32
    return %c0_i32, %c0_i32_0 : i32, i32
  }
  func.func @transform_2(%arg0: i32) -> (i32, i32) {
    %c0_i32 = arith.constant 0 : i32
    %c0_i32_0 = arith.constant 0 : i32
    %c0_i32_1 = arith.constant 0 : i32
    return %c0_i32, %c0_i32_0 : i32, i32
  }
  func.func @transform_3(%arg0: i32) -> (i32, i32, i32) {
    %c0_i32 = arith.constant 0 : i32
    %c0_i32_0 = arith.constant 0 : i32
    %c0_i32_1 = arith.constant 0 : i32
    %c0_i32_2 = arith.constant 0 : i32
    return %c0_i32, %c0_i32_0, %c0_i32_1 : i32, i32, i32
  }
  func.func @transform_4(%arg0: i32) -> (i32, i32, i32) {
    %c0_i32 = arith.constant 0 : i32
    %c0_i32_0 = arith.constant 0 : i32
    %c0_i32_1 = arith.constant 0 : i32
    return %arg0, %c0_i32, %c0_i32_0 : i32, i32, i32
  }
  func.func @transform_5(%arg0: i32) -> (i32, i32, i32) {
    %c0_i32 = arith.constant 0 : i32
    %c0_i32_0 = arith.constant 0 : i32
    %c0_i32_1 = arith.constant 0 : i32
    return %arg0, %c0_i32, %c0_i32_0 : i32, i32, i32
  }
}

module attributes {stable_mosaic.version = 11 : i64} {
  func.func @_mm_stats_kernel(%arg0: i32, %arg1: memref<1x4xf32, #tpu.memory_space<vmem>>, %arg2: memref<1x4xf32, #tpu.memory_space<vmem>>, %arg3: memref<512x4xbf16, #tpu.memory_space<vmem>>, %arg4: memref<4x16xbf16, #tpu.memory_space<vmem>>, %arg5: memref<512x16xbf16, #tpu.memory_space<vmem>>, %arg6: memref<1x2x16xf32, #tpu.memory_space<vmem>>) attributes {dimension_semantics = [#tpu.dimension_semantics<parallel>], iteration_bounds = array<i64: 1>, scalar_prefetch = 0 : i64, scratch_operands = 0 : i64, tpu.core_type = #tpu.core_type<tc>, window_params = [{pipeline_mode = #tpu.pipeline_mode<synchronous>, transform_indices = @transform_0, window_bounds = array<i64: 1, 4>}, {pipeline_mode = #tpu.pipeline_mode<synchronous>, transform_indices = @transform_1, window_bounds = array<i64: 1, 4>}, {transform_indices = @transform_2, window_bounds = array<i64: 512, 4>}, {pipeline_mode = #tpu.pipeline_mode<synchronous>, transform_indices = @transform_3, window_bounds = array<i64: 4, 16>}, {transform_indices = @transform_4, window_bounds = array<i64: 512, 16>}, {transform_indices = @transform_5, window_bounds = array<i64: 1, 2, 16>}]} {
    %c0 = arith.constant 0 : index
    %c0_0 = arith.constant 0 : index
    %0 = vector.load %arg3[%c0, %c0_0] : memref<512x4xbf16, #tpu.memory_space<vmem>>, vector<512x4xbf16>
    %1 = arith.extf %0 : vector<512x4xbf16> to vector<512x4xf32>
    %c0_1 = arith.constant 0 : index
    %c0_2 = arith.constant 0 : index
    %2 = vector.load %arg1[%c0_1, %c0_2] : memref<1x4xf32, #tpu.memory_space<vmem>>, vector<1x4xf32>
    %3 = vector.broadcast %2 : vector<1x4xf32> to vector<512x4xf32>
    %4 = arith.mulf %1, %3 : vector<512x4xf32>
    %c0_3 = arith.constant 0 : index
    %c0_4 = arith.constant 0 : index
    %5 = vector.load %arg2[%c0_3, %c0_4] : memref<1x4xf32, #tpu.memory_space<vmem>>, vector<1x4xf32>
    %6 = vector.broadcast %5 : vector<1x4xf32> to vector<512x4xf32>
    %7 = arith.addf %4, %6 : vector<512x4xf32>
    %cst = arith.constant 0.000000e+00 : f32
    %8 = vector.broadcast %cst : f32 to vector<512x4xf32>
    %9 = arith.maximumf %7, %8 : vector<512x4xf32>
    %10 = arith.truncf %9 : vector<512x4xf32> to vector<512x4xbf16>
    %c0_5 = arith.constant 0 : index
    %c0_6 = arith.constant 0 : index
    %11 = vector.load %arg4[%c0_5, %c0_6] : memref<4x16xbf16, #tpu.memory_space<vmem>>, vector<4x16xbf16>
    %cst_7 = arith.constant dense<0.000000e+00> : vector<512x16xf32>
    %12 = tpu.matmul %10, %11, %cst_7 {dimension_numbers = #tpu.dot_dimension_numbers<[1], [0], [0], [1], [0, 0, 1, 1], [], []>} : vector<512x4xbf16>, vector<4x16xbf16>, vector<512x16xf32> -> vector<512x16xf32>
    %13 = arith.truncf %12 : vector<512x16xf32> to vector<512x16xbf16>
    %c0_8 = arith.constant 0 : index
    %c0_9 = arith.constant 0 : index
    %14 = vector.load %arg5[%c0_8, %c0_9] : memref<512x16xbf16, #tpu.memory_space<vmem>>, vector<512x16xbf16>
    tpu.vector_store %arg5[%c0_8, %c0_9], %13 {strides = array<i32>} : memref<512x16xbf16, #tpu.memory_space<vmem>>, vector<512x16xbf16>,
    %cst_10 = arith.constant dense<0.000000e+00> : vector<16xf32>
    %15 = vector.multi_reduction <add>, %12, %cst_10 [0] : vector<512x16xf32> to vector<16xf32>
    %16 = vector.shape_cast %15 : vector<16xf32> to vector<1x16xf32>
    %17 = arith.mulf %12, %12 : vector<512x16xf32>
    %cst_11 = arith.constant dense<0.000000e+00> : vector<16xf32>
    %18 = vector.multi_reduction <add>, %17, %cst_11 [0] : vector<512x16xf32> to vector<16xf32>
    %19 = vector.shape_cast %18 : vector<16xf32> to vector<1x16xf32>
    %20 = tpu.concatenate %16, %19 in 0 : vector<1x16xf32>, vector<1x16xf32> -> vector<2x16xf32>
    %c0_12 = arith.constant 0 : index
    %c0_13 = arith.constant 0 : index
    %c0_14 = arith.constant 0 : index
    %21 = vector.load %arg6[%c0_12, %c0_13, %c0_14] : memref<1x2x16xf32, #tpu.memory_space<vmem>>, vector<1x2x16xf32>
    %22 = vector.shape_cast %21 : vector<1x2x16xf32> to vector<2x16xf32>
    %23 = vector.shape_cast %20 : vector<2x16xf32> to vector<1x2x16xf32>
    tpu.vector_store %arg6[%c0_12, %c0_13, %c0_14], %23 {strides = array<i32>} : memref<1x2x16xf32, #tpu.memory_space<vmem>>, vector<1x2x16xf32>,
    return
  }
  func.func @transform_0(%arg0: i32) -> (i32, i32) {
    %c0_i32 = arith.constant 0 : i32
    %c0_i32_0 = arith.constant 0 : i32
    %c0_i32_1 = arith.constant 0 : i32
    return %c0_i32, %c0_i32_0 : i32, i32
  }
  func.func @transform_1(%arg0: i32) -> (i32, i32) {
    %c0_i32 = arith.constant 0 : i32
    %c0_i32_0 = arith.constant 0 : i32
    %c0_i32_1 = arith.constant 0 : i32
    return %c0_i32, %c0_i32_0 : i32, i32
  }
  func.func @transform_2(%arg0: i32) -> (i32, i32) {
    %c0_i32 = arith.constant 0 : i32
    %c0_i32_0 = arith.constant 0 : i32
    return %arg0, %c0_i32 : i32, i32
  }
  func.func @transform_3(%arg0: i32) -> (i32, i32) {
    %c0_i32 = arith.constant 0 : i32
    %c0_i32_0 = arith.constant 0 : i32
    %c0_i32_1 = arith.constant 0 : i32
    return %c0_i32, %c0_i32_0 : i32, i32
  }
  func.func @transform_4(%arg0: i32) -> (i32, i32) {
    %c0_i32 = arith.constant 0 : i32
    %c0_i32_0 = arith.constant 0 : i32
    return %arg0, %c0_i32 : i32, i32
  }
  func.func @transform_5(%arg0: i32) -> (i32, i32, i32) {
    %c0_i32 = arith.constant 0 : i32
    %c0_i32_0 = arith.constant 0 : i32
    %c0_i32_1 = arith.constant 0 : i32
    return %arg0, %c0_i32, %c0_i32_0 : i32, i32, i32
  }
}

module attributes {stable_mosaic.version = 11 : i64} {
  func.func @_bn_add_relu_kernel(%arg0: i32, %arg1: memref<1x16xf32, #tpu.memory_space<vmem>>, %arg2: memref<1x16xf32, #tpu.memory_space<vmem>>, %arg3: memref<512x16xbf16, #tpu.memory_space<vmem>>, %arg4: memref<512x16xf32, #tpu.memory_space<vmem>>, %arg5: memref<512x16xf32, #tpu.memory_space<vmem>>) attributes {dimension_semantics = [#tpu.dimension_semantics<parallel>], iteration_bounds = array<i64: 1>, scalar_prefetch = 0 : i64, scratch_operands = 0 : i64, tpu.core_type = #tpu.core_type<tc>, window_params = [{pipeline_mode = #tpu.pipeline_mode<synchronous>, transform_indices = @transform_0, window_bounds = array<i64: 1, 16>}, {pipeline_mode = #tpu.pipeline_mode<synchronous>, transform_indices = @transform_1, window_bounds = array<i64: 1, 16>}, {transform_indices = @transform_2, window_bounds = array<i64: 512, 16>}, {transform_indices = @transform_3, window_bounds = array<i64: 512, 16>}, {transform_indices = @transform_4, window_bounds = array<i64: 512, 16>}]} {
    %c0 = arith.constant 0 : index
    %c0_0 = arith.constant 0 : index
    %0 = vector.load %arg3[%c0, %c0_0] : memref<512x16xbf16, #tpu.memory_space<vmem>>, vector<512x16xbf16>
    %1 = arith.extf %0 : vector<512x16xbf16> to vector<512x16xf32>
    %c0_1 = arith.constant 0 : index
    %c0_2 = arith.constant 0 : index
    %2 = vector.load %arg1[%c0_1, %c0_2] : memref<1x16xf32, #tpu.memory_space<vmem>>, vector<1x16xf32>
    %3 = vector.broadcast %2 : vector<1x16xf32> to vector<512x16xf32>
    %4 = arith.mulf %1, %3 : vector<512x16xf32>
    %c0_3 = arith.constant 0 : index
    %c0_4 = arith.constant 0 : index
    %5 = vector.load %arg2[%c0_3, %c0_4] : memref<1x16xf32, #tpu.memory_space<vmem>>, vector<1x16xf32>
    %6 = vector.broadcast %5 : vector<1x16xf32> to vector<512x16xf32>
    %7 = arith.addf %4, %6 : vector<512x16xf32>
    %c0_5 = arith.constant 0 : index
    %c0_6 = arith.constant 0 : index
    %8 = vector.load %arg4[%c0_5, %c0_6] : memref<512x16xf32, #tpu.memory_space<vmem>>, vector<512x16xf32>
    %9 = arith.addf %7, %8 : vector<512x16xf32>
    %cst = arith.constant 0.000000e+00 : f32
    %10 = vector.broadcast %cst : f32 to vector<512x16xf32>
    %11 = arith.maximumf %9, %10 : vector<512x16xf32>
    %c0_7 = arith.constant 0 : index
    %c0_8 = arith.constant 0 : index
    %12 = vector.load %arg5[%c0_7, %c0_8] : memref<512x16xf32, #tpu.memory_space<vmem>>, vector<512x16xf32>
    tpu.vector_store %arg5[%c0_7, %c0_8], %11 {strides = array<i32>} : memref<512x16xf32, #tpu.memory_space<vmem>>, vector<512x16xf32>,
    return
  }
  func.func @transform_0(%arg0: i32) -> (i32, i32) {
    %c0_i32 = arith.constant 0 : i32
    %c0_i32_0 = arith.constant 0 : i32
    %c0_i32_1 = arith.constant 0 : i32
    return %c0_i32, %c0_i32_0 : i32, i32
  }
  func.func @transform_1(%arg0: i32) -> (i32, i32) {
    %c0_i32 = arith.constant 0 : i32
    %c0_i32_0 = arith.constant 0 : i32
    %c0_i32_1 = arith.constant 0 : i32
    return %c0_i32, %c0_i32_0 : i32, i32
  }
  func.func @transform_2(%arg0: i32) -> (i32, i32) {
    %c0_i32 = arith.constant 0 : i32
    %c0_i32_0 = arith.constant 0 : i32
    return %arg0, %c0_i32 : i32, i32
  }
  func.func @transform_3(%arg0: i32) -> (i32, i32) {
    %c0_i32 = arith.constant 0 : i32
    %c0_i32_0 = arith.constant 0 : i32
    return %arg0, %c0_i32 : i32, i32
  }
  func.func @transform_4(%arg0: i32) -> (i32, i32) {
    %c0_i32 = arith.constant 0 : i32
    %c0_i32_0 = arith.constant 0 : i32
    return %arg0, %c0_i32 : i32, i32
  }
}

</mosaic_0001>

<llo_original>
// kernel: bottleneck_pallas.7
$region0: #{bottleneck_pallas.7}
  #allocation0 [shape = 'u32[]', space=smem, size = 0x4, offset = 0x4, fixed_abs, tag = 'smem constant byte address 0x4 - core index']
  #allocation1 [shape = 'u32[144,128]{1,0:T(1,128)}', space=vmem, size = 0x12000, scoped, tag = 'internal scratch']
  %s0 = inlined_call_operand.vmem [shape: f32[1,16], index: 0, kind: input, shape index: {}]
  %s1 = inlined_call_operand.vmem [shape: f32[1,16], index: 1, kind: input, shape index: {}]
  %s2 = inlined_call_operand.vmem [shape: bf16[512,16], index: 2, kind: input, shape index: {}]
  %s3 = inlined_call_operand.vmem [shape: f32[512,16], index: 3, kind: input, shape index: {}]
  %s4 = inlined_call_operand.hbm [shape: f32[512,16], index: 4, kind: output, shape index: {}]
  %s5 = sld [smem:[#allocation0]]
  $region26: #{bottleneck_pallas.7} parent=0
    _
  %s7 = ssub.s32 1, %s5
  %s8 = scalar_select 0, %s7, %s5
  $region1: #{bottleneck_pallas.7} parent=0
    #allocation2 [shape = 'u8[262144]{0}', space=vmem, size = 0x40000, scoped, tag = 'output window, operand 0, single buffered']
    #allocation3 [shape = 's32[1]{0}', space=sflag, size = 0x4, scoped, tag = 'scoped memory for bottleneck_pallas.7']
    %9 = vsyncpa [#allocation3], 0
    // Predicated region
    $region2: #{bottleneck_pallas.7} parent=1 // pred_check
      _
    $region3: #{bottleneck_pallas.7} parent=1 // pred_check_branch
      %11 = sbr.rel (0) target = $region5
    $region4: #{bottleneck_pallas.7} parent=1 // pred_region
      _
    $region5: #{bottleneck_pallas.7} parent=1 // pred_fallthru
      _
    // Predicated region
    $region6: #{bottleneck_pallas.7} parent=1 // pred_check
      _
    $region7: #{bottleneck_pallas.7} parent=1 // pred_check_branch
      %13 = sbr.rel (0) target = $region9
    $region8: #{bottleneck_pallas.7} parent=1 // pred_region
      _
    $region9: #{bottleneck_pallas.7} parent=1 // pred_fallthru
      _
    // Predicated region
    $region10: #{bottleneck_pallas.7} parent=1 // pred_check
      _
    $region11: #{bottleneck_pallas.7} parent=1 // pred_check_branch
      %15 = sbr.rel (0) target = $region13
    $region12: #{bottleneck_pallas.7} parent=1 // pred_region
      _
    $region13: #{bottleneck_pallas.7} parent=1 // pred_fallthru
      _
    // Predicated region
    $region14: #{bottleneck_pallas.7} parent=1 // pred_check
      _
    $region15: #{bottleneck_pallas.7} parent=1 // pred_check_branch
      %17 = sbr.rel (0) target = $region17
    $region16: #{bottleneck_pallas.7} parent=1 // pred_region
      _
    $region17: #{bottleneck_pallas.7} parent=1 // pred_fallthru
      _
    %v18 = vld [vmem:[%s2] sm:$0xf]
    %v19 = vld [vmem:[%s2 + $0x4] sm:$0xf]
    %v20 = vld [vmem:[%s2 + $0x8] sm:$0xf]
    %v21 = vld [vmem:[%s2 + $0xc] sm:$0xf]
    %v22 = vld [vmem:[%s2 + $0x10] sm:$0xf]
    %v23 = vld [vmem:[%s2 + $0x14] sm:$0xf]
    %v24 = vld [vmem:[%s2 + $0x18] sm:$0xf]
    %v25 = vld [vmem:[%s2 + $0x1c] sm:$0xf]
    %v26 = vld [vmem:[%s2 + $0x20] sm:$0xf]
    %v27 = vld [vmem:[%s2 + $0x24] sm:$0xf]
    %v28 = vld [vmem:[%s2 + $0x28] sm:$0xf]
    %v29 = vld [vmem:[%s2 + $0x2c] sm:$0xf]
    %v30 = vld [vmem:[%s2 + $0x30] sm:$0xf]
    %v31 = vld [vmem:[%s2 + $0x34] sm:$0xf]
    %v32 = vld [vmem:[%s2 + $0x38] sm:$0xf]
    %v33 = vld [vmem:[%s2 + $0x3c] sm:$0xf]
    %v34 = vld [vmem:[%s2 + $0x40] sm:$0xf]
    %v35 = vld [vmem:[%s2 + $0x44] sm:$0xf]
    %v36 = vld [vmem:[%s2 + $0x48] sm:$0xf]
    %v37 = vld [vmem:[%s2 + $0x4c] sm:$0xf]
    %v38 = vld [vmem:[%s2 + $0x50] sm:$0xf]
    %v39 = vld [vmem:[%s2 + $0x54] sm:$0xf]
    %v40 = vld [vmem:[%s2 + $0x58] sm:$0xf]
    %v41 = vld [vmem:[%s2 + $0x5c] sm:$0xf]
    %v42 = vld [vmem:[%s2 + $0x60] sm:$0xf]
    %v43 = vld [vmem:[%s2 + $0x64] sm:$0xf]
    %v44 = vld [vmem:[%s2 + $0x68] sm:$0xf]
    %v45 = vld [vmem:[%s2 + $0x6c] sm:$0xf]
    %v46 = vld [vmem:[%s2 + $0x70] sm:$0xf]
    %v47 = vld [vmem:[%s2 + $0x74] sm:$0xf]
    %v48 = vld [vmem:[%s2 + $0x78] sm:$0xf]
    %v49 = vld [vmem:[%s2 + $0x7c] sm:$0xf]
    %v50 = vld [vmem:[%s2 + $0x80] sm:$0xf]
    %v51 = vld [vmem:[%s2 + $0x84] sm:$0xf]
    %v52 = vld [vmem:[%s2 + $0x88] sm:$0xf]
    %v53 = vld [vmem:[%s2 + $0x8c] sm:$0xf]
    %v54 = vld [vmem:[%s2 + $0x90] sm:$0xf]
    %v55 = vld [vmem:[%s2 + $0x94] sm:$0xf]
    %v56 = vld [vmem:[%s2 + $0x98] sm:$0xf]
    %v57 = vld [vmem:[%s2 + $0x9c] sm:$0xf]
    %v58 = vld [vmem:[%s2 + $0xa0] sm:$0xf]
    %v59 = vld [vmem:[%s2 + $0xa4] sm:$0xf]
    %v60 = vld [vmem:[%s2 + $0xa8] sm:$0xf]
    %v61 = vld [vmem:[%s2 + $0xac] sm:$0xf]
    %v62 = vld [vmem:[%s2 + $0xb0] sm:$0xf]
    %v63 = vld [vmem:[%s2 + $0xb4] sm:$0xf]
    %v64 = vld [vmem:[%s2 + $0xb8] sm:$0xf]
    %v65 = vld [vmem:[%s2 + $0xbc] sm:$0xf]
    %v66 = vld [vmem:[%s2 + $0xc0] sm:$0xf]
    %v67 = vld [vmem:[%s2 + $0xc4] sm:$0xf]
    %v68 = vld [vmem:[%s2 + $0xc8] sm:$0xf]
    %v69 = vld [vmem:[%s2 + $0xcc] sm:$0xf]
    %v70 = vld [vmem:[%s2 + $0xd0] sm:$0xf]
    %v71 = vld [vmem:[%s2 + $0xd4] sm:$0xf]
    %v72 = vld [vmem:[%s2 + $0xd8] sm:$0xf]
    %v73 = vld [vmem:[%s2 + $0xdc] sm:$0xf]
    %v74 = vld [vmem:[%s2 + $0xe0] sm:$0xf]
    %v75 = vld [vmem:[%s2 + $0xe4] sm:$0xf]
    %v76 = vld [vmem:[%s2 + $0xe8] sm:$0xf]
    %v77 = vld [vmem:[%s2 + $0xec] sm:$0xf]
    %v78 = vld [vmem:[%s2 + $0xf0] sm:$0xf]
    %v79 = vld [vmem:[%s2 + $0xf4] sm:$0xf]
    %v80 = vld [vmem:[%s2 + $0xf8] sm:$0xf]
    %v81 = vld [vmem:[%s2 + $0xfc] sm:$0xf]
    %v82 = vunpack.c.l.bf16 %v18
    %v83 = vunpack.c.l.bf16 %v19
    %v84 = vunpack.c.l.bf16 %v20
    %v85 = vunpack.c.l.bf16 %v21
    %v86 = vunpack.c.l.bf16 %v22
    %v87 = vunpack.c.l.bf16 %v23
    %v88 = vunpack.c.l.bf16 %v24
    %v89 = vunpack.c.l.bf16 %v25
    %v90 = vunpack.c.l.bf16 %v26
    %v91 = vunpack.c.l.bf16 %v27
    %v92 = vunpack.c.l.bf16 %v28
    %v93 = vunpack.c.l.bf16 %v29
    %v94 = vunpack.c.l.bf16 %v30
    %v95 = vunpack.c.l.bf16 %v31
    %v96 = vunpack.c.l.bf16 %v32
    %v97 = vunpack.c.l.bf16 %v33
    %v98 = vunpack.c.l.bf16 %v34
    %v99 = vunpack.c.l.bf16 %v35
    %v100 = vunpack.c.l.bf16 %v36
    %v101 = vunpack.c.l.bf16 %v37
    %v102 = vunpack.c.l.bf16 %v38
    %v103 = vunpack.c.l.bf16 %v39
    %v104 = vunpack.c.l.bf16 %v40
    %v105 = vunpack.c.l.bf16 %v41
    %v106 = vunpack.c.l.bf16 %v42
    %v107 = vunpack.c.l.bf16 %v43
    %v108 = vunpack.c.l.bf16 %v44
    %v109 = vunpack.c.l.bf16 %v45
    %v110 = vunpack.c.l.bf16 %v46
    %v111 = vunpack.c.l.bf16 %v47
    %v112 = vunpack.c.l.bf16 %v48
    %v113 = vunpack.c.l.bf16 %v49
    %v114 = vunpack.c.l.bf16 %v50
    %v115 = vunpack.c.l.bf16 %v51
    %v116 = vunpack.c.l.bf16 %v52
    %v117 = vunpack.c.l.bf16 %v53
    %v118 = vunpack.c.l.bf16 %v54
    %v119 = vunpack.c.l.bf16 %v55
    %v120 = vunpack.c.l.bf16 %v56
    %v121 = vunpack.c.l.bf16 %v57
    %v122 = vunpack.c.l.bf16 %v58
    %v123 = vunpack.c.l.bf16 %v59
    %v124 = vunpack.c.l.bf16 %v60
    %v125 = vunpack.c.l.bf16 %v61
    %v126 = vunpack.c.l.bf16 %v62
    %v127 = vunpack.c.l.bf16 %v63
    %v128 = vunpack.c.l.bf16 %v64
    %v129 = vunpack.c.l.bf16 %v65
    %v130 = vunpack.c.l.bf16 %v66
    %v131 = vunpack.c.l.bf16 %v67
    %v132 = vunpack.c.l.bf16 %v68
    %v133 = vunpack.c.l.bf16 %v69
    %v134 = vunpack.c.l.bf16 %v70
    %v135 = vunpack.c.l.bf16 %v71
    %v136 = vunpack.c.l.bf16 %v72
    %v137 = vunpack.c.l.bf16 %v73
    %v138 = vunpack.c.l.bf16 %v74
    %v139 = vunpack.c.l.bf16 %v75
    %v140 = vunpack.c.l.bf16 %v76
    %v141 = vunpack.c.l.bf16 %v77
    %v142 = vunpack.c.l.bf16 %v78
    %v143 = vunpack.c.l.bf16 %v79
    %v144 = vunpack.c.l.bf16 %v80
    %v145 = vunpack.c.l.bf16 %v81
    %v146 = vld [vmem:[%s0] sm:$0x1]
    %v148 = vlaneseq
    %v149 = vshrl.u32 %v148, 7
    %v150 = vsub.s32 0, %v149
    %v151 = vrot.slane %v146, %v150
    %v153 = vmul.f32 %v82, %v151
    %v154 = vmul.f32 %v83, %v151
    %v155 = vmul.f32 %v84, %v151
    %v156 = vmul.f32 %v85, %v151
    %v157 = vmul.f32 %v86, %v151
    %v158 = vmul.f32 %v87, %v151
    %v159 = vmul.f32 %v88, %v151
    %v160 = vmul.f32 %v89, %v151
    %v161 = vmul.f32 %v90, %v151
    %v162 = vmul.f32 %v91, %v151
    %v163 = vmul.f32 %v92, %v151
    %v164 = vmul.f32 %v93, %v151
    %v165 = vmul.f32 %v94, %v151
    %v166 = vmul.f32 %v95, %v151
    %v167 = vmul.f32 %v96, %v151
    %v168 = vmul.f32 %v97, %v151
    %v169 = vmul.f32 %v98, %v151
    %v170 = vmul.f32 %v99, %v151
    %v171 = vmul.f32 %v100, %v151
    %v172 = vmul.f32 %v101, %v151
    %v173 = vmul.f32 %v102, %v151
    %v174 = vmul.f32 %v103, %v151
    %v175 = vmul.f32 %v104, %v151
    %v176 = vmul.f32 %v105, %v151
    %v177 = vmul.f32 %v106, %v151
    %v178 = vmul.f32 %v107, %v151
    %v179 = vmul.f32 %v108, %v151
    %v180 = vmul.f32 %v109, %v151
    %v181 = vmul.f32 %v110, %v151
    %v182 = vmul.f32 %v111, %v151
    %v183 = vmul.f32 %v112, %v151
    %v184 = vmul.f32 %v113, %v151
    %v185 = vmul.f32 %v114, %v151
    %v186 = vmul.f32 %v115, %v151
    %v187 = vmul.f32 %v116, %v151
    %v188 = vmul.f32 %v117, %v151
    %v189 = vmul.f32 %v118, %v151
    %v190 = vmul.f32 %v119, %v151
    %v191 = vmul.f32 %v120, %v151
    %v192 = vmul.f32 %v121, %v151
    %v193 = vmul.f32 %v122, %v151
    %v194 = vmul.f32 %v123, %v151
    %v195 = vmul.f32 %v124, %v151
    %v196 = vmul.f32 %v125, %v151
    %v197 = vmul.f32 %v126, %v151
    %v198 = vmul.f32 %v127, %v151
    %v199 = vmul.f32 %v128, %v151
    %v200 = vmul.f32 %v129, %v151
    %v201 = vmul.f32 %v130, %v151
    %v202 = vmul.f32 %v131, %v151
    %v203 = vmul.f32 %v132, %v151
    %v204 = vmul.f32 %v133, %v151
    %v205 = vmul.f32 %v134, %v151
    %v206 = vmul.f32 %v135, %v151
    %v207 = vmul.f32 %v136, %v151
    %v208 = vmul.f32 %v137, %v151
    %v209 = vmul.f32 %v138, %v151
    %v210 = vmul.f32 %v139, %v151
    %v211 = vmul.f32 %v140, %v151
    %v212 = vmul.f32 %v141, %v151
    %v213 = vmul.f32 %v142, %v151
    %v214 = vmul.f32 %v143, %v151
    %v215 = vmul.f32 %v144, %v151
    %v216 = vmul.f32 %v145, %v151
    %v217 = vld [vmem:[%s1] sm:$0x1]
    %v219 = vlaneseq
    %v220 = vshrl.u32 %v219, 7
    %v221 = vsub.s32 0, %v220
    %v222 = vrot.slane %v217, %v221
    %v224 = vadd.f32 %v153, %v222
    %v225 = vadd.f32 %v154, %v222
    %v226 = vadd.f32 %v155, %v222
    %v227 = vadd.f32 %v156, %v222
    %v228 = vadd.f32 %v157, %v222
    %v229 = vadd.f32 %v158, %v222
    %v230 = vadd.f32 %v159, %v222
    %v231 = vadd.f32 %v160, %v222
    %v232 = vadd.f32 %v161, %v222
    %v233 = vadd.f32 %v162, %v222
    %v234 = vadd.f32 %v163, %v222
    %v235 = vadd.f32 %v164, %v222
    %v236 = vadd.f32 %v165, %v222
    %v237 = vadd.f32 %v166, %v222
    %v238 = vadd.f32 %v167, %v222
    %v239 = vadd.f32 %v168, %v222
    %v240 = vadd.f32 %v169, %v222
    %v241 = vadd.f32 %v170, %v222
    %v242 = vadd.f32 %v171, %v222
    %v243 = vadd.f32 %v172, %v222
    %v244 = vadd.f32 %v173, %v222
    %v245 = vadd.f32 %v174, %v222
    %v246 = vadd.f32 %v175, %v222
    %v247 = vadd.f32 %v176, %v222
    %v248 = vadd.f32 %v177, %v222
    %v249 = vadd.f32 %v178, %v222
    %v250 = vadd.f32 %v179, %v222
    %v251 = vadd.f32 %v180, %v222
    %v252 = vadd.f32 %v181, %v222
    %v253 = vadd.f32 %v182, %v222
    %v254 = vadd.f32 %v183, %v222
    %v255 = vadd.f32 %v184, %v222
    %v256 = vadd.f32 %v185, %v222
    %v257 = vadd.f32 %v186, %v222
    %v258 = vadd.f32 %v187, %v222
    %v259 = vadd.f32 %v188, %v222
    %v260 = vadd.f32 %v189, %v222
    %v261 = vadd.f32 %v190, %v222
    %v262 = vadd.f32 %v191, %v222
    %v263 = vadd.f32 %v192, %v222
    %v264 = vadd.f32 %v193, %v222
    %v265 = vadd.f32 %v194, %v222
    %v266 = vadd.f32 %v195, %v222
    %v267 = vadd.f32 %v196, %v222
    %v268 = vadd.f32 %v197, %v222
    %v269 = vadd.f32 %v198, %v222
    %v270 = vadd.f32 %v199, %v222
    %v271 = vadd.f32 %v200, %v222
    %v272 = vadd.f32 %v201, %v222
    %v273 = vadd.f32 %v202, %v222
    %v274 = vadd.f32 %v203, %v222
    %v275 = vadd.f32 %v204, %v222
    %v276 = vadd.f32 %v205, %v222
    %v277 = vadd.f32 %v206, %v222
    %v278 = vadd.f32 %v207, %v222
    %v279 = vadd.f32 %v208, %v222
    %v280 = vadd.f32 %v209, %v222
    %v281 = vadd.f32 %v210, %v222
    %v282 = vadd.f32 %v211, %v222
    %v283 = vadd.f32 %v212, %v222
    %v284 = vadd.f32 %v213, %v222
    %v285 = vadd.f32 %v214, %v222
    %v286 = vadd.f32 %v215, %v222
    %v287 = vadd.f32 %v216, %v222
    %v288 = vld [vmem:[%s3] sm:$0xff]
    %v289 = vld [vmem:[%s3 + $0x8] sm:$0xff]
    %v290 = vld [vmem:[%s3 + $0x10] sm:$0xff]
    %v291 = vld [vmem:[%s3 + $0x18] sm:$0xff]
    %v292 = vld [vmem:[%s3 + $0x20] sm:$0xff]
    %v293 = vld [vmem:[%s3 + $0x28] sm:$0xff]
    %v294 = vld [vmem:[%s3 + $0x30] sm:$0xff]
    %v295 = vld [vmem:[%s3 + $0x38] sm:$0xff]
    %v296 = vld [vmem:[%s3 + $0x40] sm:$0xff]
    %v297 = vld [vmem:[%s3 + $0x48] sm:$0xff]
    %v298 = vld [vmem:[%s3 + $0x50] sm:$0xff]
    %v299 = vld [vmem:[%s3 + $0x58] sm:$0xff]
    %v300 = vld [vmem:[%s3 + $0x60] sm:$0xff]
    %v301 = vld [vmem:[%s3 + $0x68] sm:$0xff]
    %v302 = vld [vmem:[%s3 + $0x70] sm:$0xff]
    %v303 = vld [vmem:[%s3 + $0x78] sm:$0xff]
    %v304 = vld [vmem:[%s3 + $0x80] sm:$0xff]
    %v305 = vld [vmem:[%s3 + $0x88] sm:$0xff]
    %v306 = vld [vmem:[%s3 + $0x90] sm:$0xff]
    %v307 = vld [vmem:[%s3 + $0x98] sm:$0xff]
    %v308 = vld [vmem:[%s3 + $0xa0] sm:$0xff]
    %v309 = vld [vmem:[%s3 + $0xa8] sm:$0xff]
    %v310 = vld [vmem:[%s3 + $0xb0] sm:$0xff]
    %v311 = vld [vmem:[%s3 + $0xb8] sm:$0xff]
    %v312 = vld [vmem:[%s3 + $0xc0] sm:$0xff]
    %v313 = vld [vmem:[%s3 + $0xc8] sm:$0xff]
    %v314 = vld [vmem:[%s3 + $0xd0] sm:$0xff]
    %v315 = vld [vmem:[%s3 + $0xd8] sm:$0xff]
    %v316 = vld [vmem:[%s3 + $0xe0] sm:$0xff]
    %v317 = vld [vmem:[%s3 + $0xe8] sm:$0xff]
    %v318 = vld [vmem:[%s3 + $0xf0] sm:$0xff]
    %v319 = vld [vmem:[%s3 + $0xf8] sm:$0xff]
    %v320 = vld [vmem:[%s3 + $0x100] sm:$0xff]
    %v321 = vld [vmem:[%s3 + $0x108] sm:$0xff]
    %v322 = vld [vmem:[%s3 + $0x110] sm:$0xff]
    %v323 = vld [vmem:[%s3 + $0x118] sm:$0xff]
    %v324 = vld [vmem:[%s3 + $0x120] sm:$0xff]
    %v325 = vld [vmem:[%s3 + $0x128] sm:$0xff]
    %v326 = vld [vmem:[%s3 + $0x130] sm:$0xff]
    %v327 = vld [vmem:[%s3 + $0x138] sm:$0xff]
    %v328 = vld [vmem:[%s3 + $0x140] sm:$0xff]
    %v329 = vld [vmem:[%s3 + $0x148] sm:$0xff]
    %v330 = vld [vmem:[%s3 + $0x150] sm:$0xff]
    %v331 = vld [vmem:[%s3 + $0x158] sm:$0xff]
    %v332 = vld [vmem:[%s3 + $0x160] sm:$0xff]
    %v333 = vld [vmem:[%s3 + $0x168] sm:$0xff]
    %v334 = vld [vmem:[%s3 + $0x170] sm:$0xff]
    %v335 = vld [vmem:[%s3 + $0x178] sm:$0xff]
    %v336 = vld [vmem:[%s3 + $0x180] sm:$0xff]
    %v337 = vld [vmem:[%s3 + $0x188] sm:$0xff]
    %v338 = vld [vmem:[%s3 + $0x190] sm:$0xff]
    %v339 = vld [vmem:[%s3 + $0x198] sm:$0xff]
    %v340 = vld [vmem:[%s3 + $0x1a0] sm:$0xff]
    %v341 = vld [vmem:[%s3 + $0x1a8] sm:$0xff]
    %v342 = vld [vmem:[%s3 + $0x1b0] sm:$0xff]
    %v343 = vld [vmem:[%s3 + $0x1b8] sm:$0xff]
    %v344 = vld [vmem:[%s3 + $0x1c0] sm:$0xff]
    %v345 = vld [vmem:[%s3 + $0x1c8] sm:$0xff]
    %v346 = vld [vmem:[%s3 + $0x1d0] sm:$0xff]
    %v347 = vld [vmem:[%s3 + $0x1d8] sm:$0xff]
    %v348 = vld [vmem:[%s3 + $0x1e0] sm:$0xff]
    %v349 = vld [vmem:[%s3 + $0x1e8] sm:$0xff]
    %v350 = vld [vmem:[%s3 + $0x1f0] sm:$0xff]
    %v351 = vld [vmem:[%s3 + $0x1f8] sm:$0xff]
    %v352 = vadd.f32 %v224, %v288
    %v353 = vadd.f32 %v225, %v289
    %v354 = vadd.f32 %v226, %v290
    %v355 = vadd.f32 %v227, %v291
    %v356 = vadd.f32 %v228, %v292
    %v357 = vadd.f32 %v229, %v293
    %v358 = vadd.f32 %v230, %v294
    %v359 = vadd.f32 %v231, %v295
    %v360 = vadd.f32 %v232, %v296
    %v361 = vadd.f32 %v233, %v297
    %v362 = vadd.f32 %v234, %v298
    %v363 = vadd.f32 %v235, %v299
    %v364 = vadd.f32 %v236, %v300
    %v365 = vadd.f32 %v237, %v301
    %v366 = vadd.f32 %v238, %v302
    %v367 = vadd.f32 %v239, %v303
    %v368 = vadd.f32 %v240, %v304
    %v369 = vadd.f32 %v241, %v305
    %v370 = vadd.f32 %v242, %v306
    %v371 = vadd.f32 %v243, %v307
    %v372 = vadd.f32 %v244, %v308
    %v373 = vadd.f32 %v245, %v309
    %v374 = vadd.f32 %v246, %v310
    %v375 = vadd.f32 %v247, %v311
    %v376 = vadd.f32 %v248, %v312
    %v377 = vadd.f32 %v249, %v313
    %v378 = vadd.f32 %v250, %v314
    %v379 = vadd.f32 %v251, %v315
    %v380 = vadd.f32 %v252, %v316
    %v381 = vadd.f32 %v253, %v317
    %v382 = vadd.f32 %v254, %v318
    %v383 = vadd.f32 %v255, %v319
    %v384 = vadd.f32 %v256, %v320
    %v385 = vadd.f32 %v257, %v321
    %v386 = vadd.f32 %v258, %v322
    %v387 = vadd.f32 %v259, %v323
    %v388 = vadd.f32 %v260, %v324
    %v389 = vadd.f32 %v261, %v325
    %v390 = vadd.f32 %v262, %v326
    %v391 = vadd.f32 %v263, %v327
    %v392 = vadd.f32 %v264, %v328
    %v393 = vadd.f32 %v265, %v329
    %v394 = vadd.f32 %v266, %v330
    %v395 = vadd.f32 %v267, %v331
    %v396 = vadd.f32 %v268, %v332
    %v397 = vadd.f32 %v269, %v333
    %v398 = vadd.f32 %v270, %v334
    %v399 = vadd.f32 %v271, %v335
    %v400 = vadd.f32 %v272, %v336
    %v401 = vadd.f32 %v273, %v337
    %v402 = vadd.f32 %v274, %v338
    %v403 = vadd.f32 %v275, %v339
    %v404 = vadd.f32 %v276, %v340
    %v405 = vadd.f32 %v277, %v341
    %v406 = vadd.f32 %v278, %v342
    %v407 = vadd.f32 %v279, %v343
    %v408 = vadd.f32 %v280, %v344
    %v409 = vadd.f32 %v281, %v345
    %v410 = vadd.f32 %v282, %v346
    %v411 = vadd.f32 %v283, %v347
    %v412 = vadd.f32 %v284, %v348
    %v413 = vadd.f32 %v285, %v349
    %v414 = vadd.f32 %v286, %v350
    %v415 = vadd.f32 %v287, %v351
    %v416 = vmax.f32 %v352, 0.0
    %v417 = vmax.f32 %v353, 0.0
    %v418 = vmax.f32 %v354, 0.0
    %v419 = vmax.f32 %v355, 0.0
    %v420 = vmax.f32 %v356, 0.0
    %v421 = vmax.f32 %v357, 0.0
    %v422 = vmax.f32 %v358, 0.0
    %v423 = vmax.f32 %v359, 0.0
    %v424 = vmax.f32 %v360, 0.0
    %v425 = vmax.f32 %v361, 0.0
    %v426 = vmax.f32 %v362, 0.0
    %v427 = vmax.f32 %v363, 0.0
    %v428 = vmax.f32 %v364, 0.0
    %v429 = vmax.f32 %v365, 0.0
    %v430 = vmax.f32 %v366, 0.0
    %v431 = vmax.f32 %v367, 0.0
    %v432 = vmax.f32 %v368, 0.0
    %v433 = vmax.f32 %v369, 0.0
    %v434 = vmax.f32 %v370, 0.0
    %v435 = vmax.f32 %v371, 0.0
    %v436 = vmax.f32 %v372, 0.0
    %v437 = vmax.f32 %v373, 0.0
    %v438 = vmax.f32 %v374, 0.0
    %v439 = vmax.f32 %v375, 0.0
    %v440 = vmax.f32 %v376, 0.0
    %v441 = vmax.f32 %v377, 0.0
    %v442 = vmax.f32 %v378, 0.0
    %v443 = vmax.f32 %v379, 0.0
    %v444 = vmax.f32 %v380, 0.0
    %v445 = vmax.f32 %v381, 0.0
    %v446 = vmax.f32 %v382, 0.0
    %v447 = vmax.f32 %v383, 0.0
    %v448 = vmax.f32 %v384, 0.0
    %v449 = vmax.f32 %v385, 0.0
    %v450 = vmax.f32 %v386, 0.0
    %v451 = vmax.f32 %v387, 0.0
    %v452 = vmax.f32 %v388, 0.0
    %v453 = vmax.f32 %v389, 0.0
    %v454 = vmax.f32 %v390, 0.0
    %v455 = vmax.f32 %v391, 0.0
    %v456 = vmax.f32 %v392, 0.0
    %v457 = vmax.f32 %v393, 0.0
    %v458 = vmax.f32 %v394, 0.0
    %v459 = vmax.f32 %v395, 0.0
    %v460 = vmax.f32 %v396, 0.0
    %v461 = vmax.f32 %v397, 0.0
    %v462 = vmax.f32 %v398, 0.0
    %v463 = vmax.f32 %v399, 0.0
    %v464 = vmax.f32 %v400, 0.0
    %v465 = vmax.f32 %v401, 0.0
    %v466 = vmax.f32 %v402, 0.0
    %v467 = vmax.f32 %v403, 0.0
    %v468 = vmax.f32 %v404, 0.0
    %v469 = vmax.f32 %v405, 0.0
    %v470 = vmax.f32 %v406, 0.0
    %v471 = vmax.f32 %v407, 0.0
    %v472 = vmax.f32 %v408, 0.0
    %v473 = vmax.f32 %v409, 0.0
    %v474 = vmax.f32 %v410, 0.0
    %v475 = vmax.f32 %v411, 0.0
    %v476 = vmax.f32 %v412, 0.0
    %v477 = vmax.f32 %v413, 0.0
    %v478 = vmax.f32 %v414, 0.0
    %v479 = vmax.f32 %v415, 0.0
    %vm480 = vcmask 130048
    %481 = vst.msk [vmem:[#allocation2] sm:$0xff] %vm480, %v416
    %482 = vst.msk [vmem:[#allocation2 + $0x8] sm:$0xff] %vm480, %v417
    %483 = vst.msk [vmem:[#allocation2 + $0x10] sm:$0xff] %vm480, %v418
    %484 = vst.msk [vmem:[#allocation2 + $0x18] sm:$0xff] %vm480, %v419
    %485 = vst.msk [vmem:[#allocation2 + $0x20] sm:$0xff] %vm480, %v420
    %486 = vst.msk [vmem:[#allocation2 + $0x28] sm:$0xff] %vm480, %v421
    %487 = vst.msk [vmem:[#allocation2 + $0x30] sm:$0xff] %vm480, %v422
    %488 = vst.msk [vmem:[#allocation2 + $0x38] sm:$0xff] %vm480, %v423
    %489 = vst.msk [vmem:[#allocation2 + $0x40] sm:$0xff] %vm480, %v424
    %490 = vst.msk [vmem:[#allocation2 + $0x48] sm:$0xff] %vm480, %v425
    %491 = vst.msk [vmem:[#allocation2 + $0x50] sm:$0xff] %vm480, %v426
    %492 = vst.msk [vmem:[#allocation2 + $0x58] sm:$0xff] %vm480, %v427
    %493 = vst.msk [vmem:[#allocation2 + $0x60] sm:$0xff] %vm480, %v428
    %494 = vst.msk [vmem:[#allocation2 + $0x68] sm:$0xff] %vm480, %v429
    %495 = vst.msk [vmem:[#allocation2 + $0x70] sm:$0xff] %vm480, %v430
    %496 = vst.msk [vmem:[#allocation2 + $0x78] sm:$0xff] %vm480, %v431
    %497 = vst.msk [vmem:[#allocation2 + $0x80] sm:$0xff] %vm480, %v432
    %498 = vst.msk [vmem:[#allocation2 + $0x88] sm:$0xff] %vm480, %v433
    %499 = vst.msk [vmem:[#allocation2 + $0x90] sm:$0xff] %vm480, %v434
    %500 = vst.msk [vmem:[#allocation2 + $0x98] sm:$0xff] %vm480, %v435
    %501 = vst.msk [vmem:[#allocation2 + $0xa0] sm:$0xff] %vm480, %v436
    %502 = vst.msk [vmem:[#allocation2 + $0xa8] sm:$0xff] %vm480, %v437
    %503 = vst.msk [vmem:[#allocation2 + $0xb0] sm:$0xff] %vm480, %v438
    %504 = vst.msk [vmem:[#allocation2 + $0xb8] sm:$0xff] %vm480, %v439
    %505 = vst.msk [vmem:[#allocation2 + $0xc0] sm:$0xff] %vm480, %v440
    %506 = vst.msk [vmem:[#allocation2 + $0xc8] sm:$0xff] %vm480, %v441
    %507 = vst.msk [vmem:[#allocation2 + $0xd0] sm:$0xff] %vm480, %v442
    %508 = vst.msk [vmem:[#allocation2 + $0xd8] sm:$0xff] %vm480, %v443
    %509 = vst.msk [vmem:[#allocation2 + $0xe0] sm:$0xff] %vm480, %v444
    %510 = vst.msk [vmem:[#allocation2 + $0xe8] sm:$0xff] %vm480, %v445
    %511 = vst.msk [vmem:[#allocation2 + $0xf0] sm:$0xff] %vm480, %v446
    %512 = vst.msk [vmem:[#allocation2 + $0xf8] sm:$0xff] %vm480, %v447
    %513 = vst.msk [vmem:[#allocation2 + $0x100] sm:$0xff] %vm480, %v448
    %514 = vst.msk [vmem:[#allocation2 + $0x108] sm:$0xff] %vm480, %v449
    %515 = vst.msk [vmem:[#allocation2 + $0x110] sm:$0xff] %vm480, %v450
    %516 = vst.msk [vmem:[#allocation2 + $0x118] sm:$0xff] %vm480, %v451
    %517 = vst.msk [vmem:[#allocation2 + $0x120] sm:$0xff] %vm480, %v452
    %518 = vst.msk [vmem:[#allocation2 + $0x128] sm:$0xff] %vm480, %v453
    %519 = vst.msk [vmem:[#allocation2 + $0x130] sm:$0xff] %vm480, %v454
    %520 = vst.msk [vmem:[#allocation2 + $0x138] sm:$0xff] %vm480, %v455
    %521 = vst.msk [vmem:[#allocation2 + $0x140] sm:$0xff] %vm480, %v456
    %522 = vst.msk [vmem:[#allocation2 + $0x148] sm:$0xff] %vm480, %v457
    %523 = vst.msk [vmem:[#allocation2 + $0x150] sm:$0xff] %vm480, %v458
    %524 = vst.msk [vmem:[#allocation2 + $0x158] sm:$0xff] %vm480, %v459
    %525 = vst.msk [vmem:[#allocation2 + $0x160] sm:$0xff] %vm480, %v460
    %526 = vst.msk [vmem:[#allocation2 + $0x168] sm:$0xff] %vm480, %v461
    %527 = vst.msk [vmem:[#allocation2 + $0x170] sm:$0xff] %vm480, %v462
    %528 = vst.msk [vmem:[#allocation2 + $0x178] sm:$0xff] %vm480, %v463
    %529 = vst.msk [vmem:[#allocation2 + $0x180] sm:$0xff] %vm480, %v464
    %530 = vst.msk [vmem:[#allocation2 + $0x188] sm:$0xff] %vm480, %v465
    %531 = vst.msk [vmem:[#allocation2 + $0x190] sm:$0xff] %vm480, %v466
    %532 = vst.msk [vmem:[#allocation2 + $0x198] sm:$0xff] %vm480, %v467
    %533 = vst.msk [vmem:[#allocation2 + $0x1a0] sm:$0xff] %vm480, %v468
    %534 = vst.msk [vmem:[#allocation2 + $0x1a8] sm:$0xff] %vm480, %v469
    %535 = vst.msk [vmem:[#allocation2 + $0x1b0] sm:$0xff] %vm480, %v470
    %536 = vst.msk [vmem:[#allocation2 + $0x1b8] sm:$0xff] %vm480, %v471
    %537 = vst.msk [vmem:[#allocation2 + $0x1c0] sm:$0xff] %vm480, %v472
    %538 = vst.msk [vmem:[#allocation2 + $0x1c8] sm:$0xff] %vm480, %v473
    %539 = vst.msk [vmem:[#allocation2 + $0x1d0] sm:$0xff] %vm480, %v474
    %540 = vst.msk [vmem:[#allocation2 + $0x1d8] sm:$0xff] %vm480, %v475
    %541 = vst.msk [vmem:[#allocation2 + $0x1e0] sm:$0xff] %vm480, %v476
    %542 = vst.msk [vmem:[#allocation2 + $0x1e8] sm:$0xff] %vm480, %v477
    %543 = vst.msk [vmem:[#allocation2 + $0x1f0] sm:$0xff] %vm480, %v478
    %544 = vst.msk [vmem:[#allocation2 + $0x1f8] sm:$0xff] %vm480, %v479
    // Predicated region
    $region18: #{bottleneck_pallas.7} parent=1 // pred_check
      _
    $region19: #{bottleneck_pallas.7} parent=1 // pred_check_branch
      %546 = sbr.rel (0) target = $region21
    $region20: #{bottleneck_pallas.7} parent=1 // pred_region
      %s548 = ssub.s32 8192, 8192
      %549 = vsyncadd [#allocation3], %s548
      %s550 = sshll.u32 [#allocation2], 4
      %s551 = int_to_ptr.vmem [resolvable:$true] %s550
      %556 = dma.vmem_to_hbm [thread:$0]  %s551, 8192, %s4, [#allocation3], 128, 128, 8
    $region21: #{bottleneck_pallas.7} parent=1 // pred_fallthru
      _
    // Predicated region
    $region22: #{bottleneck_pallas.7} parent=1 // pred_check
      _
    $region23: #{bottleneck_pallas.7} parent=1 // pred_check_branch
      %558 = sbr.rel (0) target = $region25
    $region24: #{bottleneck_pallas.7} parent=1 // pred_region
      %559 = dma.done [#allocation3], 8192
    $region25: #{bottleneck_pallas.7} parent=1 // pred_fallthru
      _
    %560 = vsyncpa [#allocation3], 1

// kernel: bottleneck_pallas.4
$region0: #{bottleneck_pallas.4}
  #allocation0 [shape = 'u32[]', space=smem, size = 0x4, offset = 0x4, fixed_abs, tag = 'smem constant byte address 0x4 - core index']
  #allocation1 [shape = 'u32[144,128]{1,0:T(1,128)}', space=vmem, size = 0x12000, scoped, tag = 'internal scratch']
  %s0 = inlined_call_operand.hbm [shape: f32[512,16], index: 0, kind: input, shape index: {}]
  %s1 = inlined_call_operand.vmem [shape: bf16[16,4], index: 1, kind: input, shape index: {}]
  %s2 = inlined_call_operand.vmem [shape: bf16[512,4], index: 2, kind: output, shape index: {0}]
  %s3 = inlined_call_operand.vmem [shape: f32[1,2,4], index: 3, kind: output, shape index: {1}]
  %4 = xla_tuple %s2, %s3
  %s5 = sld [smem:[#allocation0]]
  $region30: #{bottleneck_pallas.4} parent=0
    _
  %s7 = ssub.s32 1, %s5
  %s8 = scalar_select 0, %s7, %s5
  $region1: #{bottleneck_pallas.4} parent=0
    #allocation2 [shape = 'u8[262144]{0}', space=vmem, size = 0x40000, scoped, tag = 'input window, operand 0, single buffered']
    #allocation3 [shape = 's32[1]{0}', space=sflag, size = 0x4, scoped, tag = 'scoped memory for bottleneck_pallas.4']
    %9 = vsyncpa [#allocation3], 0
    // Predicated region
    $region2: #{bottleneck_pallas.4} parent=1 // pred_check
      _
    $region3: #{bottleneck_pallas.4} parent=1 // pred_check_branch
      %11 = sbr.rel (0) target = $region5
    $region4: #{bottleneck_pallas.4} parent=1 // pred_region
      %s13 = ssub.s32 8192, 8192
      %14 = vsyncadd [#allocation3], %s13
      %s15 = sshll.u32 [#allocation2], 4
      %s16 = int_to_ptr.vmem [resolvable:$true] %s15
      %21 = dma.hbm_to_vmem [thread:$0]  %s0, 8192, %s16, [#allocation3], 128, 128, 8
    $region5: #{bottleneck_pallas.4} parent=1 // pred_fallthru
      _
    // Predicated region
    $region6: #{bottleneck_pallas.4} parent=1 // pred_check
      _
    $region7: #{bottleneck_pallas.4} parent=1 // pred_check_branch
      %23 = sbr.rel (0) target = $region9
    $region8: #{bottleneck_pallas.4} parent=1 // pred_region
      _
    $region9: #{bottleneck_pallas.4} parent=1 // pred_fallthru
      _
    // Predicated region
    $region10: #{bottleneck_pallas.4} parent=1 // pred_check
      _
    $region11: #{bottleneck_pallas.4} parent=1 // pred_check_branch
      %25 = sbr.rel (0) target = $region13
    $region12: #{bottleneck_pallas.4} parent=1 // pred_region
      %26 = dma.done [#allocation3], 8192
    $region13: #{bottleneck_pallas.4} parent=1 // pred_fallthru
      _
    %v28 = vld [vmem:[#allocation2] sm:$0xff]
    %v29 = vld [vmem:[#allocation2 + $0x8] sm:$0xff]
    %v30 = vld [vmem:[#allocation2 + $0x10] sm:$0xff]
    %v31 = vld [vmem:[#allocation2 + $0x18] sm:$0xff]
    %v32 = vld [vmem:[#allocation2 + $0x20] sm:$0xff]
    %v33 = vld [vmem:[#allocation2 + $0x28] sm:$0xff]
    %v34 = vld [vmem:[#allocation2 + $0x30] sm:$0xff]
    %v35 = vld [vmem:[#allocation2 + $0x38] sm:$0xff]
    %v36 = vld [vmem:[#allocation2 + $0x40] sm:$0xff]
    %v37 = vld [vmem:[#allocation2 + $0x48] sm:$0xff]
    %v38 = vld [vmem:[#allocation2 + $0x50] sm:$0xff]
    %v39 = vld [vmem:[#allocation2 + $0x58] sm:$0xff]
    %v40 = vld [vmem:[#allocation2 + $0x60] sm:$0xff]
    %v41 = vld [vmem:[#allocation2 + $0x68] sm:$0xff]
    %v42 = vld [vmem:[#allocation2 + $0x70] sm:$0xff]
    %v43 = vld [vmem:[#allocation2 + $0x78] sm:$0xff]
    %v44 = vld [vmem:[#allocation2 + $0x80] sm:$0xff]
    %v45 = vld [vmem:[#allocation2 + $0x88] sm:$0xff]
    %v46 = vld [vmem:[#allocation2 + $0x90] sm:$0xff]
    %v47 = vld [vmem:[#allocation2 + $0x98] sm:$0xff]
    %v48 = vld [vmem:[#allocation2 + $0xa0] sm:$0xff]
    %v49 = vld [vmem:[#allocation2 + $0xa8] sm:$0xff]
    %v50 = vld [vmem:[#allocation2 + $0xb0] sm:$0xff]
    %v51 = vld [vmem:[#allocation2 + $0xb8] sm:$0xff]
    %v52 = vld [vmem:[#allocation2 + $0xc0] sm:$0xff]
    %v53 = vld [vmem:[#allocation2 + $0xc8] sm:$0xff]
    %v54 = vld [vmem:[#allocation2 + $0xd0] sm:$0xff]
    %v55 = vld [vmem:[#allocation2 + $0xd8] sm:$0xff]
    %v56 = vld [vmem:[#allocation2 + $0xe0] sm:$0xff]
    %v57 = vld [vmem:[#allocation2 + $0xe8] sm:$0xff]
    %v58 = vld [vmem:[#allocation2 + $0xf0] sm:$0xff]
    %v59 = vld [vmem:[#allocation2 + $0xf8] sm:$0xff]
    %v60 = vld [vmem:[#allocation2 + $0x100] sm:$0xff]
    %v61 = vld [vmem:[#allocation2 + $0x108] sm:$0xff]
    %v62 = vld [vmem:[#allocation2 + $0x110] sm:$0xff]
    %v63 = vld [vmem:[#allocation2 + $0x118] sm:$0xff]
    %v64 = vld [vmem:[#allocation2 + $0x120] sm:$0xff]
    %v65 = vld [vmem:[#allocation2 + $0x128] sm:$0xff]
    %v66 = vld [vmem:[#allocation2 + $0x130] sm:$0xff]
    %v67 = vld [vmem:[#allocation2 + $0x138] sm:$0xff]
    %v68 = vld [vmem:[#allocation2 + $0x140] sm:$0xff]
    %v69 = vld [vmem:[#allocation2 + $0x148] sm:$0xff]
    %v70 = vld [vmem:[#allocation2 + $0x150] sm:$0xff]
    %v71 = vld [vmem:[#allocation2 + $0x158] sm:$0xff]
    %v72 = vld [vmem:[#allocation2 + $0x160] sm:$0xff]
    %v73 = vld [vmem:[#allocation2 + $0x168] sm:$0xff]
    %v74 = vld [vmem:[#allocation2 + $0x170] sm:$0xff]
    %v75 = vld [vmem:[#allocation2 + $0x178] sm:$0xff]
    %v76 = vld [vmem:[#allocation2 + $0x180] sm:$0xff]
    %v77 = vld [vmem:[#allocation2 + $0x188] sm:$0xff]
    %v78 = vld [vmem:[#allocation2 + $0x190] sm:$0xff]
    %v79 = vld [vmem:[#allocation2 + $0x198] sm:$0xff]
    %v80 = vld [vmem:[#allocation2 + $0x1a0] sm:$0xff]
    %v81 = vld [vmem:[#allocation2 + $0x1a8] sm:$0xff]
    %v82 = vld [vmem:[#allocation2 + $0x1b0] sm:$0xff]
    %v83 = vld [vmem:[#allocation2 + $0x1b8] sm:$0xff]
    %v84 = vld [vmem:[#allocation2 + $0x1c0] sm:$0xff]
    %v85 = vld [vmem:[#allocation2 + $0x1c8] sm:$0xff]
    %v86 = vld [vmem:[#allocation2 + $0x1d0] sm:$0xff]
    %v87 = vld [vmem:[#allocation2 + $0x1d8] sm:$0xff]
    %v88 = vld [vmem:[#allocation2 + $0x1e0] sm:$0xff]
    %v89 = vld [vmem:[#allocation2 + $0x1e8] sm:$0xff]
    %v90 = vld [vmem:[#allocation2 + $0x1f0] sm:$0xff]
    %v91 = vld [vmem:[#allocation2 + $0x1f8] sm:$0xff]
    %v92 = vpack.c.bf16 %v29, %v28
    %v93 = vpack.c.bf16 %v31, %v30
    %v94 = vpack.c.bf16 %v33, %v32
    %v95 = vpack.c.bf16 %v35, %v34
    %v96 = vpack.c.bf16 %v37, %v36
    %v97 = vpack.c.bf16 %v39, %v38
    %v98 = vpack.c.bf16 %v41, %v40
    %v99 = vpack.c.bf16 %v43, %v42
    %v100 = vpack.c.bf16 %v45, %v44
    %v101 = vpack.c.bf16 %v47, %v46
    %v102 = vpack.c.bf16 %v49, %v48
    %v103 = vpack.c.bf16 %v51, %v50
    %v104 = vpack.c.bf16 %v53, %v52
    %v105 = vpack.c.bf16 %v55, %v54
    %v106 = vpack.c.bf16 %v57, %v56
    %v107 = vpack.c.bf16 %v59, %v58
    %v108 = vpack.c.bf16 %v61, %v60
    %v109 = vpack.c.bf16 %v63, %v62
    %v110 = vpack.c.bf16 %v65, %v64
    %v111 = vpack.c.bf16 %v67, %v66
    %v112 = vpack.c.bf16 %v69, %v68
    %v113 = vpack.c.bf16 %v71, %v70
    %v114 = vpack.c.bf16 %v73, %v72
    %v115 = vpack.c.bf16 %v75, %v74
    %v116 = vpack.c.bf16 %v77, %v76
    %v117 = vpack.c.bf16 %v79, %v78
    %v118 = vpack.c.bf16 %v81, %v80
    %v119 = vpack.c.bf16 %v83, %v82
    %v120 = vpack.c.bf16 %v85, %v84
    %v121 = vpack.c.bf16 %v87, %v86
    %v122 = vpack.c.bf16 %v89, %v88
    %v123 = vpack.c.bf16 %v91, %v90
    %v124 = vld [vmem:[%s1] sm:$0xf]
    %v125 = vld [vmem:[%s1 + $0x4] sm:$0xf]
    %v128 = vunpack.c.l.b16 %v124
    %v129 = vunpack.c.l.b16 %v125
    %v130 = vpack.c.b16 %v129, %v128
    %vm132 = vcmask 130048
    %v134 = vsel %vm132, %v92, 0
    %v137 = vsel %vm132, %v93, 0
    %v140 = vsel %vm132, %v94, 0
    %v143 = vsel %vm132, %v95, 0
    %v146 = vsel %vm132, %v96, 0
    %v149 = vsel %vm132, %v97, 0
    %v152 = vsel %vm132, %v98, 0
    %v155 = vsel %vm132, %v99, 0
    %v158 = vsel %vm132, %v100, 0
    %v161 = vsel %vm132, %v101, 0
    %v164 = vsel %vm132, %v102, 0
    %v167 = vsel %vm132, %v103, 0
    %v170 = vsel %vm132, %v104, 0
    %v173 = vsel %vm132, %v105, 0
    %v176 = vsel %vm132, %v106, 0
    %v179 = vsel %vm132, %v107, 0
    %v182 = vsel %vm132, %v108, 0
    %v185 = vsel %vm132, %v109, 0
    %v188 = vsel %vm132, %v110, 0
    %v191 = vsel %vm132, %v111, 0
    %v194 = vsel %vm132, %v112, 0
    %v197 = vsel %vm132, %v113, 0
    %v200 = vsel %vm132, %v114, 0
    %v203 = vsel %vm132, %v115, 0
    %v206 = vsel %vm132, %v116, 0
    %v209 = vsel %vm132, %v117, 0
    %v212 = vsel %vm132, %v118, 0
    %v215 = vsel %vm132, %v119, 0
    %v218 = vsel %vm132, %v120, 0
    %v221 = vsel %vm132, %v121, 0
    %v224 = vsel %vm132, %v122, 0
    %v227 = vsel %vm132, %v123, 0
    %229 = vmatprep.subr.bf16.mxu0 0
    %230 = vmatpush1.bf16.msra.mxu0 %v130
    %231 = vmatprep.subr.bf16.mxu0 0
    %232 = vmatpush1.bf16.msra.mxu0 0
    %233 = vmatprep.subr.bf16.mxu0 0
    %234 = vmatpush1.bf16.msra.mxu0 0
    %235 = vmatprep.subr.bf16.mxu0 0
    %236 = vmatpush1.bf16.msra.mxu0 0
    %237 = vmatprep.subr.bf16.mxu0 0
    %238 = vmatpush1.bf16.msra.mxu0 0
    %239 = vmatprep.subr.bf16.mxu0 0
    %240 = vmatpush1.bf16.msra.mxu0 0
    %241 = vmatprep.subr.bf16.mxu0 0
    %242 = vmatpush1.bf16.msra.mxu0 0
    %243 = vmatprep.subr.bf16.mxu0 0
    %244 = vmatpush1.bf16.msra.mxu0 0
    %245 = vmatprep.subr.bf16.mxu0 0
    %246 = vmatpush1.bf16.msra.mxu0 0
    %247 = vmatprep.subr.bf16.mxu0 0
    %248 = vmatpush1.bf16.msra.mxu0 0
    %249 = vmatprep.subr.bf16.mxu0 0
    %250 = vmatpush1.bf16.msra.mxu0 0
    %251 = vmatprep.subr.bf16.mxu0 0
    %252 = vmatpush1.bf16.msra.mxu0 0
    %253 = vmatprep.subr.bf16.mxu0 0
    %254 = vmatpush1.bf16.msra.mxu0 0
    %255 = vmatprep.subr.bf16.mxu0 0
    %256 = vmatpush1.bf16.msra.mxu0 0
    %257 = vmatprep.subr.bf16.mxu0 0
    %258 = vmatpush1.bf16.msra.mxu0 0
    %259 = vmatprep.subr.bf16.mxu0 0
    %260 = vmatpush1.bf16.msra.mxu0 0
    %261 = vmatprep.mubr.bf16.mxu0 0
    %262 = vmatmul.mubr.bf16.gmra.mrb[0].mxu0 %v134
    %v263 = vpop.f32.mrb[0].mxu0
    %v264 = vadd.f32 0.0, %v263
    %v265 = vpop.f32.mrb[0].mxu0
    %v266 = vpop.f32.mrb[0].mxu0
    %v267 = vadd.f32 0.0, %v266
    %v268 = vpop.f32.mrb[0].mxu0
    %269 = vmatprep.mubr.bf16.mxu0 0
    %270 = vmatmul.mubr.bf16.gmra.mrb[0].mxu0 %v137
    %v271 = vpop.f32.mrb[0].mxu0
    %v272 = vadd.f32 0.0, %v271
    %v273 = vpop.f32.mrb[0].mxu0
    %v274 = vpop.f32.mrb[0].mxu0
    %v275 = vadd.f32 0.0, %v274
    %v276 = vpop.f32.mrb[0].mxu0
    %277 = vmatprep.mubr.bf16.mxu0 0
    %278 = vmatmul.mubr.bf16.gmra.mrb[0].mxu0 %v140
    %v279 = vpop.f32.mrb[0].mxu0
    %v280 = vadd.f32 0.0, %v279
    %v281 = vpop.f32.mrb[0].mxu0
    %v282 = vpop.f32.mrb[0].mxu0
    %v283 = vadd.f32 0.0, %v282
    %v284 = vpop.f32.mrb[0].mxu0
    %285 = vmatprep.mubr.bf16.mxu0 0
    %286 = vmatmul.mubr.bf16.gmra.mrb[0].mxu0 %v143
    %v287 = vpop.f32.mrb[0].mxu0
    %v288 = vadd.f32 0.0, %v287
    %v289 = vpop.f32.mrb[0].mxu0
    %v290 = vpop.f32.mrb[0].mxu0
    %v291 = vadd.f32 0.0, %v290
    %v292 = vpop.f32.mrb[0].mxu0
    %293 = vmatprep.mubr.bf16.mxu0 0
    %294 = vmatmul.mubr.bf16.gmra.mrb[0].mxu0 %v146
    %v295 = vpop.f32.mrb[0].mxu0
    %v296 = vadd.f32 0.0, %v295
    %v297 = vpop.f32.mrb[0].mxu0
    %v298 = vpop.f32.mrb[0].mxu0
    %v299 = vadd.f32 0.0, %v298
    %v300 = vpop.f32.mrb[0].mxu0
    %301 = vmatprep.mubr.bf16.mxu0 0
    %302 = vmatmul.mubr.bf16.gmra.mrb[0].mxu0 %v149
    %v303 = vpop.f32.mrb[0].mxu0
    %v304 = vadd.f32 0.0, %v303
    %v305 = vpop.f32.mrb[0].mxu0
    %v306 = vpop.f32.mrb[0].mxu0
    %v307 = vadd.f32 0.0, %v306
    %v308 = vpop.f32.mrb[0].mxu0
    %309 = vmatprep.mubr.bf16.mxu0 0
    %310 = vmatmul.mubr.bf16.gmra.mrb[0].mxu0 %v152
    %v311 = vpop.f32.mrb[0].mxu0
    %v312 = vadd.f32 0.0, %v311
    %v313 = vpop.f32.mrb[0].mxu0
    %v314 = vpop.f32.mrb[0].mxu0
    %v315 = vadd.f32 0.0, %v314
    %v316 = vpop.f32.mrb[0].mxu0
    %317 = vmatprep.mubr.bf16.mxu0 0
    %318 = vmatmul.mubr.bf16.gmra.mrb[0].mxu0 %v155
    %v319 = vpop.f32.mrb[0].mxu0
    %v320 = vadd.f32 0.0, %v319
    %v321 = vpop.f32.mrb[0].mxu0
    %v322 = vpop.f32.mrb[0].mxu0
    %v323 = vadd.f32 0.0, %v322
    %v324 = vpop.f32.mrb[0].mxu0
    %325 = vmatprep.mubr.bf16.mxu0 0
    %326 = vmatmul.mubr.bf16.gmra.mrb[0].mxu0 %v158
    %v327 = vpop.f32.mrb[0].mxu0
    %v328 = vadd.f32 0.0, %v327
    %v329 = vpop.f32.mrb[0].mxu0
    %v330 = vpop.f32.mrb[0].mxu0
    %v331 = vadd.f32 0.0, %v330
    %v332 = vpop.f32.mrb[0].mxu0
    %333 = vmatprep.mubr.bf16.mxu0 0
    %334 = vmatmul.mubr.bf16.gmra.mrb[0].mxu0 %v161
    %v335 = vpop.f32.mrb[0].mxu0
    %v336 = vadd.f32 0.0, %v335
    %v337 = vpop.f32.mrb[0].mxu0
    %v338 = vpop.f32.mrb[0].mxu0
    %v339 = vadd.f32 0.0, %v338
    %v340 = vpop.f32.mrb[0].mxu0
    %341 = vmatprep.mubr.bf16.mxu0 0
    %342 = vmatmul.mubr.bf16.gmra.mrb[0].mxu0 %v164
    %v343 = vpop.f32.mrb[0].mxu0
    %v344 = vadd.f32 0.0, %v343
    %v345 = vpop.f32.mrb[0].mxu0
    %v346 = vpop.f32.mrb[0].mxu0
    %v347 = vadd.f32 0.0, %v346
    %v348 = vpop.f32.mrb[0].mxu0
    %349 = vmatprep.mubr.bf16.mxu0 0
    %350 = vmatmul.mubr.bf16.gmra.mrb[0].mxu0 %v167
    %v351 = vpop.f32.mrb[0].mxu0
    %v352 = vadd.f32 0.0, %v351
    %v353 = vpop.f32.mrb[0].mxu0
    %v354 = vpop.f32.mrb[0].mxu0
    %v355 = vadd.f32 0.0, %v354
    %v356 = vpop.f32.mrb[0].mxu0
    %357 = vmatprep.mubr.bf16.mxu0 0
    %358 = vmatmul.mubr.bf16.gmra.mrb[0].mxu0 %v170
    %v359 = vpop.f32.mrb[0].mxu0
    %v360 = vadd.f32 0.0, %v359
    %v361 = vpop.f32.mrb[0].mxu0
    %v362 = vpop.f32.mrb[0].mxu0
    %v363 = vadd.f32 0.0, %v362
    %v364 = vpop.f32.mrb[0].mxu0
    %365 = vmatprep.mubr.bf16.mxu0 0
    %366 = vmatmul.mubr.bf16.gmra.mrb[0].mxu0 %v173
    %v367 = vpop.f32.mrb[0].mxu0
    %v368 = vadd.f32 0.0, %v367
    %v369 = vpop.f32.mrb[0].mxu0
    %v370 = vpop.f32.mrb[0].mxu0
    %v371 = vadd.f32 0.0, %v370
    %v372 = vpop.f32.mrb[0].mxu0
    %373 = vmatprep.mubr.bf16.mxu0 0
    %374 = vmatmul.mubr.bf16.gmra.mrb[0].mxu0 %v176
    %v375 = vpop.f32.mrb[0].mxu0
    %v376 = vadd.f32 0.0, %v375
    %v377 = vpop.f32.mrb[0].mxu0
    %v378 = vpop.f32.mrb[0].mxu0
    %v379 = vadd.f32 0.0, %v378
    %v380 = vpop.f32.mrb[0].mxu0
    %381 = vmatprep.mubr.bf16.mxu0 0
    %382 = vmatmul.mubr.bf16.gmra.mrb[0].mxu0 %v179
    %v383 = vpop.f32.mrb[0].mxu0
    %v384 = vadd.f32 0.0, %v383
    %v385 = vpop.f32.mrb[0].mxu0
    %v386 = vpop.f32.mrb[0].mxu0
    %v387 = vadd.f32 0.0, %v386
    %v388 = vpop.f32.mrb[0].mxu0
    %389 = vmatprep.mubr.bf16.mxu0 0
    %390 = vmatmul.mubr.bf16.gmra.mrb[0].mxu0 %v182
    %v391 = vpop.f32.mrb[0].mxu0
    %v392 = vadd.f32 0.0, %v391
    %v393 = vpop.f32.mrb[0].mxu0
    %v394 = vpop.f32.mrb[0].mxu0
    %v395 = vadd.f32 0.0, %v394
    %v396 = vpop.f32.mrb[0].mxu0
    %397 = vmatprep.mubr.bf16.mxu0 0
    %398 = vmatmul.mubr.bf16.gmra.mrb[0].mxu0 %v185
    %v399 = vpop.f32.mrb[0].mxu0
    %v400 = vadd.f32 0.0, %v399
    %v401 = vpop.f32.mrb[0].mxu0
    %v402 = vpop.f32.mrb[0].mxu0
    %v403 = vadd.f32 0.0, %v402
    %v404 = vpop.f32.mrb[0].mxu0
    %405 = vmatprep.mubr.bf16.mxu0 0
    %406 = vmatmul.mubr.bf16.gmra.mrb[0].mxu0 %v188
    %v407 = vpop.f32.mrb[0].mxu0
    %v408 = vadd.f32 0.0, %v407
    %v409 = vpop.f32.mrb[0].mxu0
    %v410 = vpop.f32.mrb[0].mxu0
    %v411 = vadd.f32 0.0, %v410
    %v412 = vpop.f32.mrb[0].mxu0
    %413 = vmatprep.mubr.bf16.mxu0 0
    %414 = vmatmul.mubr.bf16.gmra.mrb[0].mxu0 %v191
    %v415 = vpop.f32.mrb[0].mxu0
    %v416 = vadd.f32 0.0, %v415
    %v417 = vpop.f32.mrb[0].mxu0
    %v418 = vpop.f32.mrb[0].mxu0
    %v419 = vadd.f32 0.0, %v418
    %v420 = vpop.f32.mrb[0].mxu0
    %421 = vmatprep.mubr.bf16.mxu0 0
    %422 = vmatmul.mubr.bf16.gmra.mrb[0].mxu0 %v194
    %v423 = vpop.f32.mrb[0].mxu0
    %v424 = vadd.f32 0.0, %v423
    %v425 = vpop.f32.mrb[0].mxu0
    %v426 = vpop.f32.mrb[0].mxu0
    %v427 = vadd.f32 0.0, %v426
    %v428 = vpop.f32.mrb[0].mxu0
    %429 = vmatprep.mubr.bf16.mxu0 0
    %430 = vmatmul.mubr.bf16.gmra.mrb[0].mxu0 %v197
    %v431 = vpop.f32.mrb[0].mxu0
    %v432 = vadd.f32 0.0, %v431
    %v433 = vpop.f32.mrb[0].mxu0
    %v434 = vpop.f32.mrb[0].mxu0
    %v435 = vadd.f32 0.0, %v434
    %v436 = vpop.f32.mrb[0].mxu0
    %437 = vmatprep.mubr.bf16.mxu0 0
    %438 = vmatmul.mubr.bf16.gmra.mrb[0].mxu0 %v200
    %v439 = vpop.f32.mrb[0].mxu0
    %v440 = vadd.f32 0.0, %v439
    %v441 = vpop.f32.mrb[0].mxu0
    %v442 = vpop.f32.mrb[0].mxu0
    %v443 = vadd.f32 0.0, %v442
    %v444 = vpop.f32.mrb[0].mxu0
    %445 = vmatprep.mubr.bf16.mxu0 0
    %446 = vmatmul.mubr.bf16.gmra.mrb[0].mxu0 %v203
    %v447 = vpop.f32.mrb[0].mxu0
    %v448 = vadd.f32 0.0, %v447
    %v449 = vpop.f32.mrb[0].mxu0
    %v450 = vpop.f32.mrb[0].mxu0
    %v451 = vadd.f32 0.0, %v450
    %v452 = vpop.f32.mrb[0].mxu0
    %453 = vmatprep.mubr.bf16.mxu0 0
    %454 = vmatmul.mubr.bf16.gmra.mrb[0].mxu0 %v206
    %v455 = vpop.f32.mrb[0].mxu0
    %v456 = vadd.f32 0.0, %v455
    %v457 = vpop.f32.mrb[0].mxu0
    %v458 = vpop.f32.mrb[0].mxu0
    %v459 = vadd.f32 0.0, %v458
    %v460 = vpop.f32.mrb[0].mxu0
    %461 = vmatprep.mubr.bf16.mxu0 0
    %462 = vmatmul.mubr.bf16.gmra.mrb[0].mxu0 %v209
    %v463 = vpop.f32.mrb[0].mxu0
    %v464 = vadd.f32 0.0, %v463
    %v465 = vpop.f32.mrb[0].mxu0
    %v466 = vpop.f32.mrb[0].mxu0
    %v467 = vadd.f32 0.0, %v466
    %v468 = vpop.f32.mrb[0].mxu0
    %469 = vmatprep.mubr.bf16.mxu0 0
    %470 = vmatmul.mubr.bf16.gmra.mrb[0].mxu0 %v212
    %v471 = vpop.f32.mrb[0].mxu0
    %v472 = vadd.f32 0.0, %v471
    %v473 = vpop.f32.mrb[0].mxu0
    %v474 = vpop.f32.mrb[0].mxu0
    %v475 = vadd.f32 0.0, %v474
    %v476 = vpop.f32.mrb[0].mxu0
    %477 = vmatprep.mubr.bf16.mxu0 0
    %478 = vmatmul.mubr.bf16.gmra.mrb[0].mxu0 %v215
    %v479 = vpop.f32.mrb[0].mxu0
    %v480 = vadd.f32 0.0, %v479
    %v481 = vpop.f32.mrb[0].mxu0
    %v482 = vpop.f32.mrb[0].mxu0
    %v483 = vadd.f32 0.0, %v482
    %v484 = vpop.f32.mrb[0].mxu0
    %485 = vmatprep.mubr.bf16.mxu0 0
    %486 = vmatmul.mubr.bf16.gmra.mrb[0].mxu0 %v218
    %v487 = vpop.f32.mrb[0].mxu0
    %v488 = vadd.f32 0.0, %v487
    %v489 = vpop.f32.mrb[0].mxu0
    %v490 = vpop.f32.mrb[0].mxu0
    %v491 = vadd.f32 0.0, %v490
    %v492 = vpop.f32.mrb[0].mxu0
    %493 = vmatprep.mubr.bf16.mxu0 0
    %494 = vmatmul.mubr.bf16.gmra.mrb[0].mxu0 %v221
    %v495 = vpop.f32.mrb[0].mxu0
    %v496 = vadd.f32 0.0, %v495
    %v497 = vpop.f32.mrb[0].mxu0
    %v498 = vpop.f32.mrb[0].mxu0
    %v499 = vadd.f32 0.0, %v498
    %v500 = vpop.f32.mrb[0].mxu0
    %501 = vmatprep.mubr.bf16.mxu0 0
    %502 = vmatmul.mubr.bf16.gmra.mrb[0].mxu0 %v224
    %v503 = vpop.f32.mrb[0].mxu0
    %v504 = vadd.f32 0.0, %v503
    %v505 = vpop.f32.mrb[0].mxu0
    %v506 = vpop.f32.mrb[0].mxu0
    %v507 = vadd.f32 0.0, %v506
    %v508 = vpop.f32.mrb[0].mxu0
    %509 = vmatprep.mubr.bf16.mxu0 0
    %510 = vmatmul.mubr.bf16.gmra.mrb[0].mxu0 %v227
    %v511 = vpop.f32.mrb[0].mxu0
    %v512 = vadd.f32 0.0, %v511
    %v513 = vpop.f32.mrb[0].mxu0
    %v514 = vpop.f32.mrb[0].mxu0
    %v515 = vadd.f32 0.0, %v514
    %v516 = vpop.f32.mrb[0].mxu0
    %517 = vdwg.mxu0
    %v518 = vpack.c.bf16 %v267, %v264
    %v519 = vpack.c.bf16 %v275, %v272
    %v520 = vpack.c.bf16 %v283, %v280
    %v521 = vpack.c.bf16 %v291, %v288
    %v522 = vpack.c.bf16 %v299, %v296
    %v523 = vpack.c.bf16 %v307, %v304
    %v524 = vpack.c.bf16 %v315, %v312
    %v525 = vpack.c.bf16 %v323, %v320
    %v526 = vpack.c.bf16 %v331, %v328
    %v527 = vpack.c.bf16 %v339, %v336
    %v528 = vpack.c.bf16 %v347, %v344
    %v529 = vpack.c.bf16 %v355, %v352
    %v530 = vpack.c.bf16 %v363, %v360
    %v531 = vpack.c.bf16 %v371, %v368
    %v532 = vpack.c.bf16 %v379, %v376
    %v533 = vpack.c.bf16 %v387, %v384
    %v534 = vpack.c.bf16 %v395, %v392
    %v535 = vpack.c.bf16 %v403, %v400
    %v536 = vpack.c.bf16 %v411, %v408
    %v537 = vpack.c.bf16 %v419, %v416
    %v538 = vpack.c.bf16 %v427, %v424
    %v539 = vpack.c.bf16 %v435, %v432
    %v540 = vpack.c.bf16 %v443, %v440
    %v541 = vpack.c.bf16 %v451, %v448
    %v542 = vpack.c.bf16 %v459, %v456
    %v543 = vpack.c.bf16 %v467, %v464
    %v544 = vpack.c.bf16 %v475, %v472
    %v545 = vpack.c.bf16 %v483, %v480
    %v546 = vpack.c.bf16 %v491, %v488
    %v547 = vpack.c.bf16 %v499, %v496
    %v548 = vpack.c.bf16 %v507, %v504
    %v549 = vpack.c.bf16 %v515, %v512
    %v582 = vunpack.c.l.b16 %v518
    %v583 = vunpack.c.h.b16 %v518
    %v584 = vunpack.c.l.b16 %v519
    %v585 = vunpack.c.h.b16 %v519
    %v586 = vunpack.c.l.b16 %v520
    %v587 = vunpack.c.h.b16 %v520
    %v588 = vunpack.c.l.b16 %v521
    %v589 = vunpack.c.h.b16 %v521
    %v590 = vunpack.c.l.b16 %v522
    %v591 = vunpack.c.h.b16 %v522
    %v592 = vunpack.c.l.b16 %v523
    %v593 = vunpack.c.h.b16 %v523
    %v594 = vunpack.c.l.b16 %v524
    %v595 = vunpack.c.h.b16 %v524
    %v596 = vunpack.c.l.b16 %v525
    %v597 = vunpack.c.h.b16 %v525
    %v598 = vunpack.c.l.b16 %v526
    %v599 = vunpack.c.h.b16 %v526
    %v600 = vunpack.c.l.b16 %v527
    %v601 = vunpack.c.h.b16 %v527
    %v602 = vunpack.c.l.b16 %v528
    %v603 = vunpack.c.h.b16 %v528
    %v604 = vunpack.c.l.b16 %v529
    %v605 = vunpack.c.h.b16 %v529
    %v606 = vunpack.c.l.b16 %v530
    %v607 = vunpack.c.h.b16 %v530
    %v608 = vunpack.c.l.b16 %v531
    %v609 = vunpack.c.h.b16 %v531
    %v610 = vunpack.c.l.b16 %v532
    %v611 = vunpack.c.h.b16 %v532
    %v612 = vunpack.c.l.b16 %v533
    %v613 = vunpack.c.h.b16 %v533
    %v614 = vunpack.c.l.b16 %v534
    %v615 = vunpack.c.h.b16 %v534
    %v616 = vunpack.c.l.b16 %v535
    %v617 = vunpack.c.h.b16 %v535
    %v618 = vunpack.c.l.b16 %v536
    %v619 = vunpack.c.h.b16 %v536
    %v620 = vunpack.c.l.b16 %v537
    %v621 = vunpack.c.h.b16 %v537
    %v622 = vunpack.c.l.b16 %v538
    %v623 = vunpack.c.h.b16 %v538
    %v624 = vunpack.c.l.b16 %v539
    %v625 = vunpack.c.h.b16 %v539
    %v626 = vunpack.c.l.b16 %v540
    %v627 = vunpack.c.h.b16 %v540
    %v628 = vunpack.c.l.b16 %v541
    %v629 = vunpack.c.h.b16 %v541
    %v630 = vunpack.c.l.b16 %v542
    %v631 = vunpack.c.h.b16 %v542
    %v632 = vunpack.c.l.b16 %v543
    %v633 = vunpack.c.h.b16 %v543
    %v634 = vunpack.c.l.b16 %v544
    %v635 = vunpack.c.h.b16 %v544
    %v636 = vunpack.c.l.b16 %v545
    %v637 = vunpack.c.h.b16 %v545
    %v638 = vunpack.c.l.b16 %v546
    %v639 = vunpack.c.h.b16 %v546
    %v640 = vunpack.c.l.b16 %v547
    %v641 = vunpack.c.h.b16 %v547
    %v642 = vunpack.c.l.b16 %v548
    %v643 = vunpack.c.h.b16 %v548
    %v644 = vunpack.c.l.b16 %v549
    %v645 = vunpack.c.h.b16 %v549
    %v646 = vpack.c.b16 %v582, %v582
    %v647 = vpack.c.b16 %v583, %v583
    %v648 = vpack.c.b16 %v584, %v584
    %v649 = vpack.c.b16 %v585, %v585
    %v650 = vpack.c.b16 %v586, %v586
    %v651 = vpack.c.b16 %v587, %v587
    %v652 = vpack.c.b16 %v588, %v588
    %v653 = vpack.c.b16 %v589, %v589
    %v654 = vpack.c.b16 %v590, %v590
    %v655 = vpack.c.b16 %v591, %v591
    %v656 = vpack.c.b16 %v592, %v592
    %v657 = vpack.c.b16 %v593, %v593
    %v658 = vpack.c.b16 %v594, %v594
    %v659 = vpack.c.b16 %v595, %v595
    %v660 = vpack.c.b16 %v596, %v596
    %v661 = vpack.c.b16 %v597, %v597
    %v662 = vpack.c.b16 %v598, %v598
    %v663 = vpack.c.b16 %v599, %v599
    %v664 = vpack.c.b16 %v600, %v600
    %v665 = vpack.c.b16 %v601, %v601
    %v666 = vpack.c.b16 %v602, %v602
    %v667 = vpack.c.b16 %v603, %v603
    %v668 = vpack.c.b16 %v604, %v604
    %v669 = vpack.c.b16 %v605, %v605
    %v670 = vpack.c.b16 %v606, %v606
    %v671 = vpack.c.b16 %v607, %v607
    %v672 = vpack.c.b16 %v608, %v608
    %v673 = vpack.c.b16 %v609, %v609
    %v674 = vpack.c.b16 %v610, %v610
    %v675 = vpack.c.b16 %v611, %v611
    %v676 = vpack.c.b16 %v612, %v612
    %v677 = vpack.c.b16 %v613, %v613
    %v678 = vpack.c.b16 %v614, %v614
    %v679 = vpack.c.b16 %v615, %v615
    %v680 = vpack.c.b16 %v616, %v616
    %v681 = vpack.c.b16 %v617, %v617
    %v682 = vpack.c.b16 %v618, %v618
    %v683 = vpack.c.b16 %v619, %v619
    %v684 = vpack.c.b16 %v620, %v620
    %v685 = vpack.c.b16 %v621, %v621
    %v686 = vpack.c.b16 %v622, %v622
    %v687 = vpack.c.b16 %v623, %v623
    %v688 = vpack.c.b16 %v624, %v624
    %v689 = vpack.c.b16 %v625, %v625
    %v690 = vpack.c.b16 %v626, %v626
    %v691 = vpack.c.b16 %v627, %v627
    %v692 = vpack.c.b16 %v628, %v628
    %v693 = vpack.c.b16 %v629, %v629
    %v694 = vpack.c.b16 %v630, %v630
    %v695 = vpack.c.b16 %v631, %v631
    %v696 = vpack.c.b16 %v632, %v632
    %v697 = vpack.c.b16 %v633, %v633
    %v698 = vpack.c.b16 %v634, %v634
    %v699 = vpack.c.b16 %v635, %v635
    %v700 = vpack.c.b16 %v636, %v636
    %v701 = vpack.c.b16 %v637, %v637
    %v702 = vpack.c.b16 %v638, %v638
    %v703 = vpack.c.b16 %v639, %v639
    %v704 = vpack.c.b16 %v640, %v640
    %v705 = vpack.c.b16 %v641, %v641
    %v706 = vpack.c.b16 %v642, %v642
    %v707 = vpack.c.b16 %v643, %v643
    %v708 = vpack.c.b16 %v644, %v644
    %v709 = vpack.c.b16 %v645, %v645
    %vm774 = vcmask 27648
    %775 = vst.msk [vmem:[%s2] sm:$0xf] %vm774, %v646
    %776 = vst.msk [vmem:[%s2 + $0x4] sm:$0xf] %vm774, %v647
    %777 = vst.msk [vmem:[%s2 + $0x8] sm:$0xf] %vm774, %v648
    %778 = vst.msk [vmem:[%s2 + $0xc] sm:$0xf] %vm774, %v649
    %779 = vst.msk [vmem:[%s2 + $0x10] sm:$0xf] %vm774, %v650
    %780 = vst.msk [vmem:[%s2 + $0x14] sm:$0xf] %vm774, %v651
    %781 = vst.msk [vmem:[%s2 + $0x18] sm:$0xf] %vm774, %v652
    %782 = vst.msk [vmem:[%s2 + $0x1c] sm:$0xf] %vm774, %v653
    %783 = vst.msk [vmem:[%s2 + $0x20] sm:$0xf] %vm774, %v654
    %784 = vst.msk [vmem:[%s2 + $0x24] sm:$0xf] %vm774, %v655
    %785 = vst.msk [vmem:[%s2 + $0x28] sm:$0xf] %vm774, %v656
    %786 = vst.msk [vmem:[%s2 + $0x2c] sm:$0xf] %vm774, %v657
    %787 = vst.msk [vmem:[%s2 + $0x30] sm:$0xf] %vm774, %v658
    %788 = vst.msk [vmem:[%s2 + $0x34] sm:$0xf] %vm774, %v659
    %789 = vst.msk [vmem:[%s2 + $0x38] sm:$0xf] %vm774, %v660
    %790 = vst.msk [vmem:[%s2 + $0x3c] sm:$0xf] %vm774, %v661
    %791 = vst.msk [vmem:[%s2 + $0x40] sm:$0xf] %vm774, %v662
    %792 = vst.msk [vmem:[%s2 + $0x44] sm:$0xf] %vm774, %v663
    %793 = vst.msk [vmem:[%s2 + $0x48] sm:$0xf] %vm774, %v664
    %794 = vst.msk [vmem:[%s2 + $0x4c] sm:$0xf] %vm774, %v665
    %795 = vst.msk [vmem:[%s2 + $0x50] sm:$0xf] %vm774, %v666
    %796 = vst.msk [vmem:[%s2 + $0x54] sm:$0xf] %vm774, %v667
    %797 = vst.msk [vmem:[%s2 + $0x58] sm:$0xf] %vm774, %v668
    %798 = vst.msk [vmem:[%s2 + $0x5c] sm:$0xf] %vm774, %v669
    %799 = vst.msk [vmem:[%s2 + $0x60] sm:$0xf] %vm774, %v670
    %800 = vst.msk [vmem:[%s2 + $0x64] sm:$0xf] %vm774, %v671
    %801 = vst.msk [vmem:[%s2 + $0x68] sm:$0xf] %vm774, %v672
    %802 = vst.msk [vmem:[%s2 + $0x6c] sm:$0xf] %vm774, %v673
    %803 = vst.msk [vmem:[%s2 + $0x70] sm:$0xf] %vm774, %v674
    %804 = vst.msk [vmem:[%s2 + $0x74] sm:$0xf] %vm774, %v675
    %805 = vst.msk [vmem:[%s2 + $0x78] sm:$0xf] %vm774, %v676
    %806 = vst.msk [vmem:[%s2 + $0x7c] sm:$0xf] %vm774, %v677
    %807 = vst.msk [vmem:[%s2 + $0x80] sm:$0xf] %vm774, %v678
    %808 = vst.msk [vmem:[%s2 + $0x84] sm:$0xf] %vm774, %v679
    %809 = vst.msk [vmem:[%s2 + $0x88] sm:$0xf] %vm774, %v680
    %810 = vst.msk [vmem:[%s2 + $0x8c] sm:$0xf] %vm774, %v681
    %811 = vst.msk [vmem:[%s2 + $0x90] sm:$0xf] %vm774, %v682
    %812 = vst.msk [vmem:[%s2 + $0x94] sm:$0xf] %vm774, %v683
    %813 = vst.msk [vmem:[%s2 + $0x98] sm:$0xf] %vm774, %v684
    %814 = vst.msk [vmem:[%s2 + $0x9c] sm:$0xf] %vm774, %v685
    %815 = vst.msk [vmem:[%s2 + $0xa0] sm:$0xf] %vm774, %v686
    %816 = vst.msk [vmem:[%s2 + $0xa4] sm:$0xf] %vm774, %v687
    %817 = vst.msk [vmem:[%s2 + $0xa8] sm:$0xf] %vm774, %v688
    %818 = vst.msk [vmem:[%s2 + $0xac] sm:$0xf] %vm774, %v689
    %819 = vst.msk [vmem:[%s2 + $0xb0] sm:$0xf] %vm774, %v690
    %820 = vst.msk [vmem:[%s2 + $0xb4] sm:$0xf] %vm774, %v691
    %821 = vst.msk [vmem:[%s2 + $0xb8] sm:$0xf] %vm774, %v692
    %822 = vst.msk [vmem:[%s2 + $0xbc] sm:$0xf] %vm774, %v693
    %823 = vst.msk [vmem:[%s2 + $0xc0] sm:$0xf] %vm774, %v694
    %824 = vst.msk [vmem:[%s2 + $0xc4] sm:$0xf] %vm774, %v695
    %825 = vst.msk [vmem:[%s2 + $0xc8] sm:$0xf] %vm774, %v696
    %826 = vst.msk [vmem:[%s2 + $0xcc] sm:$0xf] %vm774, %v697
    %827 = vst.msk [vmem:[%s2 + $0xd0] sm:$0xf] %vm774, %v698
    %828 = vst.msk [vmem:[%s2 + $0xd4] sm:$0xf] %vm774, %v699
    %829 = vst.msk [vmem:[%s2 + $0xd8] sm:$0xf] %vm774, %v700
    %830 = vst.msk [vmem:[%s2 + $0xdc] sm:$0xf] %vm774, %v701
    %831 = vst.msk [vmem:[%s2 + $0xe0] sm:$0xf] %vm774, %v702
    %832 = vst.msk [vmem:[%s2 + $0xe4] sm:$0xf] %vm774, %v703
    %833 = vst.msk [vmem:[%s2 + $0xe8] sm:$0xf] %vm774, %v704
    %834 = vst.msk [vmem:[%s2 + $0xec] sm:$0xf] %vm774, %v705
    %835 = vst.msk [vmem:[%s2 + $0xf0] sm:$0xf] %vm774, %v706
    %836 = vst.msk [vmem:[%s2 + $0xf4] sm:$0xf] %vm774, %v707
    %837 = vst.msk [vmem:[%s2 + $0xf8] sm:$0xf] %vm774, %v708
    %838 = vst.msk [vmem:[%s2 + $0xfc] sm:$0xf] %vm774, %v709
    %vm839 = vcmask 31744
    %v840 = vsel %vm839, %v264, 0.0
    %v841 = vsel %vm839, %v267, 0.0
    %v842 = vadd.f32 %v840, %v841
    %v843 = vsel %vm839, %v272, 0.0
    %v844 = vadd.f32 %v842, %v843
    %v845 = vsel %vm839, %v275, 0.0
    %v846 = vadd.f32 %v844, %v845
    %v847 = vsel %vm839, %v280, 0.0
    %v848 = vadd.f32 %v846, %v847
    %v849 = vsel %vm839, %v283, 0.0
    %v850 = vadd.f32 %v848, %v849
    %v851 = vsel %vm839, %v288, 0.0
    %v852 = vadd.f32 %v850, %v851
    %v853 = vsel %vm839, %v291, 0.0
    %v854 = vadd.f32 %v852, %v853
    %v855 = vsel %vm839, %v296, 0.0
    %v856 = vadd.f32 %v854, %v855
    %v857 = vsel %vm839, %v299, 0.0
    %v858 = vadd.f32 %v856, %v857
    %v859 = vsel %vm839, %v304, 0.0
    %v860 = vadd.f32 %v858, %v859
    %v861 = vsel %vm839, %v307, 0.0
    %v862 = vadd.f32 %v860, %v861
    %v863 = vsel %vm839, %v312, 0.0
    %v864 = vadd.f32 %v862, %v863
    %v865 = vsel %vm839, %v315, 0.0
    %v866 = vadd.f32 %v864, %v865
    %v867 = vsel %vm839, %v320, 0.0
    %v868 = vadd.f32 %v866, %v867
    %v869 = vsel %vm839, %v323, 0.0
    %v870 = vadd.f32 %v868, %v869
    %v871 = vsel %vm839, %v328, 0.0
    %v872 = vadd.f32 %v870, %v871
    %v873 = vsel %vm839, %v331, 0.0
    %v874 = vadd.f32 %v872, %v873
    %v875 = vsel %vm839, %v336, 0.0
    %v876 = vadd.f32 %v874, %v875
    %v877 = vsel %vm839, %v339, 0.0
    %v878 = vadd.f32 %v876, %v877
    %v879 = vsel %vm839, %v344, 0.0
    %v880 = vadd.f32 %v878, %v879
    %v881 = vsel %vm839, %v347, 0.0
    %v882 = vadd.f32 %v880, %v881
    %v883 = vsel %vm839, %v352, 0.0
    %v884 = vadd.f32 %v882, %v883
    %v885 = vsel %vm839, %v355, 0.0
    %v886 = vadd.f32 %v884, %v885
    %v887 = vsel %vm839, %v360, 0.0
    %v888 = vadd.f32 %v886, %v887
    %v889 = vsel %vm839, %v363, 0.0
    %v890 = vadd.f32 %v888, %v889
    %v891 = vsel %vm839, %v368, 0.0
    %v892 = vadd.f32 %v890, %v891
    %v893 = vsel %vm839, %v371, 0.0
    %v894 = vadd.f32 %v892, %v893
    %v895 = vsel %vm839, %v376, 0.0
    %v896 = vadd.f32 %v894, %v895
    %v897 = vsel %vm839, %v379, 0.0
    %v898 = vadd.f32 %v896, %v897
    %v899 = vsel %vm839, %v384, 0.0
    %v900 = vadd.f32 %v898, %v899
    %v901 = vsel %vm839, %v387, 0.0
    %v902 = vadd.f32 %v900, %v901
    %v903 = vsel %vm839, %v392, 0.0
    %v904 = vadd.f32 %v902, %v903
    %v905 = vsel %vm839, %v395, 0.0
    %v906 = vadd.f32 %v904, %v905
    %v907 = vsel %vm839, %v400, 0.0
    %v908 = vadd.f32 %v906, %v907
    %v909 = vsel %vm839, %v403, 0.0
    %v910 = vadd.f32 %v908, %v909
    %v911 = vsel %vm839, %v408, 0.0
    %v912 = vadd.f32 %v910, %v911
    %v913 = vsel %vm839, %v411, 0.0
    %v914 = vadd.f32 %v912, %v913
    %v915 = vsel %vm839, %v416, 0.0
    %v916 = vadd.f32 %v914, %v915
    %v917 = vsel %vm839, %v419, 0.0
    %v918 = vadd.f32 %v916, %v917
    %v919 = vsel %vm839, %v424, 0.0
    %v920 = vadd.f32 %v918, %v919
    %v921 = vsel %vm839, %v427, 0.0
    %v922 = vadd.f32 %v920, %v921
    %v923 = vsel %vm839, %v432, 0.0
    %v924 = vadd.f32 %v922, %v923
    %v925 = vsel %vm839, %v435, 0.0
    %v926 = vadd.f32 %v924, %v925
    %v927 = vsel %vm839, %v440, 0.0
    %v928 = vadd.f32 %v926, %v927
    %v929 = vsel %vm839, %v443, 0.0
    %v930 = vadd.f32 %v928, %v929
    %v931 = vsel %vm839, %v448, 0.0
    %v932 = vadd.f32 %v930, %v931
    %v933 = vsel %vm839, %v451, 0.0
    %v934 = vadd.f32 %v932, %v933
    %v935 = vsel %vm839, %v456, 0.0
    %v936 = vadd.f32 %v934, %v935
    %v937 = vsel %vm839, %v459, 0.0
    %v938 = vadd.f32 %v936, %v937
    %v939 = vsel %vm839, %v464, 0.0
    %v940 = vadd.f32 %v938, %v939
    %v941 = vsel %vm839, %v467, 0.0
    %v942 = vadd.f32 %v940, %v941
    %v943 = vsel %vm839, %v472, 0.0
    %v944 = vadd.f32 %v942, %v943
    %v945 = vsel %vm839, %v475, 0.0
    %v946 = vadd.f32 %v944, %v945
    %v947 = vsel %vm839, %v480, 0.0
    %v948 = vadd.f32 %v946, %v947
    %v949 = vsel %vm839, %v483, 0.0
    %v950 = vadd.f32 %v948, %v949
    %v951 = vsel %vm839, %v488, 0.0
    %v952 = vadd.f32 %v950, %v951
    %v953 = vsel %vm839, %v491, 0.0
    %v954 = vadd.f32 %v952, %v953
    %v955 = vsel %vm839, %v496, 0.0
    %v956 = vadd.f32 %v954, %v955
    %v957 = vsel %vm839, %v499, 0.0
    %v958 = vadd.f32 %v956, %v957
    %v959 = vsel %vm839, %v504, 0.0
    %v960 = vadd.f32 %v958, %v959
    %v961 = vsel %vm839, %v507, 0.0
    %v962 = vadd.f32 %v960, %v961
    %v963 = vsel %vm839, %v512, 0.0
    %v964 = vadd.f32 %v962, %v963
    %v965 = vsel %vm839, %v515, 0.0
    %v966 = vadd.f32 %v964, %v965
    %v967 = vrot.slane %v966, 4
    %v968 = vadd.f32 %v966, %v967
    %v969 = vrot.slane %v968, 2
    %v970 = vadd.f32 %v968, %v969
    %v971 = vrot.slane %v970, 1
    %v972 = vadd.f32 %v970, %v971
    %v973 = vmul.f32 %v264, %v264
    %v974 = vmul.f32 %v267, %v267
    %v975 = vmul.f32 %v272, %v272
    %v976 = vmul.f32 %v275, %v275
    %v977 = vmul.f32 %v280, %v280
    %v978 = vmul.f32 %v283, %v283
    %v979 = vmul.f32 %v288, %v288
    %v980 = vmul.f32 %v291, %v291
    %v981 = vmul.f32 %v296, %v296
    %v982 = vmul.f32 %v299, %v299
    %v983 = vmul.f32 %v304, %v304
    %v984 = vmul.f32 %v307, %v307
    %v985 = vmul.f32 %v312, %v312
    %v986 = vmul.f32 %v315, %v315
    %v987 = vmul.f32 %v320, %v320
    %v988 = vmul.f32 %v323, %v323
    %v989 = vmul.f32 %v328, %v328
    %v990 = vmul.f32 %v331, %v331
    %v991 = vmul.f32 %v336, %v336
    %v992 = vmul.f32 %v339, %v339
    %v993 = vmul.f32 %v344, %v344
    %v994 = vmul.f32 %v347, %v347
    %v995 = vmul.f32 %v352, %v352
    %v996 = vmul.f32 %v355, %v355
    %v997 = vmul.f32 %v360, %v360
    %v998 = vmul.f32 %v363, %v363
    %v999 = vmul.f32 %v368, %v368
    %v1000 = vmul.f32 %v371, %v371
    %v1001 = vmul.f32 %v376, %v376
    %v1002 = vmul.f32 %v379, %v379
    %v1003 = vmul.f32 %v384, %v384
    %v1004 = vmul.f32 %v387, %v387
    %v1005 = vmul.f32 %v392, %v392
    %v1006 = vmul.f32 %v395, %v395
    %v1007 = vmul.f32 %v400, %v400
    %v1008 = vmul.f32 %v403, %v403
    %v1009 = vmul.f32 %v408, %v408
    %v1010 = vmul.f32 %v411, %v411
    %v1011 = vmul.f32 %v416, %v416
    %v1012 = vmul.f32 %v419, %v419
    %v1013 = vmul.f32 %v424, %v424
    %v1014 = vmul.f32 %v427, %v427
    %v1015 = vmul.f32 %v432, %v432
    %v1016 = vmul.f32 %v435, %v435
    %v1017 = vmul.f32 %v440, %v440
    %v1018 = vmul.f32 %v443, %v443
    %v1019 = vmul.f32 %v448, %v448
    %v1020 = vmul.f32 %v451, %v451
    %v1021 = vmul.f32 %v456, %v456
    %v1022 = vmul.f32 %v459, %v459
    %v1023 = vmul.f32 %v464, %v464
    %v1024 = vmul.f32 %v467, %v467
    %v1025 = vmul.f32 %v472, %v472
    %v1026 = vmul.f32 %v475, %v475
    %v1027 = vmul.f32 %v480, %v480
    %v1028 = vmul.f32 %v483, %v483
    %v1029 = vmul.f32 %v488, %v488
    %v1030 = vmul.f32 %v491, %v491
    %v1031 = vmul.f32 %v496, %v496
    %v1032 = vmul.f32 %v499, %v499
    %v1033 = vmul.f32 %v504, %v504
    %v1034 = vmul.f32 %v507, %v507
    %v1035 = vmul.f32 %v512, %v512
    %v1036 = vmul.f32 %v515, %v515
    %v1037 = vsel %vm839, %v973, 0.0
    %v1038 = vsel %vm839, %v974, 0.0
    %v1039 = vadd.f32 %v1037, %v1038
    %v1040 = vsel %vm839, %v975, 0.0
    %v1041 = vadd.f32 %v1039, %v1040
    %v1042 = vsel %vm839, %v976, 0.0
    %v1043 = vadd.f32 %v1041, %v1042
    %v1044 = vsel %vm839, %v977, 0.0
    %v1045 = vadd.f32 %v1043, %v1044
    %v1046 = vsel %vm839, %v978, 0.0
    %v1047 = vadd.f32 %v1045, %v1046
    %v1048 = vsel %vm839, %v979, 0.0
    %v1049 = vadd.f32 %v1047, %v1048
    %v1050 = vsel %vm839, %v980, 0.0
    %v1051 = vadd.f32 %v1049, %v1050
    %v1052 = vsel %vm839, %v981, 0.0
    %v1053 = vadd.f32 %v1051, %v1052
    %v1054 = vsel %vm839, %v982, 0.0
    %v1055 = vadd.f32 %v1053, %v1054
    %v1056 = vsel %vm839, %v983, 0.0
    %v1057 = vadd.f32 %v1055, %v1056
    %v1058 = vsel %vm839, %v984, 0.0
    %v1059 = vadd.f32 %v1057, %v1058
    %v1060 = vsel %vm839, %v985, 0.0
    %v1061 = vadd.f32 %v1059, %v1060
    %v1062 = vsel %vm839, %v986, 0.0
    %v1063 = vadd.f32 %v1061, %v1062
    %v1064 = vsel %vm839, %v987, 0.0
    %v1065 = vadd.f32 %v1063, %v1064
    %v1066 = vsel %vm839, %v988, 0.0
    %v1067 = vadd.f32 %v1065, %v1066
    %v1068 = vsel %vm839, %v989, 0.0
    %v1069 = vadd.f32 %v1067, %v1068
    %v1070 = vsel %vm839, %v990, 0.0
    %v1071 = vadd.f32 %v1069, %v1070
    %v1072 = vsel %vm839, %v991, 0.0
    %v1073 = vadd.f32 %v1071, %v1072
    %v1074 = vsel %vm839, %v992, 0.0
    %v1075 = vadd.f32 %v1073, %v1074
    %v1076 = vsel %vm839, %v993, 0.0
    %v1077 = vadd.f32 %v1075, %v1076
    %v1078 = vsel %vm839, %v994, 0.0
    %v1079 = vadd.f32 %v1077, %v1078
    %v1080 = vsel %vm839, %v995, 0.0
    %v1081 = vadd.f32 %v1079, %v1080
    %v1082 = vsel %vm839, %v996, 0.0
    %v1083 = vadd.f32 %v1081, %v1082
    %v1084 = vsel %vm839, %v997, 0.0
    %v1085 = vadd.f32 %v1083, %v1084
    %v1086 = vsel %vm839, %v998, 0.0
    %v1087 = vadd.f32 %v1085, %v1086
    %v1088 = vsel %vm839, %v999, 0.0
    %v1089 = vadd.f32 %v1087, %v1088
    %v1090 = vsel %vm839, %v1000, 0.0
    %v1091 = vadd.f32 %v1089, %v1090
    %v1092 = vsel %vm839, %v1001, 0.0
    %v1093 = vadd.f32 %v1091, %v1092
    %v1094 = vsel %vm839, %v1002, 0.0
    %v1095 = vadd.f32 %v1093, %v1094
    %v1096 = vsel %vm839, %v1003, 0.0
    %v1097 = vadd.f32 %v1095, %v1096
    %v1098 = vsel %vm839, %v1004, 0.0
    %v1099 = vadd.f32 %v1097, %v1098
    %v1100 = vsel %vm839, %v1005, 0.0
    %v1101 = vadd.f32 %v1099, %v1100
    %v1102 = vsel %vm839, %v1006, 0.0
    %v1103 = vadd.f32 %v1101, %v1102
    %v1104 = vsel %vm839, %v1007, 0.0
    %v1105 = vadd.f32 %v1103, %v1104
    %v1106 = vsel %vm839, %v1008, 0.0
    %v1107 = vadd.f32 %v1105, %v1106
    %v1108 = vsel %vm839, %v1009, 0.0
    %v1109 = vadd.f32 %v1107, %v1108
    %v1110 = vsel %vm839, %v1010, 0.0
    %v1111 = vadd.f32 %v1109, %v1110
    %v1112 = vsel %vm839, %v1011, 0.0
    %v1113 = vadd.f32 %v1111, %v1112
    %v1114 = vsel %vm839, %v1012, 0.0
    %v1115 = vadd.f32 %v1113, %v1114
    %v1116 = vsel %vm839, %v1013, 0.0
    %v1117 = vadd.f32 %v1115, %v1116
    %v1118 = vsel %vm839, %v1014, 0.0
    %v1119 = vadd.f32 %v1117, %v1118
    %v1120 = vsel %vm839, %v1015, 0.0
    %v1121 = vadd.f32 %v1119, %v1120
    %v1122 = vsel %vm839, %v1016, 0.0
    %v1123 = vadd.f32 %v1121, %v1122
    %v1124 = vsel %vm839, %v1017, 0.0
    %v1125 = vadd.f32 %v1123, %v1124
    %v1126 = vsel %vm839, %v1018, 0.0
    %v1127 = vadd.f32 %v1125, %v1126
    %v1128 = vsel %vm839, %v1019, 0.0
    %v1129 = vadd.f32 %v1127, %v1128
    %v1130 = vsel %vm839, %v1020, 0.0
    %v1131 = vadd.f32 %v1129, %v1130
    %v1132 = vsel %vm839, %v1021, 0.0
    %v1133 = vadd.f32 %v1131, %v1132
    %v1134 = vsel %vm839, %v1022, 0.0
    %v1135 = vadd.f32 %v1133, %v1134
    %v1136 = vsel %vm839, %v1023, 0.0
    %v1137 = vadd.f32 %v1135, %v1136
    %v1138 = vsel %vm839, %v1024, 0.0
    %v1139 = vadd.f32 %v1137, %v1138
    %v1140 = vsel %vm839, %v1025, 0.0
    %v1141 = vadd.f32 %v1139, %v1140
    %v1142 = vsel %vm839, %v1026, 0.0
    %v1143 = vadd.f32 %v1141, %v1142
    %v1144 = vsel %vm839, %v1027, 0.0
    %v1145 = vadd.f32 %v1143, %v1144
    %v1146 = vsel %vm839, %v1028, 0.0
    %v1147 = vadd.f32 %v1145, %v1146
    %v1148 = vsel %vm839, %v1029, 0.0
    %v1149 = vadd.f32 %v1147, %v1148
    %v1150 = vsel %vm839, %v1030, 0.0
    %v1151 = vadd.f32 %v1149, %v1150
    %v1152 = vsel %vm839, %v1031, 0.0
    %v1153 = vadd.f32 %v1151, %v1152
    %v1154 = vsel %vm839, %v1032, 0.0
    %v1155 = vadd.f32 %v1153, %v1154
    %v1156 = vsel %vm839, %v1033, 0.0
    %v1157 = vadd.f32 %v1155, %v1156
    %v1158 = vsel %vm839, %v1034, 0.0
    %v1159 = vadd.f32 %v1157, %v1158
    %v1160 = vsel %vm839, %v1035, 0.0
    %v1161 = vadd.f32 %v1159, %v1160
    %v1162 = vsel %vm839, %v1036, 0.0
    %v1163 = vadd.f32 %v1161, %v1162
    %v1164 = vrot.slane %v1163, 4
    %v1165 = vadd.f32 %v1163, %v1164
    %v1166 = vrot.slane %v1165, 2
    %v1167 = vadd.f32 %v1165, %v1166
    %v1168 = vrot.slane %v1167, 1
    %v1169 = vadd.f32 %v1167, %v1168
    %vm1170 = vcmask 1040384
    %v1171 = vsel %vm1170, %v972, %v1169
    %vm1172 = vcmask 25600
    %1173 = vst.msk [vmem:[%s3] sm:$0x3] %vm1172, %v1171
    // Predicated region
    $region14: #{bottleneck_pallas.4} parent=1 // pred_check
      _
    $region15: #{bottleneck_pallas.4} parent=1 // pred_check_branch
      %1175 = sbr.rel (0) target = $region17
    $region16: #{bottleneck_pallas.4} parent=1 // pred_region
      _
    $region17: #{bottleneck_pallas.4} parent=1 // pred_fallthru
      _
    // Predicated region
    $region18: #{bottleneck_pallas.4} parent=1 // pred_check
      _
    $region19: #{bottleneck_pallas.4} parent=1 // pred_check_branch
      %1177 = sbr.rel (0) target = $region21
    $region20: #{bottleneck_pallas.4} parent=1 // pred_region
      _
    $region21: #{bottleneck_pallas.4} parent=1 // pred_fallthru
      _
    // Predicated region
    $region22: #{bottleneck_pallas.4} parent=1 // pred_check
      _
    $region23: #{bottleneck_pallas.4} parent=1 // pred_check_branch
      %1179 = sbr.rel (0) target = $region25
    $region24: #{bottleneck_pallas.4} parent=1 // pred_region
      _
    $region25: #{bottleneck_pallas.4} parent=1 // pred_fallthru
      _
    // Predicated region
    $region26: #{bottleneck_pallas.4} parent=1 // pred_check
      _
    $region27: #{bottleneck_pallas.4} parent=1 // pred_check_branch
      %1181 = sbr.rel (0) target = $region29
    $region28: #{bottleneck_pallas.4} parent=1 // pred_region
      _
    $region29: #{bottleneck_pallas.4} parent=1 // pred_fallthru
      _
    %1182 = vsyncpa [#allocation3], 1

// kernel: bottleneck_pallas.6
$region0: #{bottleneck_pallas.6}
  #allocation0 [shape = 'u32[]', space=smem, size = 0x4, offset = 0x4, fixed_abs, tag = 'smem constant byte address 0x4 - core index']
  #allocation1 [shape = 'u32[144,128]{1,0:T(1,128)}', space=vmem, size = 0x12000, scoped, tag = 'internal scratch']
  %s0 = inlined_call_operand.vmem [shape: f32[1,4], index: 0, kind: input, shape index: {}]
  %s1 = inlined_call_operand.vmem [shape: f32[1,4], index: 1, kind: input, shape index: {}]
  %s2 = inlined_call_operand.vmem [shape: bf16[512,4], index: 2, kind: input, shape index: {}]
  %s3 = inlined_call_operand.vmem [shape: bf16[4,16], index: 3, kind: input, shape index: {}]
  %s4 = inlined_call_operand.vmem [shape: bf16[512,16], index: 4, kind: output, shape index: {0}]
  %s5 = inlined_call_operand.vmem [shape: f32[1,2,16], index: 5, kind: output, shape index: {1}]
  %6 = xla_tuple %s4, %s5
  %s7 = sld [smem:[#allocation0]]
  $region34: #{bottleneck_pallas.6} parent=0
    _
  %s9 = ssub.s32 1, %s7
  %s10 = scalar_select 0, %s9, %s7
  // Predicated region
  $region2: #{bottleneck_pallas.6} parent=0 // pred_check
    _
  $region3: #{bottleneck_pallas.6} parent=0 // pred_check_branch
    %12 = sbr.rel (0) target = $region5
  $region4: #{bottleneck_pallas.6} parent=0 // pred_region
    _
  $region5: #{bottleneck_pallas.6} parent=0 // pred_fallthru
    _
  // Predicated region
  $region6: #{bottleneck_pallas.6} parent=0 // pred_check
    _
  $region7: #{bottleneck_pallas.6} parent=0 // pred_check_branch
    %14 = sbr.rel (0) target = $region9
  $region8: #{bottleneck_pallas.6} parent=0 // pred_region
    _
  $region9: #{bottleneck_pallas.6} parent=0 // pred_fallthru
    _
  // Predicated region
  $region10: #{bottleneck_pallas.6} parent=0 // pred_check
    _
  $region11: #{bottleneck_pallas.6} parent=0 // pred_check_branch
    %16 = sbr.rel (0) target = $region13
  $region12: #{bottleneck_pallas.6} parent=0 // pred_region
    _
  $region13: #{bottleneck_pallas.6} parent=0 // pred_fallthru
    _
  // Predicated region
  $region14: #{bottleneck_pallas.6} parent=0 // pred_check
    _
  $region15: #{bottleneck_pallas.6} parent=0 // pred_check_branch
    %18 = sbr.rel (0) target = $region17
  $region16: #{bottleneck_pallas.6} parent=0 // pred_region
    _
  $region17: #{bottleneck_pallas.6} parent=0 // pred_fallthru
    _
  %v20 = vld [vmem:[%s2] sm:$0xf]
  %v21 = vld [vmem:[%s2 + $0x4] sm:$0xf]
  %v22 = vld [vmem:[%s2 + $0x8] sm:$0xf]
  %v23 = vld [vmem:[%s2 + $0xc] sm:$0xf]
  %v24 = vld [vmem:[%s2 + $0x10] sm:$0xf]
  %v25 = vld [vmem:[%s2 + $0x14] sm:$0xf]
  %v26 = vld [vmem:[%s2 + $0x18] sm:$0xf]
  %v27 = vld [vmem:[%s2 + $0x1c] sm:$0xf]
  %v28 = vld [vmem:[%s2 + $0x20] sm:$0xf]
  %v29 = vld [vmem:[%s2 + $0x24] sm:$0xf]
  %v30 = vld [vmem:[%s2 + $0x28] sm:$0xf]
  %v31 = vld [vmem:[%s2 + $0x2c] sm:$0xf]
  %v32 = vld [vmem:[%s2 + $0x30] sm:$0xf]
  %v33 = vld [vmem:[%s2 + $0x34] sm:$0xf]
  %v34 = vld [vmem:[%s2 + $0x38] sm:$0xf]
  %v35 = vld [vmem:[%s2 + $0x3c] sm:$0xf]
  %v36 = vld [vmem:[%s2 + $0x40] sm:$0xf]
  %v37 = vld [vmem:[%s2 + $0x44] sm:$0xf]
  %v38 = vld [vmem:[%s2 + $0x48] sm:$0xf]
  %v39 = vld [vmem:[%s2 + $0x4c] sm:$0xf]
  %v40 = vld [vmem:[%s2 + $0x50] sm:$0xf]
  %v41 = vld [vmem:[%s2 + $0x54] sm:$0xf]
  %v42 = vld [vmem:[%s2 + $0x58] sm:$0xf]
  %v43 = vld [vmem:[%s2 + $0x5c] sm:$0xf]
  %v44 = vld [vmem:[%s2 + $0x60] sm:$0xf]
  %v45 = vld [vmem:[%s2 + $0x64] sm:$0xf]
  %v46 = vld [vmem:[%s2 + $0x68] sm:$0xf]
  %v47 = vld [vmem:[%s2 + $0x6c] sm:$0xf]
  %v48 = vld [vmem:[%s2 + $0x70] sm:$0xf]
  %v49 = vld [vmem:[%s2 + $0x74] sm:$0xf]
  %v50 = vld [vmem:[%s2 + $0x78] sm:$0xf]
  %v51 = vld [vmem:[%s2 + $0x7c] sm:$0xf]
  %v52 = vld [vmem:[%s2 + $0x80] sm:$0xf]
  %v53 = vld [vmem:[%s2 + $0x84] sm:$0xf]
  %v54 = vld [vmem:[%s2 + $0x88] sm:$0xf]
  %v55 = vld [vmem:[%s2 + $0x8c] sm:$0xf]
  %v56 = vld [vmem:[%s2 + $0x90] sm:$0xf]
  %v57 = vld [vmem:[%s2 + $0x94] sm:$0xf]
  %v58 = vld [vmem:[%s2 + $0x98] sm:$0xf]
  %v59 = vld [vmem:[%s2 + $0x9c] sm:$0xf]
  %v60 = vld [vmem:[%s2 + $0xa0] sm:$0xf]
  %v61 = vld [vmem:[%s2 + $0xa4] sm:$0xf]
  %v62 = vld [vmem:[%s2 + $0xa8] sm:$0xf]
  %v63 = vld [vmem:[%s2 + $0xac] sm:$0xf]
  %v64 = vld [vmem:[%s2 + $0xb0] sm:$0xf]
  %v65 = vld [vmem:[%s2 + $0xb4] sm:$0xf]
  %v66 = vld [vmem:[%s2 + $0xb8] sm:$0xf]
  %v67 = vld [vmem:[%s2 + $0xbc] sm:$0xf]
  %v68 = vld [vmem:[%s2 + $0xc0] sm:$0xf]
  %v69 = vld [vmem:[%s2 + $0xc4] sm:$0xf]
  %v70 = vld [vmem:[%s2 + $0xc8] sm:$0xf]
  %v71 = vld [vmem:[%s2 + $0xcc] sm:$0xf]
  %v72 = vld [vmem:[%s2 + $0xd0] sm:$0xf]
  %v73 = vld [vmem:[%s2 + $0xd4] sm:$0xf]
  %v74 = vld [vmem:[%s2 + $0xd8] sm:$0xf]
  %v75 = vld [vmem:[%s2 + $0xdc] sm:$0xf]
  %v76 = vld [vmem:[%s2 + $0xe0] sm:$0xf]
  %v77 = vld [vmem:[%s2 + $0xe4] sm:$0xf]
  %v78 = vld [vmem:[%s2 + $0xe8] sm:$0xf]
  %v79 = vld [vmem:[%s2 + $0xec] sm:$0xf]
  %v80 = vld [vmem:[%s2 + $0xf0] sm:$0xf]
  %v81 = vld [vmem:[%s2 + $0xf4] sm:$0xf]
  %v82 = vld [vmem:[%s2 + $0xf8] sm:$0xf]
  %v83 = vld [vmem:[%s2 + $0xfc] sm:$0xf]
  %v84 = vunpack.c.l.bf16 %v20
  %v85 = vunpack.c.l.bf16 %v21
  %v86 = vunpack.c.l.bf16 %v22
  %v87 = vunpack.c.l.bf16 %v23
  %v88 = vunpack.c.l.bf16 %v24
  %v89 = vunpack.c.l.bf16 %v25
  %v90 = vunpack.c.l.bf16 %v26
  %v91 = vunpack.c.l.bf16 %v27
  %v92 = vunpack.c.l.bf16 %v28
  %v93 = vunpack.c.l.bf16 %v29
  %v94 = vunpack.c.l.bf16 %v30
  %v95 = vunpack.c.l.bf16 %v31
  %v96 = vunpack.c.l.bf16 %v32
  %v97 = vunpack.c.l.bf16 %v33
  %v98 = vunpack.c.l.bf16 %v34
  %v99 = vunpack.c.l.bf16 %v35
  %v100 = vunpack.c.l.bf16 %v36
  %v101 = vunpack.c.l.bf16 %v37
  %v102 = vunpack.c.l.bf16 %v38
  %v103 = vunpack.c.l.bf16 %v39
  %v104 = vunpack.c.l.bf16 %v40
  %v105 = vunpack.c.l.bf16 %v41
  %v106 = vunpack.c.l.bf16 %v42
  %v107 = vunpack.c.l.bf16 %v43
  %v108 = vunpack.c.l.bf16 %v44
  %v109 = vunpack.c.l.bf16 %v45
  %v110 = vunpack.c.l.bf16 %v46
  %v111 = vunpack.c.l.bf16 %v47
  %v112 = vunpack.c.l.bf16 %v48
  %v113 = vunpack.c.l.bf16 %v49
  %v114 = vunpack.c.l.bf16 %v50
  %v115 = vunpack.c.l.bf16 %v51
  %v116 = vunpack.c.l.bf16 %v52
  %v117 = vunpack.c.l.bf16 %v53
  %v118 = vunpack.c.l.bf16 %v54
  %v119 = vunpack.c.l.bf16 %v55
  %v120 = vunpack.c.l.bf16 %v56
  %v121 = vunpack.c.l.bf16 %v57
  %v122 = vunpack.c.l.bf16 %v58
  %v123 = vunpack.c.l.bf16 %v59
  %v124 = vunpack.c.l.bf16 %v60
  %v125 = vunpack.c.l.bf16 %v61
  %v126 = vunpack.c.l.bf16 %v62
  %v127 = vunpack.c.l.bf16 %v63
  %v128 = vunpack.c.l.bf16 %v64
  %v129 = vunpack.c.l.bf16 %v65
  %v130 = vunpack.c.l.bf16 %v66
  %v131 = vunpack.c.l.bf16 %v67
  %v132 = vunpack.c.l.bf16 %v68
  %v133 = vunpack.c.l.bf16 %v69
  %v134 = vunpack.c.l.bf16 %v70
  %v135 = vunpack.c.l.bf16 %v71
  %v136 = vunpack.c.l.bf16 %v72
  %v137 = vunpack.c.l.bf16 %v73
  %v138 = vunpack.c.l.bf16 %v74
  %v139 = vunpack.c.l.bf16 %v75
  %v140 = vunpack.c.l.bf16 %v76
  %v141 = vunpack.c.l.bf16 %v77
  %v142 = vunpack.c.l.bf16 %v78
  %v143 = vunpack.c.l.bf16 %v79
  %v144 = vunpack.c.l.bf16 %v80
  %v145 = vunpack.c.l.bf16 %v81
  %v146 = vunpack.c.l.bf16 %v82
  %v147 = vunpack.c.l.bf16 %v83
  %v148 = vld [vmem:[%s0] sm:$0x1]
  %v150 = vlaneseq
  %v151 = vshrl.u32 %v150, 7
  %v152 = vsub.s32 0, %v151
  %v153 = vrot.slane %v148, %v152
  %v155 = vmul.f32 %v84, %v153
  %v156 = vmul.f32 %v85, %v153
  %v157 = vmul.f32 %v86, %v153
  %v158 = vmul.f32 %v87, %v153
  %v159 = vmul.f32 %v88, %v153
  %v160 = vmul.f32 %v89, %v153
  %v161 = vmul.f32 %v90, %v153
  %v162 = vmul.f32 %v91, %v153
  %v163 = vmul.f32 %v92, %v153
  %v164 = vmul.f32 %v93, %v153
  %v165 = vmul.f32 %v94, %v153
  %v166 = vmul.f32 %v95, %v153
  %v167 = vmul.f32 %v96, %v153
  %v168 = vmul.f32 %v97, %v153
  %v169 = vmul.f32 %v98, %v153
  %v170 = vmul.f32 %v99, %v153
  %v171 = vmul.f32 %v100, %v153
  %v172 = vmul.f32 %v101, %v153
  %v173 = vmul.f32 %v102, %v153
  %v174 = vmul.f32 %v103, %v153
  %v175 = vmul.f32 %v104, %v153
  %v176 = vmul.f32 %v105, %v153
  %v177 = vmul.f32 %v106, %v153
  %v178 = vmul.f32 %v107, %v153
  %v179 = vmul.f32 %v108, %v153
  %v180 = vmul.f32 %v109, %v153
  %v181 = vmul.f32 %v110, %v153
  %v182 = vmul.f32 %v111, %v153
  %v183 = vmul.f32 %v112, %v153
  %v184 = vmul.f32 %v113, %v153
  %v185 = vmul.f32 %v114, %v153
  %v186 = vmul.f32 %v115, %v153
  %v187 = vmul.f32 %v116, %v153
  %v188 = vmul.f32 %v117, %v153
  %v189 = vmul.f32 %v118, %v153
  %v190 = vmul.f32 %v119, %v153
  %v191 = vmul.f32 %v120, %v153
  %v192 = vmul.f32 %v121, %v153
  %v193 = vmul.f32 %v122, %v153
  %v194 = vmul.f32 %v123, %v153
  %v195 = vmul.f32 %v124, %v153
  %v196 = vmul.f32 %v125, %v153
  %v197 = vmul.f32 %v126, %v153
  %v198 = vmul.f32 %v127, %v153
  %v199 = vmul.f32 %v128, %v153
  %v200 = vmul.f32 %v129, %v153
  %v201 = vmul.f32 %v130, %v153
  %v202 = vmul.f32 %v131, %v153
  %v203 = vmul.f32 %v132, %v153
  %v204 = vmul.f32 %v133, %v153
  %v205 = vmul.f32 %v134, %v153
  %v206 = vmul.f32 %v135, %v153
  %v207 = vmul.f32 %v136, %v153
  %v208 = vmul.f32 %v137, %v153
  %v209 = vmul.f32 %v138, %v153
  %v210 = vmul.f32 %v139, %v153
  %v211 = vmul.f32 %v140, %v153
  %v212 = vmul.f32 %v141, %v153
  %v213 = vmul.f32 %v142, %v153
  %v214 = vmul.f32 %v143, %v153
  %v215 = vmul.f32 %v144, %v153
  %v216 = vmul.f32 %v145, %v153
  %v217 = vmul.f32 %v146, %v153
  %v218 = vmul.f32 %v147, %v153
  %v219 = vld [vmem:[%s1] sm:$0x1]
  %v221 = vlaneseq
  %v222 = vshrl.u32 %v221, 7
  %v223 = vsub.s32 0, %v222
  %v224 = vrot.slane %v219, %v223
  %v226 = vadd.f32 %v155, %v224
  %v227 = vadd.f32 %v156, %v224
  %v228 = vadd.f32 %v157, %v224
  %v229 = vadd.f32 %v158, %v224
  %v230 = vadd.f32 %v159, %v224
  %v231 = vadd.f32 %v160, %v224
  %v232 = vadd.f32 %v161, %v224
  %v233 = vadd.f32 %v162, %v224
  %v234 = vadd.f32 %v163, %v224
  %v235 = vadd.f32 %v164, %v224
  %v236 = vadd.f32 %v165, %v224
  %v237 = vadd.f32 %v166, %v224
  %v238 = vadd.f32 %v167, %v224
  %v239 = vadd.f32 %v168, %v224
  %v240 = vadd.f32 %v169, %v224
  %v241 = vadd.f32 %v170, %v224
  %v242 = vadd.f32 %v171, %v224
  %v243 = vadd.f32 %v172, %v224
  %v244 = vadd.f32 %v173, %v224
  %v245 = vadd.f32 %v174, %v224
  %v246 = vadd.f32 %v175, %v224
  %v247 = vadd.f32 %v176, %v224
  %v248 = vadd.f32 %v177, %v224
  %v249 = vadd.f32 %v178, %v224
  %v250 = vadd.f32 %v179, %v224
  %v251 = vadd.f32 %v180, %v224
  %v252 = vadd.f32 %v181, %v224
  %v253 = vadd.f32 %v182, %v224
  %v254 = vadd.f32 %v183, %v224
  %v255 = vadd.f32 %v184, %v224
  %v256 = vadd.f32 %v185, %v224
  %v257 = vadd.f32 %v186, %v224
  %v258 = vadd.f32 %v187, %v224
  %v259 = vadd.f32 %v188, %v224
  %v260 = vadd.f32 %v189, %v224
  %v261 = vadd.f32 %v190, %v224
  %v262 = vadd.f32 %v191, %v224
  %v263 = vadd.f32 %v192, %v224
  %v264 = vadd.f32 %v193, %v224
  %v265 = vadd.f32 %v194, %v224
  %v266 = vadd.f32 %v195, %v224
  %v267 = vadd.f32 %v196, %v224
  %v268 = vadd.f32 %v197, %v224
  %v269 = vadd.f32 %v198, %v224
  %v270 = vadd.f32 %v199, %v224
  %v271 = vadd.f32 %v200, %v224
  %v272 = vadd.f32 %v201, %v224
  %v273 = vadd.f32 %v202, %v224
  %v274 = vadd.f32 %v203, %v224
  %v275 = vadd.f32 %v204, %v224
  %v276 = vadd.f32 %v205, %v224
  %v277 = vadd.f32 %v206, %v224
  %v278 = vadd.f32 %v207, %v224
  %v279 = vadd.f32 %v208, %v224
  %v280 = vadd.f32 %v209, %v224
  %v281 = vadd.f32 %v210, %v224
  %v282 = vadd.f32 %v211, %v224
  %v283 = vadd.f32 %v212, %v224
  %v284 = vadd.f32 %v213, %v224
  %v285 = vadd.f32 %v214, %v224
  %v286 = vadd.f32 %v215, %v224
  %v287 = vadd.f32 %v216, %v224
  %v288 = vadd.f32 %v217, %v224
  %v289 = vadd.f32 %v218, %v224
  %v290 = vmax.f32 %v226, 0.0
  %v291 = vmax.f32 %v227, 0.0
  %v292 = vmax.f32 %v228, 0.0
  %v293 = vmax.f32 %v229, 0.0
  %v294 = vmax.f32 %v230, 0.0
  %v295 = vmax.f32 %v231, 0.0
  %v296 = vmax.f32 %v232, 0.0
  %v297 = vmax.f32 %v233, 0.0
  %v298 = vmax.f32 %v234, 0.0
  %v299 = vmax.f32 %v235, 0.0
  %v300 = vmax.f32 %v236, 0.0
  %v301 = vmax.f32 %v237, 0.0
  %v302 = vmax.f32 %v238, 0.0
  %v303 = vmax.f32 %v239, 0.0
  %v304 = vmax.f32 %v240, 0.0
  %v305 = vmax.f32 %v241, 0.0
  %v306 = vmax.f32 %v242, 0.0
  %v307 = vmax.f32 %v243, 0.0
  %v308 = vmax.f32 %v244, 0.0
  %v309 = vmax.f32 %v245, 0.0
  %v310 = vmax.f32 %v246, 0.0
  %v311 = vmax.f32 %v247, 0.0
  %v312 = vmax.f32 %v248, 0.0
  %v313 = vmax.f32 %v249, 0.0
  %v314 = vmax.f32 %v250, 0.0
  %v315 = vmax.f32 %v251, 0.0
  %v316 = vmax.f32 %v252, 0.0
  %v317 = vmax.f32 %v253, 0.0
  %v318 = vmax.f32 %v254, 0.0
  %v319 = vmax.f32 %v255, 0.0
  %v320 = vmax.f32 %v256, 0.0
  %v321 = vmax.f32 %v257, 0.0
  %v322 = vmax.f32 %v258, 0.0
  %v323 = vmax.f32 %v259, 0.0
  %v324 = vmax.f32 %v260, 0.0
  %v325 = vmax.f32 %v261, 0.0
  %v326 = vmax.f32 %v262, 0.0
  %v327 = vmax.f32 %v263, 0.0
  %v328 = vmax.f32 %v264, 0.0
  %v329 = vmax.f32 %v265, 0.0
  %v330 = vmax.f32 %v266, 0.0
  %v331 = vmax.f32 %v267, 0.0
  %v332 = vmax.f32 %v268, 0.0
  %v333 = vmax.f32 %v269, 0.0
  %v334 = vmax.f32 %v270, 0.0
  %v335 = vmax.f32 %v271, 0.0
  %v336 = vmax.f32 %v272, 0.0
  %v337 = vmax.f32 %v273, 0.0
  %v338 = vmax.f32 %v274, 0.0
  %v339 = vmax.f32 %v275, 0.0
  %v340 = vmax.f32 %v276, 0.0
  %v341 = vmax.f32 %v277, 0.0
  %v342 = vmax.f32 %v278, 0.0
  %v343 = vmax.f32 %v279, 0.0
  %v344 = vmax.f32 %v280, 0.0
  %v345 = vmax.f32 %v281, 0.0
  %v346 = vmax.f32 %v282, 0.0
  %v347 = vmax.f32 %v283, 0.0
  %v348 = vmax.f32 %v284, 0.0
  %v349 = vmax.f32 %v285, 0.0
  %v350 = vmax.f32 %v286, 0.0
  %v351 = vmax.f32 %v287, 0.0
  %v352 = vmax.f32 %v288, 0.0
  %v353 = vmax.f32 %v289, 0.0
  %v354 = vpack.c.bf16 %v291, %v290
  %v355 = vpack.c.bf16 %v293, %v292
  %v356 = vpack.c.bf16 %v295, %v294
  %v357 = vpack.c.bf16 %v297, %v296
  %v358 = vpack.c.bf16 %v299, %v298
  %v359 = vpack.c.bf16 %v301, %v300
  %v360 = vpack.c.bf16 %v303, %v302
  %v361 = vpack.c.bf16 %v305, %v304
  %v362 = vpack.c.bf16 %v307, %v306
  %v363 = vpack.c.bf16 %v309, %v308
  %v364 = vpack.c.bf16 %v311, %v310
  %v365 = vpack.c.bf16 %v313, %v312
  %v366 = vpack.c.bf16 %v315, %v314
  %v367 = vpack.c.bf16 %v317, %v316
  %v368 = vpack.c.bf16 %v319, %v318
  %v369 = vpack.c.bf16 %v321, %v320
  %v370 = vpack.c.bf16 %v323, %v322
  %v371 = vpack.c.bf16 %v325, %v324
  %v372 = vpack.c.bf16 %v327, %v326
  %v373 = vpack.c.bf16 %v329, %v328
  %v374 = vpack.c.bf16 %v331, %v330
  %v375 = vpack.c.bf16 %v333, %v332
  %v376 = vpack.c.bf16 %v335, %v334
  %v377 = vpack.c.bf16 %v337, %v336
  %v378 = vpack.c.bf16 %v339, %v338
  %v379 = vpack.c.bf16 %v341, %v340
  %v380 = vpack.c.bf16 %v343, %v342
  %v381 = vpack.c.bf16 %v345, %v344
  %v382 = vpack.c.bf16 %v347, %v346
  %v383 = vpack.c.bf16 %v349, %v348
  %v384 = vpack.c.bf16 %v351, %v350
  %v385 = vpack.c.bf16 %v353, %v352
  %v386 = vld [vmem:[%s3] sm:$0x3]
  %vm387 = vcmask 31744
  %v389 = vsel %vm387, %v354, 0
  %v392 = vsel %vm387, %v355, 0
  %v395 = vsel %vm387, %v356, 0
  %v398 = vsel %vm387, %v357, 0
  %v401 = vsel %vm387, %v358, 0
  %v404 = vsel %vm387, %v359, 0
  %v407 = vsel %vm387, %v360, 0
  %v410 = vsel %vm387, %v361, 0
  %v413 = vsel %vm387, %v362, 0
  %v416 = vsel %vm387, %v363, 0
  %v419 = vsel %vm387, %v364, 0
  %v422 = vsel %vm387, %v365, 0
  %v425 = vsel %vm387, %v366, 0
  %v428 = vsel %vm387, %v367, 0
  %v431 = vsel %vm387, %v368, 0
  %v434 = vsel %vm387, %v369, 0
  %v437 = vsel %vm387, %v370, 0
  %v440 = vsel %vm387, %v371, 0
  %v443 = vsel %vm387, %v372, 0
  %v446 = vsel %vm387, %v373, 0
  %v449 = vsel %vm387, %v374, 0
  %v452 = vsel %vm387, %v375, 0
  %v455 = vsel %vm387, %v376, 0
  %v458 = vsel %vm387, %v377, 0
  %v461 = vsel %vm387, %v378, 0
  %v464 = vsel %vm387, %v379, 0
  %v467 = vsel %vm387, %v380, 0
  %v470 = vsel %vm387, %v381, 0
  %v473 = vsel %vm387, %v382, 0
  %v476 = vsel %vm387, %v383, 0
  %v479 = vsel %vm387, %v384, 0
  %v482 = vsel %vm387, %v385, 0
  %vm484 = vcmask 1041408
  %v486 = vsel %vm484, %v386, 0
  %488 = vmatprep.subr.bf16.mxu0 0
  %489 = vmatpush1.bf16.msra.mxu0 %v486
  %490 = vmatprep.subr.bf16.mxu0 0
  %491 = vmatpush1.bf16.msra.mxu0 0
  %492 = vmatprep.subr.bf16.mxu0 0
  %493 = vmatpush1.bf16.msra.mxu0 0
  %494 = vmatprep.subr.bf16.mxu0 0
  %495 = vmatpush1.bf16.msra.mxu0 0
  %496 = vmatprep.subr.bf16.mxu0 0
  %497 = vmatpush1.bf16.msra.mxu0 0
  %498 = vmatprep.subr.bf16.mxu0 0
  %499 = vmatpush1.bf16.msra.mxu0 0
  %500 = vmatprep.subr.bf16.mxu0 0
  %501 = vmatpush1.bf16.msra.mxu0 0
  %502 = vmatprep.subr.bf16.mxu0 0
  %503 = vmatpush1.bf16.msra.mxu0 0
  %504 = vmatprep.subr.bf16.mxu0 0
  %505 = vmatpush1.bf16.msra.mxu0 0
  %506 = vmatprep.subr.bf16.mxu0 0
  %507 = vmatpush1.bf16.msra.mxu0 0
  %508 = vmatprep.subr.bf16.mxu0 0
  %509 = vmatpush1.bf16.msra.mxu0 0
  %510 = vmatprep.subr.bf16.mxu0 0
  %511 = vmatpush1.bf16.msra.mxu0 0
  %512 = vmatprep.subr.bf16.mxu0 0
  %513 = vmatpush1.bf16.msra.mxu0 0
  %514 = vmatprep.subr.bf16.mxu0 0
  %515 = vmatpush1.bf16.msra.mxu0 0
  %516 = vmatprep.subr.bf16.mxu0 0
  %517 = vmatpush1.bf16.msra.mxu0 0
  %518 = vmatprep.subr.bf16.mxu0 0
  %519 = vmatpush1.bf16.msra.mxu0 0
  %520 = vmatprep.mubr.bf16.mxu0 0
  %521 = vmatmul.mubr.bf16.gmra.mrb[0].mxu0 %v389
  %v522 = vpop.f32.mrb[0].mxu0
  %v523 = vadd.f32 0.0, %v522
  %v524 = vpop.f32.mrb[0].mxu0
  %v525 = vpop.f32.mrb[0].mxu0
  %v526 = vadd.f32 0.0, %v525
  %v527 = vpop.f32.mrb[0].mxu0
  %528 = vmatprep.mubr.bf16.mxu0 0
  %529 = vmatmul.mubr.bf16.gmra.mrb[0].mxu0 %v392
  %v530 = vpop.f32.mrb[0].mxu0
  %v531 = vadd.f32 0.0, %v530
  %v532 = vpop.f32.mrb[0].mxu0
  %v533 = vpop.f32.mrb[0].mxu0
  %v534 = vadd.f32 0.0, %v533
  %v535 = vpop.f32.mrb[0].mxu0
  %536 = vmatprep.mubr.bf16.mxu0 0
  %537 = vmatmul.mubr.bf16.gmra.mrb[0].mxu0 %v395
  %v538 = vpop.f32.mrb[0].mxu0
  %v539 = vadd.f32 0.0, %v538
  %v540 = vpop.f32.mrb[0].mxu0
  %v541 = vpop.f32.mrb[0].mxu0
  %v542 = vadd.f32 0.0, %v541
  %v543 = vpop.f32.mrb[0].mxu0
  %544 = vmatprep.mubr.bf16.mxu0 0
  %545 = vmatmul.mubr.bf16.gmra.mrb[0].mxu0 %v398
  %v546 = vpop.f32.mrb[0].mxu0
  %v547 = vadd.f32 0.0, %v546
  %v548 = vpop.f32.mrb[0].mxu0
  %v549 = vpop.f32.mrb[0].mxu0
  %v550 = vadd.f32 0.0, %v549
  %v551 = vpop.f32.mrb[0].mxu0
  %552 = vmatprep.mubr.bf16.mxu0 0
  %553 = vmatmul.mubr.bf16.gmra.mrb[0].mxu0 %v401
  %v554 = vpop.f32.mrb[0].mxu0
  %v555 = vadd.f32 0.0, %v554
  %v556 = vpop.f32.mrb[0].mxu0
  %v557 = vpop.f32.mrb[0].mxu0
  %v558 = vadd.f32 0.0, %v557
  %v559 = vpop.f32.mrb[0].mxu0
  %560 = vmatprep.mubr.bf16.mxu0 0
  %561 = vmatmul.mubr.bf16.gmra.mrb[0].mxu0 %v404
  %v562 = vpop.f32.mrb[0].mxu0
  %v563 = vadd.f32 0.0, %v562
  %v564 = vpop.f32.mrb[0].mxu0
  %v565 = vpop.f32.mrb[0].mxu0
  %v566 = vadd.f32 0.0, %v565
  %v567 = vpop.f32.mrb[0].mxu0
  %568 = vmatprep.mubr.bf16.mxu0 0
  %569 = vmatmul.mubr.bf16.gmra.mrb[0].mxu0 %v407
  %v570 = vpop.f32.mrb[0].mxu0
  %v571 = vadd.f32 0.0, %v570
  %v572 = vpop.f32.mrb[0].mxu0
  %v573 = vpop.f32.mrb[0].mxu0
  %v574 = vadd.f32 0.0, %v573
  %v575 = vpop.f32.mrb[0].mxu0
  %576 = vmatprep.mubr.bf16.mxu0 0
  %577 = vmatmul.mubr.bf16.gmra.mrb[0].mxu0 %v410
  %v578 = vpop.f32.mrb[0].mxu0
  %v579 = vadd.f32 0.0, %v578
  %v580 = vpop.f32.mrb[0].mxu0
  %v581 = vpop.f32.mrb[0].mxu0
  %v582 = vadd.f32 0.0, %v581
  %v583 = vpop.f32.mrb[0].mxu0
  %584 = vmatprep.mubr.bf16.mxu0 0
  %585 = vmatmul.mubr.bf16.gmra.mrb[0].mxu0 %v413
  %v586 = vpop.f32.mrb[0].mxu0
  %v587 = vadd.f32 0.0, %v586
  %v588 = vpop.f32.mrb[0].mxu0
  %v589 = vpop.f32.mrb[0].mxu0
  %v590 = vadd.f32 0.0, %v589
  %v591 = vpop.f32.mrb[0].mxu0
  %592 = vmatprep.mubr.bf16.mxu0 0
  %593 = vmatmul.mubr.bf16.gmra.mrb[0].mxu0 %v416
  %v594 = vpop.f32.mrb[0].mxu0
  %v595 = vadd.f32 0.0, %v594
  %v596 = vpop.f32.mrb[0].mxu0
  %v597 = vpop.f32.mrb[0].mxu0
  %v598 = vadd.f32 0.0, %v597
  %v599 = vpop.f32.mrb[0].mxu0
  %600 = vmatprep.mubr.bf16.mxu0 0
  %601 = vmatmul.mubr.bf16.gmra.mrb[0].mxu0 %v419
  %v602 = vpop.f32.mrb[0].mxu0
  %v603 = vadd.f32 0.0, %v602
  %v604 = vpop.f32.mrb[0].mxu0
  %v605 = vpop.f32.mrb[0].mxu0
  %v606 = vadd.f32 0.0, %v605
  %v607 = vpop.f32.mrb[0].mxu0
  %608 = vmatprep.mubr.bf16.mxu0 0
  %609 = vmatmul.mubr.bf16.gmra.mrb[0].mxu0 %v422
  %v610 = vpop.f32.mrb[0].mxu0
  %v611 = vadd.f32 0.0, %v610
  %v612 = vpop.f32.mrb[0].mxu0
  %v613 = vpop.f32.mrb[0].mxu0
  %v614 = vadd.f32 0.0, %v613
  %v615 = vpop.f32.mrb[0].mxu0
  %616 = vmatprep.mubr.bf16.mxu0 0
  %617 = vmatmul.mubr.bf16.gmra.mrb[0].mxu0 %v425
  %v618 = vpop.f32.mrb[0].mxu0
  %v619 = vadd.f32 0.0, %v618
  %v620 = vpop.f32.mrb[0].mxu0
  %v621 = vpop.f32.mrb[0].mxu0
  %v622 = vadd.f32 0.0, %v621
  %v623 = vpop.f32.mrb[0].mxu0
  %624 = vmatprep.mubr.bf16.mxu0 0
  %625 = vmatmul.mubr.bf16.gmra.mrb[0].mxu0 %v428
  %v626 = vpop.f32.mrb[0].mxu0
  %v627 = vadd.f32 0.0, %v626
  %v628 = vpop.f32.mrb[0].mxu0
  %v629 = vpop.f32.mrb[0].mxu0
  %v630 = vadd.f32 0.0, %v629
  %v631 = vpop.f32.mrb[0].mxu0
  %632 = vmatprep.mubr.bf16.mxu0 0
  %633 = vmatmul.mubr.bf16.gmra.mrb[0].mxu0 %v431
  %v634 = vpop.f32.mrb[0].mxu0
  %v635 = vadd.f32 0.0, %v634
  %v636 = vpop.f32.mrb[0].mxu0
  %v637 = vpop.f32.mrb[0].mxu0
  %v638 = vadd.f32 0.0, %v637
  %v639 = vpop.f32.mrb[0].mxu0
  %640 = vmatprep.mubr.bf16.mxu0 0
  %641 = vmatmul.mubr.bf16.gmra.mrb[0].mxu0 %v434
  %v642 = vpop.f32.mrb[0].mxu0
  %v643 = vadd.f32 0.0, %v642
  %v644 = vpop.f32.mrb[0].mxu0
  %v645 = vpop.f32.mrb[0].mxu0
  %v646 = vadd.f32 0.0, %v645
  %v647 = vpop.f32.mrb[0].mxu0
  %648 = vmatprep.mubr.bf16.mxu0 0
  %649 = vmatmul.mubr.bf16.gmra.mrb[0].mxu0 %v437
  %v650 = vpop.f32.mrb[0].mxu0
  %v651 = vadd.f32 0.0, %v650
  %v652 = vpop.f32.mrb[0].mxu0
  %v653 = vpop.f32.mrb[0].mxu0
  %v654 = vadd.f32 0.0, %v653
  %v655 = vpop.f32.mrb[0].mxu0
  %656 = vmatprep.mubr.bf16.mxu0 0
  %657 = vmatmul.mubr.bf16.gmra.mrb[0].mxu0 %v440
  %v658 = vpop.f32.mrb[0].mxu0
  %v659 = vadd.f32 0.0, %v658
  %v660 = vpop.f32.mrb[0].mxu0
  %v661 = vpop.f32.mrb[0].mxu0
  %v662 = vadd.f32 0.0, %v661
  %v663 = vpop.f32.mrb[0].mxu0
  %664 = vmatprep.mubr.bf16.mxu0 0
  %665 = vmatmul.mubr.bf16.gmra.mrb[0].mxu0 %v443
  %v666 = vpop.f32.mrb[0].mxu0
  %v667 = vadd.f32 0.0, %v666
  %v668 = vpop.f32.mrb[0].mxu0
  %v669 = vpop.f32.mrb[0].mxu0
  %v670 = vadd.f32 0.0, %v669
  %v671 = vpop.f32.mrb[0].mxu0
  %672 = vmatprep.mubr.bf16.mxu0 0
  %673 = vmatmul.mubr.bf16.gmra.mrb[0].mxu0 %v446
  %v674 = vpop.f32.mrb[0].mxu0
  %v675 = vadd.f32 0.0, %v674
  %v676 = vpop.f32.mrb[0].mxu0
  %v677 = vpop.f32.mrb[0].mxu0
  %v678 = vadd.f32 0.0, %v677
  %v679 = vpop.f32.mrb[0].mxu0
  %680 = vmatprep.mubr.bf16.mxu0 0
  %681 = vmatmul.mubr.bf16.gmra.mrb[0].mxu0 %v449
  %v682 = vpop.f32.mrb[0].mxu0
  %v683 = vadd.f32 0.0, %v682
  %v684 = vpop.f32.mrb[0].mxu0
  %v685 = vpop.f32.mrb[0].mxu0
  %v686 = vadd.f32 0.0, %v685
  %v687 = vpop.f32.mrb[0].mxu0
  %688 = vmatprep.mubr.bf16.mxu0 0
  %689 = vmatmul.mubr.bf16.gmra.mrb[0].mxu0 %v452
  %v690 = vpop.f32.mrb[0].mxu0
  %v691 = vadd.f32 0.0, %v690
  %v692 = vpop.f32.mrb[0].mxu0
  %v693 = vpop.f32.mrb[0].mxu0
  %v694 = vadd.f32 0.0, %v693
  %v695 = vpop.f32.mrb[0].mxu0
  %696 = vmatprep.mubr.bf16.mxu0 0
  %697 = vmatmul.mubr.bf16.gmra.mrb[0].mxu0 %v455
  %v698 = vpop.f32.mrb[0].mxu0
  %v699 = vadd.f32 0.0, %v698
  %v700 = vpop.f32.mrb[0].mxu0
  %v701 = vpop.f32.mrb[0].mxu0
  %v702 = vadd.f32 0.0, %v701
  %v703 = vpop.f32.mrb[0].mxu0
  %704 = vmatprep.mubr.bf16.mxu0 0
  %705 = vmatmul.mubr.bf16.gmra.mrb[0].mxu0 %v458
  %v706 = vpop.f32.mrb[0].mxu0
  %v707 = vadd.f32 0.0, %v706
  %v708 = vpop.f32.mrb[0].mxu0
  %v709 = vpop.f32.mrb[0].mxu0
  %v710 = vadd.f32 0.0, %v709
  %v711 = vpop.f32.mrb[0].mxu0
  %712 = vmatprep.mubr.bf16.mxu0 0
  %713 = vmatmul.mubr.bf16.gmra.mrb[0].mxu0 %v461
  %v714 = vpop.f32.mrb[0].mxu0
  %v715 = vadd.f32 0.0, %v714
  %v716 = vpop.f32.mrb[0].mxu0
  %v717 = vpop.f32.mrb[0].mxu0
  %v718 = vadd.f32 0.0, %v717
  %v719 = vpop.f32.mrb[0].mxu0
  %720 = vmatprep.mubr.bf16.mxu0 0
  %721 = vmatmul.mubr.bf16.gmra.mrb[0].mxu0 %v464
  %v722 = vpop.f32.mrb[0].mxu0
  %v723 = vadd.f32 0.0, %v722
  %v724 = vpop.f32.mrb[0].mxu0
  %v725 = vpop.f32.mrb[0].mxu0
  %v726 = vadd.f32 0.0, %v725
  %v727 = vpop.f32.mrb[0].mxu0
  %728 = vmatprep.mubr.bf16.mxu0 0
  %729 = vmatmul.mubr.bf16.gmra.mrb[0].mxu0 %v467
  %v730 = vpop.f32.mrb[0].mxu0
  %v731 = vadd.f32 0.0, %v730
  %v732 = vpop.f32.mrb[0].mxu0
  %v733 = vpop.f32.mrb[0].mxu0
  %v734 = vadd.f32 0.0, %v733
  %v735 = vpop.f32.mrb[0].mxu0
  %736 = vmatprep.mubr.bf16.mxu0 0
  %737 = vmatmul.mubr.bf16.gmra.mrb[0].mxu0 %v470
  %v738 = vpop.f32.mrb[0].mxu0
  %v739 = vadd.f32 0.0, %v738
  %v740 = vpop.f32.mrb[0].mxu0
  %v741 = vpop.f32.mrb[0].mxu0
  %v742 = vadd.f32 0.0, %v741
  %v743 = vpop.f32.mrb[0].mxu0
  %744 = vmatprep.mubr.bf16.mxu0 0
  %745 = vmatmul.mubr.bf16.gmra.mrb[0].mxu0 %v473
  %v746 = vpop.f32.mrb[0].mxu0
  %v747 = vadd.f32 0.0, %v746
  %v748 = vpop.f32.mrb[0].mxu0
  %v749 = vpop.f32.mrb[0].mxu0
  %v750 = vadd.f32 0.0, %v749
  %v751 = vpop.f32.mrb[0].mxu0
  %752 = vmatprep.mubr.bf16.mxu0 0
  %753 = vmatmul.mubr.bf16.gmra.mrb[0].mxu0 %v476
  %v754 = vpop.f32.mrb[0].mxu0
  %v755 = vadd.f32 0.0, %v754
  %v756 = vpop.f32.mrb[0].mxu0
  %v757 = vpop.f32.mrb[0].mxu0
  %v758 = vadd.f32 0.0, %v757
  %v759 = vpop.f32.mrb[0].mxu0
  %760 = vmatprep.mubr.bf16.mxu0 0
  %761 = vmatmul.mubr.bf16.gmra.mrb[0].mxu0 %v479
  %v762 = vpop.f32.mrb[0].mxu0
  %v763 = vadd.f32 0.0, %v762
  %v764 = vpop.f32.mrb[0].mxu0
  %v765 = vpop.f32.mrb[0].mxu0
  %v766 = vadd.f32 0.0, %v765
  %v767 = vpop.f32.mrb[0].mxu0
  %768 = vmatprep.mubr.bf16.mxu0 0
  %769 = vmatmul.mubr.bf16.gmra.mrb[0].mxu0 %v482
  %v770 = vpop.f32.mrb[0].mxu0
  %v771 = vadd.f32 0.0, %v770
  %v772 = vpop.f32.mrb[0].mxu0
  %v773 = vpop.f32.mrb[0].mxu0
  %v774 = vadd.f32 0.0, %v773
  %v775 = vpop.f32.mrb[0].mxu0
  %776 = vdwg.mxu0
  %v777 = vpack.c.bf16 %v526, %v523
  %v778 = vpack.c.bf16 %v534, %v531
  %v779 = vpack.c.bf16 %v542, %v539
  %v780 = vpack.c.bf16 %v550, %v547
  %v781 = vpack.c.bf16 %v558, %v555
  %v782 = vpack.c.bf16 %v566, %v563
  %v783 = vpack.c.bf16 %v574, %v571
  %v784 = vpack.c.bf16 %v582, %v579
  %v785 = vpack.c.bf16 %v590, %v587
  %v786 = vpack.c.bf16 %v598, %v595
  %v787 = vpack.c.bf16 %v606, %v603
  %v788 = vpack.c.bf16 %v614, %v611
  %v789 = vpack.c.bf16 %v622, %v619
  %v790 = vpack.c.bf16 %v630, %v627
  %v791 = vpack.c.bf16 %v638, %v635
  %v792 = vpack.c.bf16 %v646, %v643
  %v793 = vpack.c.bf16 %v654, %v651
  %v794 = vpack.c.bf16 %v662, %v659
  %v795 = vpack.c.bf16 %v670, %v667
  %v796 = vpack.c.bf16 %v678, %v675
  %v797 = vpack.c.bf16 %v686, %v683
  %v798 = vpack.c.bf16 %v694, %v691
  %v799 = vpack.c.bf16 %v702, %v699
  %v800 = vpack.c.bf16 %v710, %v707
  %v801 = vpack.c.bf16 %v718, %v715
  %v802 = vpack.c.bf16 %v726, %v723
  %v803 = vpack.c.bf16 %v734, %v731
  %v804 = vpack.c.bf16 %v742, %v739
  %v805 = vpack.c.bf16 %v750, %v747
  %v806 = vpack.c.bf16 %v758, %v755
  %v807 = vpack.c.bf16 %v766, %v763
  %v808 = vpack.c.bf16 %v774, %v771
  %v841 = vunpack.c.l.b16 %v777
  %v842 = vunpack.c.h.b16 %v777
  %v843 = vunpack.c.l.b16 %v778
  %v844 = vunpack.c.h.b16 %v778
  %v845 = vunpack.c.l.b16 %v779
  %v846 = vunpack.c.h.b16 %v779
  %v847 = vunpack.c.l.b16 %v780
  %v848 = vunpack.c.h.b16 %v780
  %v849 = vunpack.c.l.b16 %v781
  %v850 = vunpack.c.h.b16 %v781
  %v851 = vunpack.c.l.b16 %v782
  %v852 = vunpack.c.h.b16 %v782
  %v853 = vunpack.c.l.b16 %v783
  %v854 = vunpack.c.h.b16 %v783
  %v855 = vunpack.c.l.b16 %v784
  %v856 = vunpack.c.h.b16 %v784
  %v857 = vunpack.c.l.b16 %v785
  %v858 = vunpack.c.h.b16 %v785
  %v859 = vunpack.c.l.b16 %v786
  %v860 = vunpack.c.h.b16 %v786
  %v861 = vunpack.c.l.b16 %v787
  %v862 = vunpack.c.h.b16 %v787
  %v863 = vunpack.c.l.b16 %v788
  %v864 = vunpack.c.h.b16 %v788
  %v865 = vunpack.c.l.b16 %v789
  %v866 = vunpack.c.h.b16 %v789
  %v867 = vunpack.c.l.b16 %v790
  %v868 = vunpack.c.h.b16 %v790
  %v869 = vunpack.c.l.b16 %v791
  %v870 = vunpack.c.h.b16 %v791
  %v871 = vunpack.c.l.b16 %v792
  %v872 = vunpack.c.h.b16 %v792
  %v873 = vunpack.c.l.b16 %v793
  %v874 = vunpack.c.h.b16 %v793
  %v875 = vunpack.c.l.b16 %v794
  %v876 = vunpack.c.h.b16 %v794
  %v877 = vunpack.c.l.b16 %v795
  %v878 = vunpack.c.h.b16 %v795
  %v879 = vunpack.c.l.b16 %v796
  %v880 = vunpack.c.h.b16 %v796
  %v881 = vunpack.c.l.b16 %v797
  %v882 = vunpack.c.h.b16 %v797
  %v883 = vunpack.c.l.b16 %v798
  %v884 = vunpack.c.h.b16 %v798
  %v885 = vunpack.c.l.b16 %v799
  %v886 = vunpack.c.h.b16 %v799
  %v887 = vunpack.c.l.b16 %v800
  %v888 = vunpack.c.h.b16 %v800
  %v889 = vunpack.c.l.b16 %v801
  %v890 = vunpack.c.h.b16 %v801
  %v891 = vunpack.c.l.b16 %v802
  %v892 = vunpack.c.h.b16 %v802
  %v893 = vunpack.c.l.b16 %v803
  %v894 = vunpack.c.h.b16 %v803
  %v895 = vunpack.c.l.b16 %v804
  %v896 = vunpack.c.h.b16 %v804
  %v897 = vunpack.c.l.b16 %v805
  %v898 = vunpack.c.h.b16 %v805
  %v899 = vunpack.c.l.b16 %v806
  %v900 = vunpack.c.h.b16 %v806
  %v901 = vunpack.c.l.b16 %v807
  %v902 = vunpack.c.h.b16 %v807
  %v903 = vunpack.c.l.b16 %v808
  %v904 = vunpack.c.h.b16 %v808
  %v905 = vpack.c.b16 %v841, %v841
  %v906 = vpack.c.b16 %v842, %v842
  %v907 = vpack.c.b16 %v843, %v843
  %v908 = vpack.c.b16 %v844, %v844
  %v909 = vpack.c.b16 %v845, %v845
  %v910 = vpack.c.b16 %v846, %v846
  %v911 = vpack.c.b16 %v847, %v847
  %v912 = vpack.c.b16 %v848, %v848
  %v913 = vpack.c.b16 %v849, %v849
  %v914 = vpack.c.b16 %v850, %v850
  %v915 = vpack.c.b16 %v851, %v851
  %v916 = vpack.c.b16 %v852, %v852
  %v917 = vpack.c.b16 %v853, %v853
  %v918 = vpack.c.b16 %v854, %v854
  %v919 = vpack.c.b16 %v855, %v855
  %v920 = vpack.c.b16 %v856, %v856
  %v921 = vpack.c.b16 %v857, %v857
  %v922 = vpack.c.b16 %v858, %v858
  %v923 = vpack.c.b16 %v859, %v859
  %v924 = vpack.c.b16 %v860, %v860
  %v925 = vpack.c.b16 %v861, %v861
  %v926 = vpack.c.b16 %v862, %v862
  %v927 = vpack.c.b16 %v863, %v863
  %v928 = vpack.c.b16 %v864, %v864
  %v929 = vpack.c.b16 %v865, %v865
  %v930 = vpack.c.b16 %v866, %v866
  %v931 = vpack.c.b16 %v867, %v867
  %v932 = vpack.c.b16 %v868, %v868
  %v933 = vpack.c.b16 %v869, %v869
  %v934 = vpack.c.b16 %v870, %v870
  %v935 = vpack.c.b16 %v871, %v871
  %v936 = vpack.c.b16 %v872, %v872
  %v937 = vpack.c.b16 %v873, %v873
  %v938 = vpack.c.b16 %v874, %v874
  %v939 = vpack.c.b16 %v875, %v875
  %v940 = vpack.c.b16 %v876, %v876
  %v941 = vpack.c.b16 %v877, %v877
  %v942 = vpack.c.b16 %v878, %v878
  %v943 = vpack.c.b16 %v879, %v879
  %v944 = vpack.c.b16 %v880, %v880
  %v945 = vpack.c.b16 %v881, %v881
  %v946 = vpack.c.b16 %v882, %v882
  %v947 = vpack.c.b16 %v883, %v883
  %v948 = vpack.c.b16 %v884, %v884
  %v949 = vpack.c.b16 %v885, %v885
  %v950 = vpack.c.b16 %v886, %v886
  %v951 = vpack.c.b16 %v887, %v887
  %v952 = vpack.c.b16 %v888, %v888
  %v953 = vpack.c.b16 %v889, %v889
  %v954 = vpack.c.b16 %v890, %v890
  %v955 = vpack.c.b16 %v891, %v891
  %v956 = vpack.c.b16 %v892, %v892
  %v957 = vpack.c.b16 %v893, %v893
  %v958 = vpack.c.b16 %v894, %v894
  %v959 = vpack.c.b16 %v895, %v895
  %v960 = vpack.c.b16 %v896, %v896
  %v961 = vpack.c.b16 %v897, %v897
  %v962 = vpack.c.b16 %v898, %v898
  %v963 = vpack.c.b16 %v899, %v899
  %v964 = vpack.c.b16 %v900, %v900
  %v965 = vpack.c.b16 %v901, %v901
  %v966 = vpack.c.b16 %v902, %v902
  %v967 = vpack.c.b16 %v903, %v903
  %v968 = vpack.c.b16 %v904, %v904
  %vm1033 = vcmask 125952
  %1034 = vst.msk [vmem:[%s4] sm:$0xf] %vm1033, %v905
  %1035 = vst.msk [vmem:[%s4 + $0x4] sm:$0xf] %vm1033, %v906
  %1036 = vst.msk [vmem:[%s4 + $0x8] sm:$0xf] %vm1033, %v907
  %1037 = vst.msk [vmem:[%s4 + $0xc] sm:$0xf] %vm1033, %v908
  %1038 = vst.msk [vmem:[%s4 + $0x10] sm:$0xf] %vm1033, %v909
  %1039 = vst.msk [vmem:[%s4 + $0x14] sm:$0xf] %vm1033, %v910
  %1040 = vst.msk [vmem:[%s4 + $0x18] sm:$0xf] %vm1033, %v911
  %1041 = vst.msk [vmem:[%s4 + $0x1c] sm:$0xf] %vm1033, %v912
  %1042 = vst.msk [vmem:[%s4 + $0x20] sm:$0xf] %vm1033, %v913
  %1043 = vst.msk [vmem:[%s4 + $0x24] sm:$0xf] %vm1033, %v914
  %1044 = vst.msk [vmem:[%s4 + $0x28] sm:$0xf] %vm1033, %v915
  %1045 = vst.msk [vmem:[%s4 + $0x2c] sm:$0xf] %vm1033, %v916
  %1046 = vst.msk [vmem:[%s4 + $0x30] sm:$0xf] %vm1033, %v917
  %1047 = vst.msk [vmem:[%s4 + $0x34] sm:$0xf] %vm1033, %v918
  %1048 = vst.msk [vmem:[%s4 + $0x38] sm:$0xf] %vm1033, %v919
  %1049 = vst.msk [vmem:[%s4 + $0x3c] sm:$0xf] %vm1033, %v920
  %1050 = vst.msk [vmem:[%s4 + $0x40] sm:$0xf] %vm1033, %v921
  %1051 = vst.msk [vmem:[%s4 + $0x44] sm:$0xf] %vm1033, %v922
  %1052 = vst.msk [vmem:[%s4 + $0x48] sm:$0xf] %vm1033, %v923
  %1053 = vst.msk [vmem:[%s4 + $0x4c] sm:$0xf] %vm1033, %v924
  %1054 = vst.msk [vmem:[%s4 + $0x50] sm:$0xf] %vm1033, %v925
  %1055 = vst.msk [vmem:[%s4 + $0x54] sm:$0xf] %vm1033, %v926
  %1056 = vst.msk [vmem:[%s4 + $0x58] sm:$0xf] %vm1033, %v927
  %1057 = vst.msk [vmem:[%s4 + $0x5c] sm:$0xf] %vm1033, %v928
  %1058 = vst.msk [vmem:[%s4 + $0x60] sm:$0xf] %vm1033, %v929
  %1059 = vst.msk [vmem:[%s4 + $0x64] sm:$0xf] %vm1033, %v930
  %1060 = vst.msk [vmem:[%s4 + $0x68] sm:$0xf] %vm1033, %v931
  %1061 = vst.msk [vmem:[%s4 + $0x6c] sm:$0xf] %vm1033, %v932
  %1062 = vst.msk [vmem:[%s4 + $0x70] sm:$0xf] %vm1033, %v933
  %1063 = vst.msk [vmem:[%s4 + $0x74] sm:$0xf] %vm1033, %v934
  %1064 = vst.msk [vmem:[%s4 + $0x78] sm:$0xf] %vm1033, %v935
  %1065 = vst.msk [vmem:[%s4 + $0x7c] sm:$0xf] %vm1033, %v936
  %1066 = vst.msk [vmem:[%s4 + $0x80] sm:$0xf] %vm1033, %v937
  %1067 = vst.msk [vmem:[%s4 + $0x84] sm:$0xf] %vm1033, %v938
  %1068 = vst.msk [vmem:[%s4 + $0x88] sm:$0xf] %vm1033, %v939
  %1069 = vst.msk [vmem:[%s4 + $0x8c] sm:$0xf] %vm1033, %v940
  %1070 = vst.msk [vmem:[%s4 + $0x90] sm:$0xf] %vm1033, %v941
  %1071 = vst.msk [vmem:[%s4 + $0x94] sm:$0xf] %vm1033, %v942
  %1072 = vst.msk [vmem:[%s4 + $0x98] sm:$0xf] %vm1033, %v943
  %1073 = vst.msk [vmem:[%s4 + $0x9c] sm:$0xf] %vm1033, %v944
  %1074 = vst.msk [vmem:[%s4 + $0xa0] sm:$0xf] %vm1033, %v945
  %1075 = vst.msk [vmem:[%s4 + $0xa4] sm:$0xf] %vm1033, %v946
  %1076 = vst.msk [vmem:[%s4 + $0xa8] sm:$0xf] %vm1033, %v947
  %1077 = vst.msk [vmem:[%s4 + $0xac] sm:$0xf] %vm1033, %v948
  %1078 = vst.msk [vmem:[%s4 + $0xb0] sm:$0xf] %vm1033, %v949
  %1079 = vst.msk [vmem:[%s4 + $0xb4] sm:$0xf] %vm1033, %v950
  %1080 = vst.msk [vmem:[%s4 + $0xb8] sm:$0xf] %vm1033, %v951
  %1081 = vst.msk [vmem:[%s4 + $0xbc] sm:$0xf] %vm1033, %v952
  %1082 = vst.msk [vmem:[%s4 + $0xc0] sm:$0xf] %vm1033, %v953
  %1083 = vst.msk [vmem:[%s4 + $0xc4] sm:$0xf] %vm1033, %v954
  %1084 = vst.msk [vmem:[%s4 + $0xc8] sm:$0xf] %vm1033, %v955
  %1085 = vst.msk [vmem:[%s4 + $0xcc] sm:$0xf] %vm1033, %v956
  %1086 = vst.msk [vmem:[%s4 + $0xd0] sm:$0xf] %vm1033, %v957
  %1087 = vst.msk [vmem:[%s4 + $0xd4] sm:$0xf] %vm1033, %v958
  %1088 = vst.msk [vmem:[%s4 + $0xd8] sm:$0xf] %vm1033, %v959
  %1089 = vst.msk [vmem:[%s4 + $0xdc] sm:$0xf] %vm1033, %v960
  %1090 = vst.msk [vmem:[%s4 + $0xe0] sm:$0xf] %vm1033, %v961
  %1091 = vst.msk [vmem:[%s4 + $0xe4] sm:$0xf] %vm1033, %v962
  %1092 = vst.msk [vmem:[%s4 + $0xe8] sm:$0xf] %vm1033, %v963
  %1093 = vst.msk [vmem:[%s4 + $0xec] sm:$0xf] %vm1033, %v964
  %1094 = vst.msk [vmem:[%s4 + $0xf0] sm:$0xf] %vm1033, %v965
  %1095 = vst.msk [vmem:[%s4 + $0xf4] sm:$0xf] %vm1033, %v966
  %1096 = vst.msk [vmem:[%s4 + $0xf8] sm:$0xf] %vm1033, %v967
  %1097 = vst.msk [vmem:[%s4 + $0xfc] sm:$0xf] %vm1033, %v968
  %vm1098 = vcmask 130048
  %v1099 = vsel %vm1098, %v523, 0.0
  %v1100 = vsel %vm1098, %v526, 0.0
  %v1101 = vadd.f32 %v1099, %v1100
  %v1102 = vsel %vm1098, %v531, 0.0
  %v1103 = vadd.f32 %v1101, %v1102
  %v1104 = vsel %vm1098, %v534, 0.0
  %v1105 = vadd.f32 %v1103, %v1104
  %v1106 = vsel %vm1098, %v539, 0.0
  %v1107 = vadd.f32 %v1105, %v1106
  %v1108 = vsel %vm1098, %v542, 0.0
  %v1109 = vadd.f32 %v1107, %v1108
  %v1110 = vsel %vm1098, %v547, 0.0
  %v1111 = vadd.f32 %v1109, %v1110
  %v1112 = vsel %vm1098, %v550, 0.0
  %v1113 = vadd.f32 %v1111, %v1112
  %v1114 = vsel %vm1098, %v555, 0.0
  %v1115 = vadd.f32 %v1113, %v1114
  %v1116 = vsel %vm1098, %v558, 0.0
  %v1117 = vadd.f32 %v1115, %v1116
  %v1118 = vsel %vm1098, %v563, 0.0
  %v1119 = vadd.f32 %v1117, %v1118
  %v1120 = vsel %vm1098, %v566, 0.0
  %v1121 = vadd.f32 %v1119, %v1120
  %v1122 = vsel %vm1098, %v571, 0.0
  %v1123 = vadd.f32 %v1121, %v1122
  %v1124 = vsel %vm1098, %v574, 0.0
  %v1125 = vadd.f32 %v1123, %v1124
  %v1126 = vsel %vm1098, %v579, 0.0
  %v1127 = vadd.f32 %v1125, %v1126
  %v1128 = vsel %vm1098, %v582, 0.0
  %v1129 = vadd.f32 %v1127, %v1128
  %v1130 = vsel %vm1098, %v587, 0.0
  %v1131 = vadd.f32 %v1129, %v1130
  %v1132 = vsel %vm1098, %v590, 0.0
  %v1133 = vadd.f32 %v1131, %v1132
  %v1134 = vsel %vm1098, %v595, 0.0
  %v1135 = vadd.f32 %v1133, %v1134
  %v1136 = vsel %vm1098, %v598, 0.0
  %v1137 = vadd.f32 %v1135, %v1136
  %v1138 = vsel %vm1098, %v603, 0.0
  %v1139 = vadd.f32 %v1137, %v1138
  %v1140 = vsel %vm1098, %v606, 0.0
  %v1141 = vadd.f32 %v1139, %v1140
  %v1142 = vsel %vm1098, %v611, 0.0
  %v1143 = vadd.f32 %v1141, %v1142
  %v1144 = vsel %vm1098, %v614, 0.0
  %v1145 = vadd.f32 %v1143, %v1144
  %v1146 = vsel %vm1098, %v619, 0.0
  %v1147 = vadd.f32 %v1145, %v1146
  %v1148 = vsel %vm1098, %v622, 0.0
  %v1149 = vadd.f32 %v1147, %v1148
  %v1150 = vsel %vm1098, %v627, 0.0
  %v1151 = vadd.f32 %v1149, %v1150
  %v1152 = vsel %vm1098, %v630, 0.0
  %v1153 = vadd.f32 %v1151, %v1152
  %v1154 = vsel %vm1098, %v635, 0.0
  %v1155 = vadd.f32 %v1153, %v1154
  %v1156 = vsel %vm1098, %v638, 0.0
  %v1157 = vadd.f32 %v1155, %v1156
  %v1158 = vsel %vm1098, %v643, 0.0
  %v1159 = vadd.f32 %v1157, %v1158
  %v1160 = vsel %vm1098, %v646, 0.0
  %v1161 = vadd.f32 %v1159, %v1160
  %v1162 = vsel %vm1098, %v651, 0.0
  %v1163 = vadd.f32 %v1161, %v1162
  %v1164 = vsel %vm1098, %v654, 0.0
  %v1165 = vadd.f32 %v1163, %v1164
  %v1166 = vsel %vm1098, %v659, 0.0
  %v1167 = vadd.f32 %v1165, %v1166
  %v1168 = vsel %vm1098, %v662, 0.0
  %v1169 = vadd.f32 %v1167, %v1168
  %v1170 = vsel %vm1098, %v667, 0.0
  %v1171 = vadd.f32 %v1169, %v1170
  %v1172 = vsel %vm1098, %v670, 0.0
  %v1173 = vadd.f32 %v1171, %v1172
  %v1174 = vsel %vm1098, %v675, 0.0
  %v1175 = vadd.f32 %v1173, %v1174
  %v1176 = vsel %vm1098, %v678, 0.0
  %v1177 = vadd.f32 %v1175, %v1176
  %v1178 = vsel %vm1098, %v683, 0.0
  %v1179 = vadd.f32 %v1177, %v1178
  %v1180 = vsel %vm1098, %v686, 0.0
  %v1181 = vadd.f32 %v1179, %v1180
  %v1182 = vsel %vm1098, %v691, 0.0
  %v1183 = vadd.f32 %v1181, %v1182
  %v1184 = vsel %vm1098, %v694, 0.0
  %v1185 = vadd.f32 %v1183, %v1184
  %v1186 = vsel %vm1098, %v699, 0.0
  %v1187 = vadd.f32 %v1185, %v1186
  %v1188 = vsel %vm1098, %v702, 0.0
  %v1189 = vadd.f32 %v1187, %v1188
  %v1190 = vsel %vm1098, %v707, 0.0
  %v1191 = vadd.f32 %v1189, %v1190
  %v1192 = vsel %vm1098, %v710, 0.0
  %v1193 = vadd.f32 %v1191, %v1192
  %v1194 = vsel %vm1098, %v715, 0.0
  %v1195 = vadd.f32 %v1193, %v1194
  %v1196 = vsel %vm1098, %v718, 0.0
  %v1197 = vadd.f32 %v1195, %v1196
  %v1198 = vsel %vm1098, %v723, 0.0
  %v1199 = vadd.f32 %v1197, %v1198
  %v1200 = vsel %vm1098, %v726, 0.0
  %v1201 = vadd.f32 %v1199, %v1200
  %v1202 = vsel %vm1098, %v731, 0.0
  %v1203 = vadd.f32 %v1201, %v1202
  %v1204 = vsel %vm1098, %v734, 0.0
  %v1205 = vadd.f32 %v1203, %v1204
  %v1206 = vsel %vm1098, %v739, 0.0
  %v1207 = vadd.f32 %v1205, %v1206
  %v1208 = vsel %vm1098, %v742, 0.0
  %v1209 = vadd.f32 %v1207, %v1208
  %v1210 = vsel %vm1098, %v747, 0.0
  %v1211 = vadd.f32 %v1209, %v1210
  %v1212 = vsel %vm1098, %v750, 0.0
  %v1213 = vadd.f32 %v1211, %v1212
  %v1214 = vsel %vm1098, %v755, 0.0
  %v1215 = vadd.f32 %v1213, %v1214
  %v1216 = vsel %vm1098, %v758, 0.0
  %v1217 = vadd.f32 %v1215, %v1216
  %v1218 = vsel %vm1098, %v763, 0.0
  %v1219 = vadd.f32 %v1217, %v1218
  %v1220 = vsel %vm1098, %v766, 0.0
  %v1221 = vadd.f32 %v1219, %v1220
  %v1222 = vsel %vm1098, %v771, 0.0
  %v1223 = vadd.f32 %v1221, %v1222
  %v1224 = vsel %vm1098, %v774, 0.0
  %v1225 = vadd.f32 %v1223, %v1224
  %v1226 = vrot.slane %v1225, 4
  %v1227 = vadd.f32 %v1225, %v1226
  %v1228 = vrot.slane %v1227, 2
  %v1229 = vadd.f32 %v1227, %v1228
  %v1230 = vrot.slane %v1229, 1
  %v1231 = vadd.f32 %v1229, %v1230
  %v1232 = vmul.f32 %v523, %v523
  %v1233 = vmul.f32 %v526, %v526
  %v1234 = vmul.f32 %v531, %v531
  %v1235 = vmul.f32 %v534, %v534
  %v1236 = vmul.f32 %v539, %v539
  %v1237 = vmul.f32 %v542, %v542
  %v1238 = vmul.f32 %v547, %v547
  %v1239 = vmul.f32 %v550, %v550
  %v1240 = vmul.f32 %v555, %v555
  %v1241 = vmul.f32 %v558, %v558
  %v1242 = vmul.f32 %v563, %v563
  %v1243 = vmul.f32 %v566, %v566
  %v1244 = vmul.f32 %v571, %v571
  %v1245 = vmul.f32 %v574, %v574
  %v1246 = vmul.f32 %v579, %v579
  %v1247 = vmul.f32 %v582, %v582
  %v1248 = vmul.f32 %v587, %v587
  %v1249 = vmul.f32 %v590, %v590
  %v1250 = vmul.f32 %v595, %v595
  %v1251 = vmul.f32 %v598, %v598
  %v1252 = vmul.f32 %v603, %v603
  %v1253 = vmul.f32 %v606, %v606
  %v1254 = vmul.f32 %v611, %v611
  %v1255 = vmul.f32 %v614, %v614
  %v1256 = vmul.f32 %v619, %v619
  %v1257 = vmul.f32 %v622, %v622
  %v1258 = vmul.f32 %v627, %v627
  %v1259 = vmul.f32 %v630, %v630
  %v1260 = vmul.f32 %v635, %v635
  %v1261 = vmul.f32 %v638, %v638
  %v1262 = vmul.f32 %v643, %v643
  %v1263 = vmul.f32 %v646, %v646
  %v1264 = vmul.f32 %v651, %v651
  %v1265 = vmul.f32 %v654, %v654
  %v1266 = vmul.f32 %v659, %v659
  %v1267 = vmul.f32 %v662, %v662
  %v1268 = vmul.f32 %v667, %v667
  %v1269 = vmul.f32 %v670, %v670
  %v1270 = vmul.f32 %v675, %v675
  %v1271 = vmul.f32 %v678, %v678
  %v1272 = vmul.f32 %v683, %v683
  %v1273 = vmul.f32 %v686, %v686
  %v1274 = vmul.f32 %v691, %v691
  %v1275 = vmul.f32 %v694, %v694
  %v1276 = vmul.f32 %v699, %v699
  %v1277 = vmul.f32 %v702, %v702
  %v1278 = vmul.f32 %v707, %v707
  %v1279 = vmul.f32 %v710, %v710
  %v1280 = vmul.f32 %v715, %v715
  %v1281 = vmul.f32 %v718, %v718
  %v1282 = vmul.f32 %v723, %v723
  %v1283 = vmul.f32 %v726, %v726
  %v1284 = vmul.f32 %v731, %v731
  %v1285 = vmul.f32 %v734, %v734
  %v1286 = vmul.f32 %v739, %v739
  %v1287 = vmul.f32 %v742, %v742
  %v1288 = vmul.f32 %v747, %v747
  %v1289 = vmul.f32 %v750, %v750
  %v1290 = vmul.f32 %v755, %v755
  %v1291 = vmul.f32 %v758, %v758
  %v1292 = vmul.f32 %v763, %v763
  %v1293 = vmul.f32 %v766, %v766
  %v1294 = vmul.f32 %v771, %v771
  %v1295 = vmul.f32 %v774, %v774
  %v1296 = vsel %vm1098, %v1232, 0.0
  %v1297 = vsel %vm1098, %v1233, 0.0
  %v1298 = vadd.f32 %v1296, %v1297
  %v1299 = vsel %vm1098, %v1234, 0.0
  %v1300 = vadd.f32 %v1298, %v1299
  %v1301 = vsel %vm1098, %v1235, 0.0
  %v1302 = vadd.f32 %v1300, %v1301
  %v1303 = vsel %vm1098, %v1236, 0.0
  %v1304 = vadd.f32 %v1302, %v1303
  %v1305 = vsel %vm1098, %v1237, 0.0
  %v1306 = vadd.f32 %v1304, %v1305
  %v1307 = vsel %vm1098, %v1238, 0.0
  %v1308 = vadd.f32 %v1306, %v1307
  %v1309 = vsel %vm1098, %v1239, 0.0
  %v1310 = vadd.f32 %v1308, %v1309
  %v1311 = vsel %vm1098, %v1240, 0.0
  %v1312 = vadd.f32 %v1310, %v1311
  %v1313 = vsel %vm1098, %v1241, 0.0
  %v1314 = vadd.f32 %v1312, %v1313
  %v1315 = vsel %vm1098, %v1242, 0.0
  %v1316 = vadd.f32 %v1314, %v1315
  %v1317 = vsel %vm1098, %v1243, 0.0
  %v1318 = vadd.f32 %v1316, %v1317
  %v1319 = vsel %vm1098, %v1244, 0.0
  %v1320 = vadd.f32 %v1318, %v1319
  %v1321 = vsel %vm1098, %v1245, 0.0
  %v1322 = vadd.f32 %v1320, %v1321
  %v1323 = vsel %vm1098, %v1246, 0.0
  %v1324 = vadd.f32 %v1322, %v1323
  %v1325 = vsel %vm1098, %v1247, 0.0
  %v1326 = vadd.f32 %v1324, %v1325
  %v1327 = vsel %vm1098, %v1248, 0.0
  %v1328 = vadd.f32 %v1326, %v1327
  %v1329 = vsel %vm1098, %v1249, 0.0
  %v1330 = vadd.f32 %v1328, %v1329
  %v1331 = vsel %vm1098, %v1250, 0.0
  %v1332 = vadd.f32 %v1330, %v1331
  %v1333 = vsel %vm1098, %v1251, 0.0
  %v1334 = vadd.f32 %v1332, %v1333
  %v1335 = vsel %vm1098, %v1252, 0.0
  %v1336 = vadd.f32 %v1334, %v1335
  %v1337 = vsel %vm1098, %v1253, 0.0
  %v1338 = vadd.f32 %v1336, %v1337
  %v1339 = vsel %vm1098, %v1254, 0.0
  %v1340 = vadd.f32 %v1338, %v1339
  %v1341 = vsel %vm1098, %v1255, 0.0
  %v1342 = vadd.f32 %v1340, %v1341
  %v1343 = vsel %vm1098, %v1256, 0.0
  %v1344 = vadd.f32 %v1342, %v1343
  %v1345 = vsel %vm1098, %v1257, 0.0
  %v1346 = vadd.f32 %v1344, %v1345
  %v1347 = vsel %vm1098, %v1258, 0.0
  %v1348 = vadd.f32 %v1346, %v1347
  %v1349 = vsel %vm1098, %v1259, 0.0
  %v1350 = vadd.f32 %v1348, %v1349
  %v1351 = vsel %vm1098, %v1260, 0.0
  %v1352 = vadd.f32 %v1350, %v1351
  %v1353 = vsel %vm1098, %v1261, 0.0
  %v1354 = vadd.f32 %v1352, %v1353
  %v1355 = vsel %vm1098, %v1262, 0.0
  %v1356 = vadd.f32 %v1354, %v1355
  %v1357 = vsel %vm1098, %v1263, 0.0
  %v1358 = vadd.f32 %v1356, %v1357
  %v1359 = vsel %vm1098, %v1264, 0.0
  %v1360 = vadd.f32 %v1358, %v1359
  %v1361 = vsel %vm1098, %v1265, 0.0
  %v1362 = vadd.f32 %v1360, %v1361
  %v1363 = vsel %vm1098, %v1266, 0.0
  %v1364 = vadd.f32 %v1362, %v1363
  %v1365 = vsel %vm1098, %v1267, 0.0
  %v1366 = vadd.f32 %v1364, %v1365
  %v1367 = vsel %vm1098, %v1268, 0.0
  %v1368 = vadd.f32 %v1366, %v1367
  %v1369 = vsel %vm1098, %v1269, 0.0
  %v1370 = vadd.f32 %v1368, %v1369
  %v1371 = vsel %vm1098, %v1270, 0.0
  %v1372 = vadd.f32 %v1370, %v1371
  %v1373 = vsel %vm1098, %v1271, 0.0
  %v1374 = vadd.f32 %v1372, %v1373
  %v1375 = vsel %vm1098, %v1272, 0.0
  %v1376 = vadd.f32 %v1374, %v1375
  %v1377 = vsel %vm1098, %v1273, 0.0
  %v1378 = vadd.f32 %v1376, %v1377
  %v1379 = vsel %vm1098, %v1274, 0.0
  %v1380 = vadd.f32 %v1378, %v1379
  %v1381 = vsel %vm1098, %v1275, 0.0
  %v1382 = vadd.f32 %v1380, %v1381
  %v1383 = vsel %vm1098, %v1276, 0.0
  %v1384 = vadd.f32 %v1382, %v1383
  %v1385 = vsel %vm1098, %v1277, 0.0
  %v1386 = vadd.f32 %v1384, %v1385
  %v1387 = vsel %vm1098, %v1278, 0.0
  %v1388 = vadd.f32 %v1386, %v1387
  %v1389 = vsel %vm1098, %v1279, 0.0
  %v1390 = vadd.f32 %v1388, %v1389
  %v1391 = vsel %vm1098, %v1280, 0.0
  %v1392 = vadd.f32 %v1390, %v1391
  %v1393 = vsel %vm1098, %v1281, 0.0
  %v1394 = vadd.f32 %v1392, %v1393
  %v1395 = vsel %vm1098, %v1282, 0.0
  %v1396 = vadd.f32 %v1394, %v1395
  %v1397 = vsel %vm1098, %v1283, 0.0
  %v1398 = vadd.f32 %v1396, %v1397
  %v1399 = vsel %vm1098, %v1284, 0.0
  %v1400 = vadd.f32 %v1398, %v1399
  %v1401 = vsel %vm1098, %v1285, 0.0
  %v1402 = vadd.f32 %v1400, %v1401
  %v1403 = vsel %vm1098, %v1286, 0.0
  %v1404 = vadd.f32 %v1402, %v1403
  %v1405 = vsel %vm1098, %v1287, 0.0
  %v1406 = vadd.f32 %v1404, %v1405
  %v1407 = vsel %vm1098, %v1288, 0.0
  %v1408 = vadd.f32 %v1406, %v1407
  %v1409 = vsel %vm1098, %v1289, 0.0
  %v1410 = vadd.f32 %v1408, %v1409
  %v1411 = vsel %vm1098, %v1290, 0.0
  %v1412 = vadd.f32 %v1410, %v1411
  %v1413 = vsel %vm1098, %v1291, 0.0
  %v1414 = vadd.f32 %v1412, %v1413
  %v1415 = vsel %vm1098, %v1292, 0.0
  %v1416 = vadd.f32 %v1414, %v1415
  %v1417 = vsel %vm1098, %v1293, 0.0
  %v1418 = vadd.f32 %v1416, %v1417
  %v1419 = vsel %vm1098, %v1294, 0.0
  %v1420 = vadd.f32 %v1418, %v1419
  %v1421 = vsel %vm1098, %v1295, 0.0
  %v1422 = vadd.f32 %v1420, %v1421
  %v1423 = vrot.slane %v1422, 4
  %v1424 = vadd.f32 %v1422, %v1423
  %v1425 = vrot.slane %v1424, 2
  %v1426 = vadd.f32 %v1424, %v1425
  %v1427 = vrot.slane %v1426, 1
  %v1428 = vadd.f32 %v1426, %v1427
  %vm1429 = vcmask 1040384
  %v1430 = vsel %vm1429, %v1231, %v1428
  %vm1431 = vcmask 123904
  %1432 = vst.msk [vmem:[%s5] sm:$0x3] %vm1431, %v1430
  // Predicated region
  $region18: #{bottleneck_pallas.6} parent=0 // pred_check
    _
  $region19: #{bottleneck_pallas.6} parent=0 // pred_check_branch
    %1434 = sbr.rel (0) target = $region21
  $region20: #{bottleneck_pallas.6} parent=0 // pred_region
    _
  $region21: #{bottleneck_pallas.6} parent=0 // pred_fallthru
    _
  // Predicated region
  $region22: #{bottleneck_pallas.6} parent=0 // pred_check
    _
  $region23: #{bottleneck_pallas.6} parent=0 // pred_check_branch
    %1436 = sbr.rel (0) target = $region25
  $region24: #{bottleneck_pallas.6} parent=0 // pred_region
    _
  $region25: #{bottleneck_pallas.6} parent=0 // pred_fallthru
    _
  // Predicated region
  $region26: #{bottleneck_pallas.6} parent=0 // pred_check
    _
  $region27: #{bottleneck_pallas.6} parent=0 // pred_check_branch
    %1438 = sbr.rel (0) target = $region29
  $region28: #{bottleneck_pallas.6} parent=0 // pred_region
    _
  $region29: #{bottleneck_pallas.6} parent=0 // pred_fallthru
    _
  // Predicated region
  $region30: #{bottleneck_pallas.6} parent=0 // pred_check
    _
  $region31: #{bottleneck_pallas.6} parent=0 // pred_check_branch
    %1440 = sbr.rel (0) target = $region33
  $region32: #{bottleneck_pallas.6} parent=0 // pred_region
    _
  $region33: #{bottleneck_pallas.6} parent=0 // pred_fallthru
    _

// kernel: bottleneck_pallas.5
$region0: #{bottleneck_pallas.5}
  #allocation0 [shape = 'u32[]', space=smem, size = 0x4, offset = 0x4, fixed_abs, tag = 'smem constant byte address 0x4 - core index']
  #allocation1 [shape = 'u32[144,128]{1,0:T(1,128)}', space=vmem, size = 0x12000, scoped, tag = 'internal scratch']
  %s0 = inlined_call_operand.vmem [shape: bf16[2,16,16,4], index: 0, kind: input, shape index: {}]
  %s1 = inlined_call_operand.vmem [shape: f32[1,4], index: 1, kind: input, shape index: {}]
  %s2 = inlined_call_operand.vmem [shape: f32[1,4], index: 2, kind: input, shape index: {}]
  %s3 = inlined_call_operand.vmem [shape: bf16[3,12,4], index: 3, kind: input, shape index: {}]
  %s4 = inlined_call_operand.vmem [shape: bf16[2,256,4], index: 4, kind: output, shape index: {0}]
  %s5 = inlined_call_operand.vmem [shape: f32[2,2,4], index: 5, kind: output, shape index: {1}]
  %6 = xla_tuple %s4, %s5
  %s7 = sld [smem:[#allocation0]]
  $region57: #{bottleneck_pallas.5} parent=0
    _
  %s9 = ssub.s32 1, %s7
  %s10 = scalar_select 0, %s9, %s7
  loop: start=0, step=1, limit=4
  $region2: #{bottleneck_pallas.5} parent=0 // loop_pre_header
    _
  $region3: #{bottleneck_pallas.5} parent=0 // loop_header
    %s12 = sphi 0, %s16
    %p13 = scmp.ge.s32.totalorder %s12, 4
    %s22 = sphi 0, %s24
    %s25 = sphi 0, %s22
    %s26 = sphi 0, %s25
    %s42 = sphi 0, %s26
    %s46 = sphi 0, %s46
    %s48 = sphi 0, %s46
    %s49 = sphi 0, %s48
    %s63 = sphi 0, %s49
    %s67 = sphi 0, %s67
    %s69 = sphi 0, %s67
    %s70 = sphi 0, %s69
    %s84 = sphi 0, %s70
    %s88 = sphi 0, %s88
    %s90 = sphi 0, %s88
    %s91 = sphi 0, %s90
    %s105 = sphi 0, %s91
    %s111 = sphi 0, %s113
    %s114 = sphi 0, %s111
    %s115 = sphi 0, %s114
    %s131 = sphi 0, %s115
    %s137 = sphi 0, %s139
    %s140 = sphi 0, %s137
    %s141 = sphi 0, %s140
    %s157 = sphi 0, %s141
  $region4: #{bottleneck_pallas.5} parent=0 // loop_header_branch
    %15 = sbr.rel (%p13) target = $region8
  $region5: #{bottleneck_pallas.5} parent=0 // loop_body
    %s17 = ssub.s32 %s12, 1
    %s18 = ssub.s32 %s12, 2
    %s19 = sadd.s32 %s12, 1
    %s20 = ssub.s32 %s12, %s19
    %p21 = scmp.eq.s32.totalorder %s20, 0
    %s23 = sadd.s32 %s22, 1
    %s24 = scalar_select %p21, %s22, %s23
    %p27 = pneg %p21
    %p28 = scmp.eq.s32.totalorder %s12, 1
    %p29 = por %p27, %p28
    %p30 = scmp.ne.s32.totalorder %s22, %s25
    %p31 = scmp.eq.s32.totalorder %s12, 0
    %p32 = por %p30, %p31
    %p33 = scmp.ne.s32.totalorder %s22, %s25
    %p34 = scmp.eq.s32.totalorder %s17, 1
    %p35 = por %p33, %p34
    %p36 = scmp.ne.s32.totalorder %s25, %s26
    %p37 = scmp.eq.s32.totalorder %s17, 0
    %p38 = por %p36, %p37
    %p39 = scmp.ne.s32.totalorder %s25, %s26
    %p40 = scmp.eq.s32.totalorder %s18, 1
    %p41 = por %p39, %p40
    %p43 = scmp.ne.s32.totalorder %s26, %s42
    %p44 = scmp.eq.s32.totalorder %s18, 0
    %p45 = por %p43, %p44
    %s47 = sadd.s32 %s46, 1
    %p50 = scmp.eq.s32.totalorder %s12, 1
    %p51 = scmp.ne.s32.totalorder %s46, %s48
    %p52 = scmp.eq.s32.totalorder %s12, 0
    %p53 = por %p51, %p52
    %p54 = scmp.ne.s32.totalorder %s46, %s48
    %p55 = scmp.eq.s32.totalorder %s17, 1
    %p56 = por %p54, %p55
    %p57 = scmp.ne.s32.totalorder %s48, %s49
    %p58 = scmp.eq.s32.totalorder %s17, 0
    %p59 = por %p57, %p58
    %p60 = scmp.ne.s32.totalorder %s48, %s49
    %p61 = scmp.eq.s32.totalorder %s18, 1
    %p62 = por %p60, %p61
    %p64 = scmp.ne.s32.totalorder %s49, %s63
    %p65 = scmp.eq.s32.totalorder %s18, 0
    %p66 = por %p64, %p65
    %s68 = sadd.s32 %s67, 1
    %p71 = scmp.eq.s32.totalorder %s12, 1
    %p72 = scmp.ne.s32.totalorder %s67, %s69
    %p73 = scmp.eq.s32.totalorder %s12, 0
    %p74 = por %p72, %p73
    %p75 = scmp.ne.s32.totalorder %s67, %s69
    %p76 = scmp.eq.s32.totalorder %s17, 1
    %p77 = por %p75, %p76
    %p78 = scmp.ne.s32.totalorder %s69, %s70
    %p79 = scmp.eq.s32.totalorder %s17, 0
    %p80 = por %p78, %p79
    %p81 = scmp.ne.s32.totalorder %s69, %s70
    %p82 = scmp.eq.s32.totalorder %s18, 1
    %p83 = por %p81, %p82
    %p85 = scmp.ne.s32.totalorder %s70, %s84
    %p86 = scmp.eq.s32.totalorder %s18, 0
    %p87 = por %p85, %p86
    %s89 = sadd.s32 %s88, 1
    %p92 = scmp.eq.s32.totalorder %s12, 1
    %p93 = scmp.ne.s32.totalorder %s88, %s90
    %p94 = scmp.eq.s32.totalorder %s12, 0
    %p95 = por %p93, %p94
    %p96 = scmp.ne.s32.totalorder %s88, %s90
    %p97 = scmp.eq.s32.totalorder %s17, 1
    %p98 = por %p96, %p97
    %p99 = scmp.ne.s32.totalorder %s90, %s91
    %p100 = scmp.eq.s32.totalorder %s17, 0
    %p101 = por %p99, %p100
    %p102 = scmp.ne.s32.totalorder %s90, %s91
    %p103 = scmp.eq.s32.totalorder %s18, 1
    %p104 = por %p102, %p103
    %p106 = scmp.ne.s32.totalorder %s91, %s105
    %p107 = scmp.eq.s32.totalorder %s18, 0
    %p108 = por %p106, %p107
    %s109 = ssub.s32 %s12, %s19
    %p110 = scmp.eq.s32.totalorder %s109, 0
    %s112 = sadd.s32 %s111, 1
    %s113 = scalar_select %p110, %s111, %s112
    %p116 = pneg %p110
    %p117 = scmp.eq.s32.totalorder %s12, 1
    %p118 = por %p116, %p117
    %p119 = scmp.ne.s32.totalorder %s111, %s114
    %p120 = scmp.eq.s32.totalorder %s12, 0
    %p121 = por %p119, %p120
    %p122 = scmp.ne.s32.totalorder %s111, %s114
    %p123 = scmp.eq.s32.totalorder %s17, 1
    %p124 = por %p122, %p123
    %p125 = scmp.ne.s32.totalorder %s114, %s115
    %p126 = scmp.eq.s32.totalorder %s17, 0
    %p127 = por %p125, %p126
    %p128 = scmp.ne.s32.totalorder %s114, %s115
    %p129 = scmp.eq.s32.totalorder %s18, 1
    %p130 = por %p128, %p129
    %p132 = scmp.ne.s32.totalorder %s115, %s131
    %p133 = scmp.eq.s32.totalorder %s18, 0
    %p134 = por %p132, %p133
    %s135 = ssub.s32 %s12, %s19
    %p136 = scmp.eq.s32.totalorder %s135, 0
    %s138 = sadd.s32 %s137, 1
    %s139 = scalar_select %p136, %s137, %s138
    %p142 = pneg %p136
    %p143 = scmp.eq.s32.totalorder %s12, 1
    %p144 = por %p142, %p143
    %p145 = scmp.ne.s32.totalorder %s137, %s140
    %p146 = scmp.eq.s32.totalorder %s12, 0
    %p147 = por %p145, %p146
    %p148 = scmp.ne.s32.totalorder %s137, %s140
    %p149 = scmp.eq.s32.totalorder %s17, 1
    %p150 = por %p148, %p149
    %p151 = scmp.ne.s32.totalorder %s140, %s141
    %p152 = scmp.eq.s32.totalorder %s17, 0
    %p153 = por %p151, %p152
    %p154 = scmp.ne.s32.totalorder %s140, %s141
    %p155 = scmp.eq.s32.totalorder %s18, 1
    %p156 = por %p154, %p155
    %p158 = scmp.ne.s32.totalorder %s141, %s157
    %p159 = scmp.eq.s32.totalorder %s18, 0
    %p160 = por %p158, %p159
    %p161 = scmp.le.s32.totalorder 1, %s12
    %p162 = scmp.lt.s32.totalorder %s12, 3
    %p163 = pnand %p161, %p162
    %p164 = pneg %p163
    // Predicated region
    $region9: #{bottleneck_pallas.5} parent=5 // pred_check
      _
    $region10: #{bottleneck_pallas.5} parent=5 // pred_check_branch
      %166 = sbr.rel (%p163) target = $region12
    $region11: #{bottleneck_pallas.5} parent=5 // pred_region
      %s167 = ssub.s32 %s12, 1
      // Predicated region
      $region13: #{bottleneck_pallas.5} parent=11 // pred_check
        %p168 = pneg %p59
      $region14: #{bottleneck_pallas.5} parent=11 // pred_check_branch
        %170 = sbr.rel (%p168) target = $region16
      $region15: #{bottleneck_pallas.5} parent=11 // pred_region
        _
      $region16: #{bottleneck_pallas.5} parent=11 // pred_fallthru
        _
      // Predicated region
      $region17: #{bottleneck_pallas.5} parent=11 // pred_check
        %p171 = pneg %p80
      $region18: #{bottleneck_pallas.5} parent=11 // pred_check_branch
        %173 = sbr.rel (%p171) target = $region20
      $region19: #{bottleneck_pallas.5} parent=11 // pred_region
        _
      $region20: #{bottleneck_pallas.5} parent=11 // pred_fallthru
        _
      // Predicated region
      $region21: #{bottleneck_pallas.5} parent=11 // pred_check
        %p174 = pneg %p101
      $region22: #{bottleneck_pallas.5} parent=11 // pred_check_branch
        %176 = sbr.rel (%p174) target = $region24
      $region23: #{bottleneck_pallas.5} parent=11 // pred_region
        _
      $region24: #{bottleneck_pallas.5} parent=11 // pred_fallthru
        _
    $region12: #{bottleneck_pallas.5} parent=5 // pred_fallthru
      _
    %p177 = scmp.lt.s32.totalorder %s12, 2
    // Predicated region
    $region25: #{bottleneck_pallas.5} parent=5 // pred_check
      %p178 = pneg %p177
    $region26: #{bottleneck_pallas.5} parent=5 // pred_check_branch
      %180 = sbr.rel (%p178) target = $region28
    $region27: #{bottleneck_pallas.5} parent=5 // pred_region
      // Predicated region
      $region29: #{bottleneck_pallas.5} parent=27 // pred_check
        %p181 = pneg %p32
      $region30: #{bottleneck_pallas.5} parent=27 // pred_check_branch
        %183 = sbr.rel (%p181) target = $region32
      $region31: #{bottleneck_pallas.5} parent=27 // pred_region
        %p184 = scmp.lt.s32.totalorder %s12, 1
        %s185 = scalar_select %p184, %s12, 1
        %s186 = smul.addr %s185, 32
        %s187 = smul.addr %s186, 4
        %s188 = scalar_lea.vmem %s0, %s187
      $region32: #{bottleneck_pallas.5} parent=27 // pred_fallthru
        _
    $region28: #{bottleneck_pallas.5} parent=5 // pred_fallthru
      _
    %p189 = scmp.le.s32.totalorder 1, %s12
    %p190 = scmp.lt.s32.totalorder %s12, 3
    %p191 = pnand %p189, %p190
    %p192 = pneg %p191
    // Predicated region
    $region33: #{bottleneck_pallas.5} parent=5 // pred_check
      _
    $region34: #{bottleneck_pallas.5} parent=5 // pred_check_branch
      %194 = sbr.rel (%p191) target = $region36
    $region35: #{bottleneck_pallas.5} parent=5 // pred_region
      %s195 = ssub.s32 %s12, 1
      %p196 = scmp.lt.s32.totalorder %s17, 1
      %s197 = scalar_select %p196, %s17, 1
      %s198 = smul.addr %s197, 32
      %s199 = smul.addr %s198, 4
      %s200 = scalar_lea.vmem %s0, %s199
      %p201 = pneg %p38
      %p202 = pneg %p35
      %p203 = pneg %p59
      %p204 = pneg %p56
      %p205 = pneg %p80
      %p206 = pneg %p77
      %p207 = pneg %p101
      %p208 = pneg %p98
      %p209 = pneg %p127
      %p210 = pneg %p124
      %p211 = scmp.lt.s32.totalorder %s17, 1
      %s212 = scalar_select %p211, %s17, 1
      %s213 = smul.addr %s212, 32
      %s214 = smul.addr %s213, 4
      %s215 = scalar_lea.vmem %s4, %s214
      %p216 = pneg %p153
      %p217 = pneg %p150
      %p218 = scmp.lt.s32.totalorder %s17, 1
      %s219 = scalar_select %p218, %s17, 1
      %s220 = smul.addr %s219, 2
      %s221 = scalar_lea.vmem %s5, %s220
      %p222 = scmp.lt.s32.totalorder %s17, 1
      %s223 = scalar_select %p222, %s17, 1
      %s224 = smul.addr %s223, 32
      %s225 = smul.addr %s224, 4
      %s226 = scalar_lea.vmem %s0, %s225
      %p227 = scmp.lt.s32.totalorder %s17, 1
      %s228 = scalar_select %p227, %s17, 1
      %s229 = smul.addr %s228, 32
      %s230 = smul.addr %s229, 4
      %s231 = scalar_lea.vmem %s4, %s230
      %p232 = scmp.lt.s32.totalorder %s17, 1
      %s233 = scalar_select %p232, %s17, 1
      %s234 = smul.addr %s233, 2
      %s235 = scalar_lea.vmem %s5, %s234
      %v237 = vld [vmem:[%s226] sm:$0xf]
      %v238 = vld [vmem:[%s226 + $0x4] sm:$0xf]
      %v239 = vld [vmem:[%s226 + $0x8] sm:$0xf]
      %v240 = vld [vmem:[%s226 + $0xc] sm:$0xf]
      %v241 = vld [vmem:[%s226 + $0x10] sm:$0xf]
      %v242 = vld [vmem:[%s226 + $0x14] sm:$0xf]
      %v243 = vld [vmem:[%s226 + $0x18] sm:$0xf]
      %v244 = vld [vmem:[%s226 + $0x1c] sm:$0xf]
      %v245 = vld [vmem:[%s226 + $0x20] sm:$0xf]
      %v246 = vld [vmem:[%s226 + $0x24] sm:$0xf]
      %v247 = vld [vmem:[%s226 + $0x28] sm:$0xf]
      %v248 = vld [vmem:[%s226 + $0x2c] sm:$0xf]
      %v249 = vld [vmem:[%s226 + $0x30] sm:$0xf]
      %v250 = vld [vmem:[%s226 + $0x34] sm:$0xf]
      %v251 = vld [vmem:[%s226 + $0x38] sm:$0xf]
      %v252 = vld [vmem:[%s226 + $0x3c] sm:$0xf]
      %v253 = vld [vmem:[%s226 + $0x40] sm:$0xf]
      %v254 = vld [vmem:[%s226 + $0x44] sm:$0xf]
      %v255 = vld [vmem:[%s226 + $0x48] sm:$0xf]
      %v256 = vld [vmem:[%s226 + $0x4c] sm:$0xf]
      %v257 = vld [vmem:[%s226 + $0x50] sm:$0xf]
      %v258 = vld [vmem:[%s226 + $0x54] sm:$0xf]
      %v259 = vld [vmem:[%s226 + $0x58] sm:$0xf]
      %v260 = vld [vmem:[%s226 + $0x5c] sm:$0xf]
      %v261 = vld [vmem:[%s226 + $0x60] sm:$0xf]
      %v262 = vld [vmem:[%s226 + $0x64] sm:$0xf]
      %v263 = vld [vmem:[%s226 + $0x68] sm:$0xf]
      %v264 = vld [vmem:[%s226 + $0x6c] sm:$0xf]
      %v265 = vld [vmem:[%s226 + $0x70] sm:$0xf]
      %v266 = vld [vmem:[%s226 + $0x74] sm:$0xf]
      %v267 = vld [vmem:[%s226 + $0x78] sm:$0xf]
      %v268 = vld [vmem:[%s226 + $0x7c] sm:$0xf]
      %v269 = vunpack.c.l.bf16 %v237
      %v270 = vunpack.c.l.bf16 %v238
      %v271 = vunpack.c.l.bf16 %v239
      %v272 = vunpack.c.l.bf16 %v240
      %v273 = vunpack.c.l.bf16 %v241
      %v274 = vunpack.c.l.bf16 %v242
      %v275 = vunpack.c.l.bf16 %v243
      %v276 = vunpack.c.l.bf16 %v244
      %v277 = vunpack.c.l.bf16 %v245
      %v278 = vunpack.c.l.bf16 %v246
      %v279 = vunpack.c.l.bf16 %v247
      %v280 = vunpack.c.l.bf16 %v248
      %v281 = vunpack.c.l.bf16 %v249
      %v282 = vunpack.c.l.bf16 %v250
      %v283 = vunpack.c.l.bf16 %v251
      %v284 = vunpack.c.l.bf16 %v252
      %v285 = vunpack.c.l.bf16 %v253
      %v286 = vunpack.c.l.bf16 %v254
      %v287 = vunpack.c.l.bf16 %v255
      %v288 = vunpack.c.l.bf16 %v256
      %v289 = vunpack.c.l.bf16 %v257
      %v290 = vunpack.c.l.bf16 %v258
      %v291 = vunpack.c.l.bf16 %v259
      %v292 = vunpack.c.l.bf16 %v260
      %v293 = vunpack.c.l.bf16 %v261
      %v294 = vunpack.c.l.bf16 %v262
      %v295 = vunpack.c.l.bf16 %v263
      %v296 = vunpack.c.l.bf16 %v264
      %v297 = vunpack.c.l.bf16 %v265
      %v298 = vunpack.c.l.bf16 %v266
      %v299 = vunpack.c.l.bf16 %v267
      %v300 = vunpack.c.l.bf16 %v268
      %v301 = vld [vmem:[%s1] sm:$0x1]
      %v303 = vlaneseq
      %v304 = vshrl.u32 %v303, 7
      %v305 = vsub.s32 0, %v304
      %v306 = vrot.slane %v301, %v305
      %v308 = vmul.f32 %v269, %v306
      %v309 = vmul.f32 %v270, %v306
      %v310 = vmul.f32 %v271, %v306
      %v311 = vmul.f32 %v272, %v306
      %v312 = vmul.f32 %v273, %v306
      %v313 = vmul.f32 %v274, %v306
      %v314 = vmul.f32 %v275, %v306
      %v315 = vmul.f32 %v276, %v306
      %v316 = vmul.f32 %v277, %v306
      %v317 = vmul.f32 %v278, %v306
      %v318 = vmul.f32 %v279, %v306
      %v319 = vmul.f32 %v280, %v306
      %v320 = vmul.f32 %v281, %v306
      %v321 = vmul.f32 %v282, %v306
      %v322 = vmul.f32 %v283, %v306
      %v323 = vmul.f32 %v284, %v306
      %v324 = vmul.f32 %v285, %v306
      %v325 = vmul.f32 %v286, %v306
      %v326 = vmul.f32 %v287, %v306
      %v327 = vmul.f32 %v288, %v306
      %v328 = vmul.f32 %v289, %v306
      %v329 = vmul.f32 %v290, %v306
      %v330 = vmul.f32 %v291, %v306
      %v331 = vmul.f32 %v292, %v306
      %v332 = vmul.f32 %v293, %v306
      %v333 = vmul.f32 %v294, %v306
      %v334 = vmul.f32 %v295, %v306
      %v335 = vmul.f32 %v296, %v306
      %v336 = vmul.f32 %v297, %v306
      %v337 = vmul.f32 %v298, %v306
      %v338 = vmul.f32 %v299, %v306
      %v339 = vmul.f32 %v300, %v306
      %v340 = vld [vmem:[%s2] sm:$0x1]
      %v342 = vlaneseq
      %v343 = vshrl.u32 %v342, 7
      %v344 = vsub.s32 0, %v343
      %v345 = vrot.slane %v340, %v344
      %v347 = vadd.f32 %v308, %v345
      %v348 = vadd.f32 %v309, %v345
      %v349 = vadd.f32 %v310, %v345
      %v350 = vadd.f32 %v311, %v345
      %v351 = vadd.f32 %v312, %v345
      %v352 = vadd.f32 %v313, %v345
      %v353 = vadd.f32 %v314, %v345
      %v354 = vadd.f32 %v315, %v345
      %v355 = vadd.f32 %v316, %v345
      %v356 = vadd.f32 %v317, %v345
      %v357 = vadd.f32 %v318, %v345
      %v358 = vadd.f32 %v319, %v345
      %v359 = vadd.f32 %v320, %v345
      %v360 = vadd.f32 %v321, %v345
      %v361 = vadd.f32 %v322, %v345
      %v362 = vadd.f32 %v323, %v345
      %v363 = vadd.f32 %v324, %v345
      %v364 = vadd.f32 %v325, %v345
      %v365 = vadd.f32 %v326, %v345
      %v366 = vadd.f32 %v327, %v345
      %v367 = vadd.f32 %v328, %v345
      %v368 = vadd.f32 %v329, %v345
      %v369 = vadd.f32 %v330, %v345
      %v370 = vadd.f32 %v331, %v345
      %v371 = vadd.f32 %v332, %v345
      %v372 = vadd.f32 %v333, %v345
      %v373 = vadd.f32 %v334, %v345
      %v374 = vadd.f32 %v335, %v345
      %v375 = vadd.f32 %v336, %v345
      %v376 = vadd.f32 %v337, %v345
      %v377 = vadd.f32 %v338, %v345
      %v378 = vadd.f32 %v339, %v345
      %v379 = vmax.f32 %v347, 0.0
      %v380 = vmax.f32 %v348, 0.0
      %v381 = vmax.f32 %v349, 0.0
      %v382 = vmax.f32 %v350, 0.0
      %v383 = vmax.f32 %v351, 0.0
      %v384 = vmax.f32 %v352, 0.0
      %v385 = vmax.f32 %v353, 0.0
      %v386 = vmax.f32 %v354, 0.0
      %v387 = vmax.f32 %v355, 0.0
      %v388 = vmax.f32 %v356, 0.0
      %v389 = vmax.f32 %v357, 0.0
      %v390 = vmax.f32 %v358, 0.0
      %v391 = vmax.f32 %v359, 0.0
      %v392 = vmax.f32 %v360, 0.0
      %v393 = vmax.f32 %v361, 0.0
      %v394 = vmax.f32 %v362, 0.0
      %v395 = vmax.f32 %v363, 0.0
      %v396 = vmax.f32 %v364, 0.0
      %v397 = vmax.f32 %v365, 0.0
      %v398 = vmax.f32 %v366, 0.0
      %v399 = vmax.f32 %v367, 0.0
      %v400 = vmax.f32 %v368, 0.0
      %v401 = vmax.f32 %v369, 0.0
      %v402 = vmax.f32 %v370, 0.0
      %v403 = vmax.f32 %v371, 0.0
      %v404 = vmax.f32 %v372, 0.0
      %v405 = vmax.f32 %v373, 0.0
      %v406 = vmax.f32 %v374, 0.0
      %v407 = vmax.f32 %v375, 0.0
      %v408 = vmax.f32 %v376, 0.0
      %v409 = vmax.f32 %v377, 0.0
      %v410 = vmax.f32 %v378, 0.0
      %v411 = vpack.c.bf16 %v380, %v379
      %v412 = vpack.c.bf16 %v382, %v381
      %v413 = vpack.c.bf16 %v384, %v383
      %v414 = vpack.c.bf16 %v386, %v385
      %v415 = vpack.c.bf16 %v388, %v387
      %v416 = vpack.c.bf16 %v390, %v389
      %v417 = vpack.c.bf16 %v392, %v391
      %v418 = vpack.c.bf16 %v394, %v393
      %v419 = vpack.c.bf16 %v396, %v395
      %v420 = vpack.c.bf16 %v398, %v397
      %v421 = vpack.c.bf16 %v400, %v399
      %v422 = vpack.c.bf16 %v402, %v401
      %v423 = vpack.c.bf16 %v404, %v403
      %v424 = vpack.c.bf16 %v406, %v405
      %v425 = vpack.c.bf16 %v408, %v407
      %v426 = vpack.c.bf16 %v410, %v409
      %v428 = vshrl.u32 %v411, 16
      %v430 = vrot.slane %v428, 7
      %v431 = vshll.u32 %v411, 16
      %v433 = vor.u32 %v430, %v431
      %v435 = vshrl.u32 %v412, 16
      %v437 = vrot.slane %v435, 7
      %v438 = vshll.u32 %v412, 16
      %v440 = vor.u32 %v437, %v438
      %v442 = vshrl.u32 %v413, 16
      %v444 = vrot.slane %v442, 7
      %v445 = vshll.u32 %v413, 16
      %v447 = vor.u32 %v444, %v445
      %v449 = vshrl.u32 %v414, 16
      %v451 = vrot.slane %v449, 7
      %v452 = vshll.u32 %v414, 16
      %v454 = vor.u32 %v451, %v452
      %v456 = vshrl.u32 %v415, 16
      %v458 = vrot.slane %v456, 7
      %v459 = vshll.u32 %v415, 16
      %v461 = vor.u32 %v458, %v459
      %v463 = vshrl.u32 %v416, 16
      %v465 = vrot.slane %v463, 7
      %v466 = vshll.u32 %v416, 16
      %v468 = vor.u32 %v465, %v466
      %v470 = vshrl.u32 %v417, 16
      %v472 = vrot.slane %v470, 7
      %v473 = vshll.u32 %v417, 16
      %v475 = vor.u32 %v472, %v473
      %v477 = vshrl.u32 %v418, 16
      %v479 = vrot.slane %v477, 7
      %v480 = vshll.u32 %v418, 16
      %v482 = vor.u32 %v479, %v480
      %v484 = vshrl.u32 %v419, 16
      %v486 = vrot.slane %v484, 7
      %v487 = vshll.u32 %v419, 16
      %v489 = vor.u32 %v486, %v487
      %v491 = vshrl.u32 %v420, 16
      %v493 = vrot.slane %v491, 7
      %v494 = vshll.u32 %v420, 16
      %v496 = vor.u32 %v493, %v494
      %v498 = vshrl.u32 %v421, 16
      %v500 = vrot.slane %v498, 7
      %v501 = vshll.u32 %v421, 16
      %v503 = vor.u32 %v500, %v501
      %v505 = vshrl.u32 %v422, 16
      %v507 = vrot.slane %v505, 7
      %v508 = vshll.u32 %v422, 16
      %v510 = vor.u32 %v507, %v508
      %v512 = vshrl.u32 %v423, 16
      %v514 = vrot.slane %v512, 7
      %v515 = vshll.u32 %v423, 16
      %v517 = vor.u32 %v514, %v515
      %v519 = vshrl.u32 %v424, 16
      %v521 = vrot.slane %v519, 7
      %v522 = vshll.u32 %v424, 16
      %v524 = vor.u32 %v521, %v522
      %v526 = vshrl.u32 %v425, 16
      %v528 = vrot.slane %v526, 7
      %v529 = vshll.u32 %v425, 16
      %v531 = vor.u32 %v528, %v529
      %v533 = vshrl.u32 %v426, 16
      %v535 = vrot.slane %v533, 7
      %v536 = vshll.u32 %v426, 16
      %v538 = vor.u32 %v535, %v536
      %vm571 = vcmask 1040384
      %vm572 = vsmask.f32 256
      %vm573 = vmand %vm571, %vm572
      %v574 = vsel %vm573, 0, %v433
      %v575 = vsel %vm573, 0, %v440
      %v576 = vsel %vm573, 0, %v447
      %v577 = vsel %vm573, 0, %v454
      %v578 = vsel %vm573, 0, %v461
      %v579 = vsel %vm573, 0, %v468
      %v580 = vsel %vm573, 0, %v475
      %v581 = vsel %vm573, 0, %v482
      %v582 = vsel %vm573, 0, %v489
      %v583 = vsel %vm573, 0, %v496
      %v584 = vsel %vm573, 0, %v503
      %v585 = vsel %vm573, 0, %v510
      %v586 = vsel %vm573, 0, %v517
      %v587 = vsel %vm573, 0, %v524
      %v588 = vsel %vm573, 0, %v531
      %v589 = vsel %vm573, 0, %v538
      %v590 = vsel %vm573, %v430, 0
      %v591 = vsel %vm573, %v437, 0
      %v592 = vsel %vm573, %v444, 0
      %v593 = vsel %vm573, %v451, 0
      %v594 = vsel %vm573, %v458, 0
      %v595 = vsel %vm573, %v465, 0
      %v596 = vsel %vm573, %v472, 0
      %v597 = vsel %vm573, %v479, 0
      %v598 = vsel %vm573, %v486, 0
      %v599 = vsel %vm573, %v493, 0
      %v600 = vsel %vm573, %v500, 0
      %v601 = vsel %vm573, %v507, 0
      %v602 = vsel %vm573, %v514, 0
      %v603 = vsel %vm573, %v521, 0
      %v604 = vsel %vm573, %v528, 0
      %v605 = vsel %vm573, %v535, 0
      %vm606 = vsmask.f32 7424
      %v608 = vshrl.u32 0, 16
      %v610 = vshll.u32 0, 16
      %v612 = vrot.slane %v610, 1
      %v613 = vor.u32 %v608, %v612
      %v614 = vsel %vm606, %v613, %v612
      %v616 = vshrl.u32 %v574, 16
      %v618 = vshll.u32 %v574, 16
      %v620 = vrot.slane %v618, 1
      %v621 = vor.u32 %v616, %v620
      %v623 = vshll.u32 %v590, 16
      %v625 = vrot.slane %v623, 1
      %v626 = vsel %vm606, %v621, %v625
      %v628 = vshrl.u32 %v575, 16
      %v630 = vshll.u32 %v575, 16
      %v632 = vrot.slane %v630, 1
      %v633 = vor.u32 %v628, %v632
      %v635 = vshll.u32 %v591, 16
      %v637 = vrot.slane %v635, 1
      %v638 = vsel %vm606, %v633, %v637
      %v640 = vshrl.u32 %v576, 16
      %v642 = vshll.u32 %v576, 16
      %v644 = vrot.slane %v642, 1
      %v645 = vor.u32 %v640, %v644
      %v647 = vshll.u32 %v592, 16
      %v649 = vrot.slane %v647, 1
      %v650 = vsel %vm606, %v645, %v649
      %v652 = vshrl.u32 %v577, 16
      %v654 = vshll.u32 %v577, 16
      %v656 = vrot.slane %v654, 1
      %v657 = vor.u32 %v652, %v656
      %v659 = vshll.u32 %v593, 16
      %v661 = vrot.slane %v659, 1
      %v662 = vsel %vm606, %v657, %v661
      %v664 = vshrl.u32 %v578, 16
      %v666 = vshll.u32 %v578, 16
      %v668 = vrot.slane %v666, 1
      %v669 = vor.u32 %v664, %v668
      %v671 = vshll.u32 %v594, 16
      %v673 = vrot.slane %v671, 1
      %v674 = vsel %vm606, %v669, %v673
      %v676 = vshrl.u32 %v579, 16
      %v678 = vshll.u32 %v579, 16
      %v680 = vrot.slane %v678, 1
      %v681 = vor.u32 %v676, %v680
      %v683 = vshll.u32 %v595, 16
      %v685 = vrot.slane %v683, 1
      %v686 = vsel %vm606, %v681, %v685
      %v688 = vshrl.u32 %v580, 16
      %v690 = vshll.u32 %v580, 16
      %v692 = vrot.slane %v690, 1
      %v693 = vor.u32 %v688, %v692
      %v695 = vshll.u32 %v596, 16
      %v697 = vrot.slane %v695, 1
      %v698 = vsel %vm606, %v693, %v697
      %v700 = vshrl.u32 %v581, 16
      %v702 = vshll.u32 %v581, 16
      %v704 = vrot.slane %v702, 1
      %v705 = vor.u32 %v700, %v704
      %v707 = vshll.u32 %v597, 16
      %v709 = vrot.slane %v707, 1
      %v710 = vsel %vm606, %v705, %v709
      %v712 = vshrl.u32 %v582, 16
      %v714 = vshll.u32 %v582, 16
      %v716 = vrot.slane %v714, 1
      %v717 = vor.u32 %v712, %v716
      %v719 = vshll.u32 %v598, 16
      %v721 = vrot.slane %v719, 1
      %v722 = vsel %vm606, %v717, %v721
      %v724 = vshrl.u32 %v583, 16
      %v726 = vshll.u32 %v583, 16
      %v728 = vrot.slane %v726, 1
      %v729 = vor.u32 %v724, %v728
      %v731 = vshll.u32 %v599, 16
      %v733 = vrot.slane %v731, 1
      %v734 = vsel %vm606, %v729, %v733
      %v736 = vshrl.u32 %v584, 16
      %v738 = vshll.u32 %v584, 16
      %v740 = vrot.slane %v738, 1
      %v741 = vor.u32 %v736, %v740
      %v743 = vshll.u32 %v600, 16
      %v745 = vrot.slane %v743, 1
      %v746 = vsel %vm606, %v741, %v745
      %v748 = vshrl.u32 %v585, 16
      %v750 = vshll.u32 %v585, 16
      %v752 = vrot.slane %v750, 1
      %v753 = vor.u32 %v748, %v752
      %v755 = vshll.u32 %v601, 16
      %v757 = vrot.slane %v755, 1
      %v758 = vsel %vm606, %v753, %v757
      %v760 = vshrl.u32 %v586, 16
      %v762 = vshll.u32 %v586, 16
      %v764 = vrot.slane %v762, 1
      %v765 = vor.u32 %v760, %v764
      %v767 = vshll.u32 %v602, 16
      %v769 = vrot.slane %v767, 1
      %v770 = vsel %vm606, %v765, %v769
      %v772 = vshrl.u32 %v587, 16
      %v774 = vshll.u32 %v587, 16
      %v776 = vrot.slane %v774, 1
      %v777 = vor.u32 %v772, %v776
      %v779 = vshll.u32 %v603, 16
      %v781 = vrot.slane %v779, 1
      %v782 = vsel %vm606, %v777, %v781
      %v784 = vshrl.u32 %v588, 16
      %v786 = vshll.u32 %v588, 16
      %v788 = vrot.slane %v786, 1
      %v789 = vor.u32 %v784, %v788
      %v791 = vshll.u32 %v604, 16
      %v793 = vrot.slane %v791, 1
      %v794 = vsel %vm606, %v789, %v793
      %795 = vrot.lane.b32.xlu0 %v614, 4
      %v796 = vpop.permute.xlu0 %795
      %797 = vrot.lane.b32.xlu0 %v626, 4
      %v798 = vpop.permute.xlu0 %797
      %799 = vrot.lane.b32.xlu0 %v638, 4
      %v800 = vpop.permute.xlu0 %799
      %801 = vrot.lane.b32.xlu0 %v650, 4
      %v802 = vpop.permute.xlu0 %801
      %803 = vrot.lane.b32.xlu0 %v662, 4
      %v804 = vpop.permute.xlu0 %803
      %805 = vrot.lane.b32.xlu0 %v674, 4
      %v806 = vpop.permute.xlu0 %805
      %807 = vrot.lane.b32.xlu0 %v686, 4
      %v808 = vpop.permute.xlu0 %807
      %809 = vrot.lane.b32.xlu0 %v698, 4
      %v810 = vpop.permute.xlu0 %809
      %811 = vrot.lane.b32.xlu0 %v710, 4
      %v812 = vpop.permute.xlu0 %811
      %813 = vrot.lane.b32.xlu0 %v722, 4
      %v814 = vpop.permute.xlu0 %813
      %815 = vrot.lane.b32.xlu0 %v734, 4
      %v816 = vpop.permute.xlu0 %815
      %817 = vrot.lane.b32.xlu0 %v746, 4
      %v818 = vpop.permute.xlu0 %817
      %819 = vrot.lane.b32.xlu0 %v758, 4
      %v820 = vpop.permute.xlu0 %819
      %821 = vrot.lane.b32.xlu0 %v770, 4
      %v822 = vpop.permute.xlu0 %821
      %823 = vrot.lane.b32.xlu0 %v782, 4
      %v824 = vpop.permute.xlu0 %823
      %825 = vrot.lane.b32.xlu0 %v794, 4
      %v826 = vpop.permute.xlu0 %825
      %vm858 = vcmask 1046528
      %v859 = vrot.slane 0, 1
      %v860 = vsel %vm858, %v859, %v859
      %v861 = vrot.slane %v574, 1
      %v862 = vrot.slane %v590, 1
      %v863 = vsel %vm858, %v861, %v862
      %v864 = vrot.slane %v575, 1
      %v865 = vrot.slane %v591, 1
      %v866 = vsel %vm858, %v864, %v865
      %v867 = vrot.slane %v576, 1
      %v868 = vrot.slane %v592, 1
      %v869 = vsel %vm858, %v867, %v868
      %v870 = vrot.slane %v577, 1
      %v871 = vrot.slane %v593, 1
      %v872 = vsel %vm858, %v870, %v871
      %v873 = vrot.slane %v578, 1
      %v874 = vrot.slane %v594, 1
      %v875 = vsel %vm858, %v873, %v874
      %v876 = vrot.slane %v579, 1
      %v877 = vrot.slane %v595, 1
      %v878 = vsel %vm858, %v876, %v877
      %v879 = vrot.slane %v580, 1
      %v880 = vrot.slane %v596, 1
      %v881 = vsel %vm858, %v879, %v880
      %v882 = vrot.slane %v581, 1
      %v883 = vrot.slane %v597, 1
      %v884 = vsel %vm858, %v882, %v883
      %v885 = vrot.slane %v582, 1
      %v886 = vrot.slane %v598, 1
      %v887 = vsel %vm858, %v885, %v886
      %v888 = vrot.slane %v583, 1
      %v889 = vrot.slane %v599, 1
      %v890 = vsel %vm858, %v888, %v889
      %v891 = vrot.slane %v584, 1
      %v892 = vrot.slane %v600, 1
      %v893 = vsel %vm858, %v891, %v892
      %v894 = vrot.slane %v585, 1
      %v895 = vrot.slane %v601, 1
      %v896 = vsel %vm858, %v894, %v895
      %v897 = vrot.slane %v586, 1
      %v898 = vrot.slane %v602, 1
      %v899 = vsel %vm858, %v897, %v898
      %v900 = vrot.slane %v587, 1
      %v901 = vrot.slane %v603, 1
      %v902 = vsel %vm858, %v900, %v901
      %v903 = vrot.slane %v588, 1
      %v904 = vrot.slane %v604, 1
      %v905 = vsel %vm858, %v903, %v904
      %906 = vrot.lane.b32.xlu0 %v860, 8
      %v907 = vpop.permute.xlu0 %906
      %908 = vrot.lane.b32.xlu0 %v863, 8
      %v909 = vpop.permute.xlu0 %908
      %910 = vrot.lane.b32.xlu0 %v866, 8
      %v911 = vpop.permute.xlu0 %910
      %912 = vrot.lane.b32.xlu0 %v869, 8
      %v913 = vpop.permute.xlu0 %912
      %914 = vrot.lane.b32.xlu0 %v872, 8
      %v915 = vpop.permute.xlu0 %914
      %916 = vrot.lane.b32.xlu0 %v875, 8
      %v917 = vpop.permute.xlu0 %916
      %918 = vrot.lane.b32.xlu0 %v878, 8
      %v919 = vpop.permute.xlu0 %918
      %920 = vrot.lane.b32.xlu0 %v881, 8
      %v921 = vpop.permute.xlu0 %920
      %922 = vrot.lane.b32.xlu0 %v884, 8
      %v923 = vpop.permute.xlu0 %922
      %924 = vrot.lane.b32.xlu0 %v887, 8
      %v925 = vpop.permute.xlu0 %924
      %926 = vrot.lane.b32.xlu0 %v890, 8
      %v927 = vpop.permute.xlu0 %926
      %928 = vrot.lane.b32.xlu0 %v893, 8
      %v929 = vpop.permute.xlu0 %928
      %930 = vrot.lane.b32.xlu0 %v896, 8
      %v931 = vpop.permute.xlu0 %930
      %932 = vrot.lane.b32.xlu0 %v899, 8
      %v933 = vpop.permute.xlu0 %932
      %934 = vrot.lane.b32.xlu0 %v902, 8
      %v935 = vpop.permute.xlu0 %934
      %936 = vrot.lane.b32.xlu0 %v905, 8
      %v937 = vpop.permute.xlu0 %936
      %vm938 = vcmask 31744
      %v940 = vsel %vm938, 0, %v796
      %v942 = vsel %vm938, %v574, %v798
      %v944 = vsel %vm938, %v575, %v800
      %v946 = vsel %vm938, %v576, %v802
      %v948 = vsel %vm938, %v577, %v804
      %v950 = vsel %vm938, %v578, %v806
      %v952 = vsel %vm938, %v579, %v808
      %v954 = vsel %vm938, %v580, %v810
      %v956 = vsel %vm938, %v581, %v812
      %v958 = vsel %vm938, %v582, %v814
      %v960 = vsel %vm938, %v583, %v816
      %v962 = vsel %vm938, %v584, %v818
      %v964 = vsel %vm938, %v585, %v820
      %v966 = vsel %vm938, %v586, %v822
      %v968 = vsel %vm938, %v587, %v824
      %v970 = vsel %vm938, %v588, %v826
      %vm971 = vcmask 64512
      %v973 = vsel %vm971, %v940, %v907
      %v975 = vsel %vm971, %v942, %v909
      %v977 = vsel %vm971, %v944, %v911
      %v979 = vsel %vm971, %v946, %v913
      %v981 = vsel %vm971, %v948, %v915
      %v983 = vsel %vm971, %v950, %v917
      %v985 = vsel %vm971, %v952, %v919
      %v987 = vsel %vm971, %v954, %v921
      %v989 = vsel %vm971, %v956, %v923
      %v991 = vsel %vm971, %v958, %v925
      %v993 = vsel %vm971, %v960, %v927
      %v995 = vsel %vm971, %v962, %v929
      %v997 = vsel %vm971, %v964, %v931
      %v999 = vsel %vm971, %v966, %v933
      %v1001 = vsel %vm971, %v968, %v935
      %v1003 = vsel %vm971, %v970, %v937
      %v1004 = vld [vmem:[%s3] sm:$0xf]
      %v1005 = vld [vmem:[%s3 + $0x4] sm:$0x3]
      %v1007 = vshrl.u32 %v589, 16
      %v1009 = vshll.u32 %v589, 16
      %v1011 = vrot.slane %v1009, 1
      %v1012 = vor.u32 %v1007, %v1011
      %v1014 = vshll.u32 %v605, 16
      %v1016 = vrot.slane %v1014, 1
      %v1017 = vsel %vm606, %v1012, %v1016
      %1018 = vrot.lane.b32.xlu0 %v1017, 4
      %v1019 = vpop.permute.xlu0 %1018
      %v1022 = vrot.slane %v589, 1
      %v1023 = vrot.slane %v605, 1
      %v1024 = vsel %vm858, %v1022, %v1023
      %1025 = vrot.lane.b32.xlu0 %v1024, 8
      %v1026 = vpop.permute.xlu0 %1025
      %v1028 = vsel %vm938, %v589, %v1019
      %v1030 = vsel %vm971, %v1028, %v1026
      %s1031 = scalar_lea.vmem %s3, 8
      %v1032 = vld [vmem:[%s1031] sm:$0xf]
      %v1033 = vld [vmem:[%s1031 + $0x4] sm:$0x3]
      %v1036 = vunpack.c.l.b16 %v1032
      %v1037 = vunpack.c.l.b16 %v1033
      %v1038 = vpack.c.b16 %v1037, %v1036
      %vm1039 = vcmask 97280
      %v1040 = vsel %vm1039, %v975, 0
      %v1042 = vsel %vm1039, %v977, 0
      %v1044 = vsel %vm1039, %v979, 0
      %v1046 = vsel %vm1039, %v981, 0
      %v1048 = vsel %vm1039, %v983, 0
      %v1050 = vsel %vm1039, %v985, 0
      %v1052 = vsel %vm1039, %v987, 0
      %v1054 = vsel %vm1039, %v989, 0
      %v1056 = vsel %vm1039, %v991, 0
      %v1058 = vsel %vm1039, %v993, 0
      %v1060 = vsel %vm1039, %v995, 0
      %v1062 = vsel %vm1039, %v997, 0
      %v1064 = vsel %vm1039, %v999, 0
      %v1066 = vsel %vm1039, %v1001, 0
      %v1068 = vsel %vm1039, %v1003, 0
      %v1070 = vsel %vm1039, %v1030, 0
      %vm1072 = vcmask 1045504
      %v1074 = vsel %vm1072, %v1038, 0
      %1076 = vmatprep.subr.bf16.mxu0 0
      %1077 = vmatpush1.bf16.msra.mxu0 %v1074
      %1078 = vmatprep.subr.bf16.mxu0 0
      %1079 = vmatpush1.bf16.msra.mxu0 0
      %1080 = vmatprep.subr.bf16.mxu0 0
      %1081 = vmatpush1.bf16.msra.mxu0 0
      %1082 = vmatprep.subr.bf16.mxu0 0
      %1083 = vmatpush1.bf16.msra.mxu0 0
      %1084 = vmatprep.subr.bf16.mxu0 0
      %1085 = vmatpush1.bf16.msra.mxu0 0
      %1086 = vmatprep.subr.bf16.mxu0 0
      %1087 = vmatpush1.bf16.msra.mxu0 0
      %1088 = vmatprep.subr.bf16.mxu0 0
      %1089 = vmatpush1.bf16.msra.mxu0 0
      %1090 = vmatprep.subr.bf16.mxu0 0
      %1091 = vmatpush1.bf16.msra.mxu0 0
      %1092 = vmatprep.subr.bf16.mxu0 0
      %1093 = vmatpush1.bf16.msra.mxu0 0
      %1094 = vmatprep.subr.bf16.mxu0 0
      %1095 = vmatpush1.bf16.msra.mxu0 0
      %1096 = vmatprep.subr.bf16.mxu0 0
      %1097 = vmatpush1.bf16.msra.mxu0 0
      %1098 = vmatprep.subr.bf16.mxu0 0
      %1099 = vmatpush1.bf16.msra.mxu0 0
      %1100 = vmatprep.subr.bf16.mxu0 0
      %1101 = vmatpush1.bf16.msra.mxu0 0
      %1102 = vmatprep.subr.bf16.mxu0 0
      %1103 = vmatpush1.bf16.msra.mxu0 0
      %1104 = vmatprep.subr.bf16.mxu0 0
      %1105 = vmatpush1.bf16.msra.mxu0 0
      %1106 = vmatprep.subr.bf16.mxu0 0
      %1107 = vmatpush1.bf16.msra.mxu0 0
      %1108 = vmatprep.mubr.bf16.mxu0 0
      %1109 = vmatmul.mubr.bf16.gmra.mrb[0].mxu0 %v1040
      %v1110 = vpop.f32.mrb[0].mxu0
      %v1111 = vadd.f32 0.0, %v1110
      %v1112 = vpop.f32.mrb[0].mxu0
      %v1113 = vpop.f32.mrb[0].mxu0
      %v1114 = vadd.f32 0.0, %v1113
      %v1115 = vpop.f32.mrb[0].mxu0
      %1116 = vmatprep.mubr.bf16.mxu0 0
      %1117 = vmatmul.mubr.bf16.gmra.mrb[0].mxu0 %v1042
      %v1118 = vpop.f32.mrb[0].mxu0
      %v1119 = vadd.f32 0.0, %v1118
      %v1120 = vpop.f32.mrb[0].mxu0
      %v1121 = vpop.f32.mrb[0].mxu0
      %v1122 = vadd.f32 0.0, %v1121
      %v1123 = vpop.f32.mrb[0].mxu0
      %1124 = vmatprep.mubr.bf16.mxu0 0
      %1125 = vmatmul.mubr.bf16.gmra.mrb[0].mxu0 %v1044
      %v1126 = vpop.f32.mrb[0].mxu0
      %v1127 = vadd.f32 0.0, %v1126
      %v1128 = vpop.f32.mrb[0].mxu0
      %v1129 = vpop.f32.mrb[0].mxu0
      %v1130 = vadd.f32 0.0, %v1129
      %v1131 = vpop.f32.mrb[0].mxu0
      %1132 = vmatprep.mubr.bf16.mxu0 0
      %1133 = vmatmul.mubr.bf16.gmra.mrb[0].mxu0 %v1046
      %v1134 = vpop.f32.mrb[0].mxu0
      %v1135 = vadd.f32 0.0, %v1134
      %v1136 = vpop.f32.mrb[0].mxu0
      %v1137 = vpop.f32.mrb[0].mxu0
      %v1138 = vadd.f32 0.0, %v1137
      %v1139 = vpop.f32.mrb[0].mxu0
      %1140 = vmatprep.mubr.bf16.mxu0 0
      %1141 = vmatmul.mubr.bf16.gmra.mrb[0].mxu0 %v1048
      %v1142 = vpop.f32.mrb[0].mxu0
      %v1143 = vadd.f32 0.0, %v1142
      %v1144 = vpop.f32.mrb[0].mxu0
      %v1145 = vpop.f32.mrb[0].mxu0
      %v1146 = vadd.f32 0.0, %v1145
      %v1147 = vpop.f32.mrb[0].mxu0
      %1148 = vmatprep.mubr.bf16.mxu0 0
      %1149 = vmatmul.mubr.bf16.gmra.mrb[0].mxu0 %v1050
      %v1150 = vpop.f32.mrb[0].mxu0
      %v1151 = vadd.f32 0.0, %v1150
      %v1152 = vpop.f32.mrb[0].mxu0
      %v1153 = vpop.f32.mrb[0].mxu0
      %v1154 = vadd.f32 0.0, %v1153
      %v1155 = vpop.f32.mrb[0].mxu0
      %1156 = vmatprep.mubr.bf16.mxu0 0
      %1157 = vmatmul.mubr.bf16.gmra.mrb[0].mxu0 %v1052
      %v1158 = vpop.f32.mrb[0].mxu0
      %v1159 = vadd.f32 0.0, %v1158
      %v1160 = vpop.f32.mrb[0].mxu0
      %v1161 = vpop.f32.mrb[0].mxu0
      %v1162 = vadd.f32 0.0, %v1161
      %v1163 = vpop.f32.mrb[0].mxu0
      %1164 = vmatprep.mubr.bf16.mxu0 0
      %1165 = vmatmul.mubr.bf16.gmra.mrb[0].mxu0 %v1054
      %v1166 = vpop.f32.mrb[0].mxu0
      %v1167 = vadd.f32 0.0, %v1166
      %v1168 = vpop.f32.mrb[0].mxu0
      %v1169 = vpop.f32.mrb[0].mxu0
      %v1170 = vadd.f32 0.0, %v1169
      %v1171 = vpop.f32.mrb[0].mxu0
      %1172 = vmatprep.mubr.bf16.mxu0 0
      %1173 = vmatmul.mubr.bf16.gmra.mrb[0].mxu0 %v1056
      %v1174 = vpop.f32.mrb[0].mxu0
      %v1175 = vadd.f32 0.0, %v1174
      %v1176 = vpop.f32.mrb[0].mxu0
      %v1177 = vpop.f32.mrb[0].mxu0
      %v1178 = vadd.f32 0.0, %v1177
      %v1179 = vpop.f32.mrb[0].mxu0
      %1180 = vmatprep.mubr.bf16.mxu0 0
      %1181 = vmatmul.mubr.bf16.gmra.mrb[0].mxu0 %v1058
      %v1182 = vpop.f32.mrb[0].mxu0
      %v1183 = vadd.f32 0.0, %v1182
      %v1184 = vpop.f32.mrb[0].mxu0
      %v1185 = vpop.f32.mrb[0].mxu0
      %v1186 = vadd.f32 0.0, %v1185
      %v1187 = vpop.f32.mrb[0].mxu0
      %1188 = vmatprep.mubr.bf16.mxu0 0
      %1189 = vmatmul.mubr.bf16.gmra.mrb[0].mxu0 %v1060
      %v1190 = vpop.f32.mrb[0].mxu0
      %v1191 = vadd.f32 0.0, %v1190
      %v1192 = vpop.f32.mrb[0].mxu0
      %v1193 = vpop.f32.mrb[0].mxu0
      %v1194 = vadd.f32 0.0, %v1193
      %v1195 = vpop.f32.mrb[0].mxu0
      %1196 = vmatprep.mubr.bf16.mxu0 0
      %1197 = vmatmul.mubr.bf16.gmra.mrb[0].mxu0 %v1062
      %v1198 = vpop.f32.mrb[0].mxu0
      %v1199 = vadd.f32 0.0, %v1198
      %v1200 = vpop.f32.mrb[0].mxu0
      %v1201 = vpop.f32.mrb[0].mxu0
      %v1202 = vadd.f32 0.0, %v1201
      %v1203 = vpop.f32.mrb[0].mxu0
      %1204 = vmatprep.mubr.bf16.mxu0 0
      %1205 = vmatmul.mubr.bf16.gmra.mrb[0].mxu0 %v1064
      %v1206 = vpop.f32.mrb[0].mxu0
      %v1207 = vadd.f32 0.0, %v1206
      %v1208 = vpop.f32.mrb[0].mxu0
      %v1209 = vpop.f32.mrb[0].mxu0
      %v1210 = vadd.f32 0.0, %v1209
      %v1211 = vpop.f32.mrb[0].mxu0
      %1212 = vmatprep.mubr.bf16.mxu0 0
      %1213 = vmatmul.mubr.bf16.gmra.mrb[0].mxu0 %v1066
      %v1214 = vpop.f32.mrb[0].mxu0
      %v1215 = vadd.f32 0.0, %v1214
      %v1216 = vpop.f32.mrb[0].mxu0
      %v1217 = vpop.f32.mrb[0].mxu0
      %v1218 = vadd.f32 0.0, %v1217
      %v1219 = vpop.f32.mrb[0].mxu0
      %1220 = vmatprep.mubr.bf16.mxu0 0
      %1221 = vmatmul.mubr.bf16.gmra.mrb[0].mxu0 %v1068
      %v1222 = vpop.f32.mrb[0].mxu0
      %v1223 = vadd.f32 0.0, %v1222
      %v1224 = vpop.f32.mrb[0].mxu0
      %v1225 = vpop.f32.mrb[0].mxu0
      %v1226 = vadd.f32 0.0, %v1225
      %v1227 = vpop.f32.mrb[0].mxu0
      %1228 = vmatprep.mubr.bf16.mxu0 0
      %1229 = vmatmul.mubr.bf16.gmra.mrb[0].mxu0 %v1070
      %v1230 = vpop.f32.mrb[0].mxu0
      %v1231 = vadd.f32 0.0, %v1230
      %v1232 = vpop.f32.mrb[0].mxu0
      %v1233 = vpop.f32.mrb[0].mxu0
      %v1234 = vadd.f32 0.0, %v1233
      %v1235 = vpop.f32.mrb[0].mxu0
      %1236 = vdwg.mxu0
      %v1239 = vunpack.c.l.b16 %v1004
      %v1240 = vunpack.c.l.b16 %v1005
      %v1241 = vpack.c.b16 %v1240, %v1239
      %v1242 = vsel %vm1039, %v973, 0
      %v1245 = vsel %vm1072, %v1241, 0
      %1247 = vmatprep.subr.bf16.mxu0 0
      %1248 = vmatpush1.bf16.msra.mxu0 %v1245
      %1249 = vmatprep.subr.bf16.mxu0 0
      %1250 = vmatpush1.bf16.msra.mxu0 0
      %1251 = vmatprep.subr.bf16.mxu0 0
      %1252 = vmatpush1.bf16.msra.mxu0 0
      %1253 = vmatprep.subr.bf16.mxu0 0
      %1254 = vmatpush1.bf16.msra.mxu0 0
      %1255 = vmatprep.subr.bf16.mxu0 0
      %1256 = vmatpush1.bf16.msra.mxu0 0
      %1257 = vmatprep.subr.bf16.mxu0 0
      %1258 = vmatpush1.bf16.msra.mxu0 0
      %1259 = vmatprep.subr.bf16.mxu0 0
      %1260 = vmatpush1.bf16.msra.mxu0 0
      %1261 = vmatprep.subr.bf16.mxu0 0
      %1262 = vmatpush1.bf16.msra.mxu0 0
      %1263 = vmatprep.subr.bf16.mxu0 0
      %1264 = vmatpush1.bf16.msra.mxu0 0
      %1265 = vmatprep.subr.bf16.mxu0 0
      %1266 = vmatpush1.bf16.msra.mxu0 0
      %1267 = vmatprep.subr.bf16.mxu0 0
      %1268 = vmatpush1.bf16.msra.mxu0 0
      %1269 = vmatprep.subr.bf16.mxu0 0
      %1270 = vmatpush1.bf16.msra.mxu0 0
      %1271 = vmatprep.subr.bf16.mxu0 0
      %1272 = vmatpush1.bf16.msra.mxu0 0
      %1273 = vmatprep.subr.bf16.mxu0 0
      %1274 = vmatpush1.bf16.msra.mxu0 0
      %1275 = vmatprep.subr.bf16.mxu0 0
      %1276 = vmatpush1.bf16.msra.mxu0 0
      %1277 = vmatprep.subr.bf16.mxu0 0
      %1278 = vmatpush1.bf16.msra.mxu0 0
      %1279 = vmatprep.mubr.bf16.mxu0 0
      %1280 = vmatmul.mubr.bf16.gmra.mrb[0].mxu0 %v1242
      %v1281 = vpop.f32.mrb[0].mxu0
      %v1282 = vadd.f32 %v1111, %v1281
      %v1283 = vpop.f32.mrb[0].mxu0
      %v1284 = vpop.f32.mrb[0].mxu0
      %v1285 = vadd.f32 %v1114, %v1284
      %v1286 = vpop.f32.mrb[0].mxu0
      %1287 = vmatprep.mubr.bf16.mxu0 0
      %1288 = vmatmul.mubr.bf16.gmra.mrb[0].mxu0 %v1040
      %v1289 = vpop.f32.mrb[0].mxu0
      %v1290 = vadd.f32 %v1119, %v1289
      %v1291 = vpop.f32.mrb[0].mxu0
      %v1292 = vpop.f32.mrb[0].mxu0
      %v1293 = vadd.f32 %v1122, %v1292
      %v1294 = vpop.f32.mrb[0].mxu0
      %1295 = vmatprep.mubr.bf16.mxu0 0
      %1296 = vmatmul.mubr.bf16.gmra.mrb[0].mxu0 %v1042
      %v1297 = vpop.f32.mrb[0].mxu0
      %v1298 = vadd.f32 %v1127, %v1297
      %v1299 = vpop.f32.mrb[0].mxu0
      %v1300 = vpop.f32.mrb[0].mxu0
      %v1301 = vadd.f32 %v1130, %v1300
      %v1302 = vpop.f32.mrb[0].mxu0
      %1303 = vmatprep.mubr.bf16.mxu0 0
      %1304 = vmatmul.mubr.bf16.gmra.mrb[0].mxu0 %v1044
      %v1305 = vpop.f32.mrb[0].mxu0
      %v1306 = vadd.f32 %v1135, %v1305
      %v1307 = vpop.f32.mrb[0].mxu0
      %v1308 = vpop.f32.mrb[0].mxu0
      %v1309 = vadd.f32 %v1138, %v1308
      %v1310 = vpop.f32.mrb[0].mxu0
      %1311 = vmatprep.mubr.bf16.mxu0 0
      %1312 = vmatmul.mubr.bf16.gmra.mrb[0].mxu0 %v1046
      %v1313 = vpop.f32.mrb[0].mxu0
      %v1314 = vadd.f32 %v1143, %v1313
      %v1315 = vpop.f32.mrb[0].mxu0
      %v1316 = vpop.f32.mrb[0].mxu0
      %v1317 = vadd.f32 %v1146, %v1316
      %v1318 = vpop.f32.mrb[0].mxu0
      %1319 = vmatprep.mubr.bf16.mxu0 0
      %1320 = vmatmul.mubr.bf16.gmra.mrb[0].mxu0 %v1048
      %v1321 = vpop.f32.mrb[0].mxu0
      %v1322 = vadd.f32 %v1151, %v1321
      %v1323 = vpop.f32.mrb[0].mxu0
      %v1324 = vpop.f32.mrb[0].mxu0
      %v1325 = vadd.f32 %v1154, %v1324
      %v1326 = vpop.f32.mrb[0].mxu0
      %1327 = vmatprep.mubr.bf16.mxu0 0
      %1328 = vmatmul.mubr.bf16.gmra.mrb[0].mxu0 %v1050
      %v1329 = vpop.f32.mrb[0].mxu0
      %v1330 = vadd.f32 %v1159, %v1329
      %v1331 = vpop.f32.mrb[0].mxu0
      %v1332 = vpop.f32.mrb[0].mxu0
      %v1333 = vadd.f32 %v1162, %v1332
      %v1334 = vpop.f32.mrb[0].mxu0
      %1335 = vmatprep.mubr.bf16.mxu0 0
      %1336 = vmatmul.mubr.bf16.gmra.mrb[0].mxu0 %v1052
      %v1337 = vpop.f32.mrb[0].mxu0
      %v1338 = vadd.f32 %v1167, %v1337
      %v1339 = vpop.f32.mrb[0].mxu0
      %v1340 = vpop.f32.mrb[0].mxu0
      %v1341 = vadd.f32 %v1170, %v1340
      %v1342 = vpop.f32.mrb[0].mxu0
      %1343 = vmatprep.mubr.bf16.mxu0 0
      %1344 = vmatmul.mubr.bf16.gmra.mrb[0].mxu0 %v1054
      %v1345 = vpop.f32.mrb[0].mxu0
      %v1346 = vadd.f32 %v1175, %v1345
      %v1347 = vpop.f32.mrb[0].mxu0
      %v1348 = vpop.f32.mrb[0].mxu0
      %v1349 = vadd.f32 %v1178, %v1348
      %v1350 = vpop.f32.mrb[0].mxu0
      %1351 = vmatprep.mubr.bf16.mxu0 0
      %1352 = vmatmul.mubr.bf16.gmra.mrb[0].mxu0 %v1056
      %v1353 = vpop.f32.mrb[0].mxu0
      %v1354 = vadd.f32 %v1183, %v1353
      %v1355 = vpop.f32.mrb[0].mxu0
      %v1356 = vpop.f32.mrb[0].mxu0
      %v1357 = vadd.f32 %v1186, %v1356
      %v1358 = vpop.f32.mrb[0].mxu0
      %1359 = vmatprep.mubr.bf16.mxu0 0
      %1360 = vmatmul.mubr.bf16.gmra.mrb[0].mxu0 %v1058
      %v1361 = vpop.f32.mrb[0].mxu0
      %v1362 = vadd.f32 %v1191, %v1361
      %v1363 = vpop.f32.mrb[0].mxu0
      %v1364 = vpop.f32.mrb[0].mxu0
      %v1365 = vadd.f32 %v1194, %v1364
      %v1366 = vpop.f32.mrb[0].mxu0
      %1367 = vmatprep.mubr.bf16.mxu0 0
      %1368 = vmatmul.mubr.bf16.gmra.mrb[0].mxu0 %v1060
      %v1369 = vpop.f32.mrb[0].mxu0
      %v1370 = vadd.f32 %v1199, %v1369
      %v1371 = vpop.f32.mrb[0].mxu0
      %v1372 = vpop.f32.mrb[0].mxu0
      %v1373 = vadd.f32 %v1202, %v1372
      %v1374 = vpop.f32.mrb[0].mxu0
      %1375 = vmatprep.mubr.bf16.mxu0 0
      %1376 = vmatmul.mubr.bf16.gmra.mrb[0].mxu0 %v1062
      %v1377 = vpop.f32.mrb[0].mxu0
      %v1378 = vadd.f32 %v1207, %v1377
      %v1379 = vpop.f32.mrb[0].mxu0
      %v1380 = vpop.f32.mrb[0].mxu0
      %v1381 = vadd.f32 %v1210, %v1380
      %v1382 = vpop.f32.mrb[0].mxu0
      %1383 = vmatprep.mubr.bf16.mxu0 0
      %1384 = vmatmul.mubr.bf16.gmra.mrb[0].mxu0 %v1064
      %v1385 = vpop.f32.mrb[0].mxu0
      %v1386 = vadd.f32 %v1215, %v1385
      %v1387 = vpop.f32.mrb[0].mxu0
      %v1388 = vpop.f32.mrb[0].mxu0
      %v1389 = vadd.f32 %v1218, %v1388
      %v1390 = vpop.f32.mrb[0].mxu0
      %1391 = vmatprep.mubr.bf16.mxu0 0
      %1392 = vmatmul.mubr.bf16.gmra.mrb[0].mxu0 %v1066
      %v1393 = vpop.f32.mrb[0].mxu0
      %v1394 = vadd.f32 %v1223, %v1393
      %v1395 = vpop.f32.mrb[0].mxu0
      %v1396 = vpop.f32.mrb[0].mxu0
      %v1397 = vadd.f32 %v1226, %v1396
      %v1398 = vpop.f32.mrb[0].mxu0
      %1399 = vmatprep.mubr.bf16.mxu0 0
      %1400 = vmatmul.mubr.bf16.gmra.mrb[0].mxu0 %v1068
      %v1401 = vpop.f32.mrb[0].mxu0
      %v1402 = vadd.f32 %v1231, %v1401
      %v1403 = vpop.f32.mrb[0].mxu0
      %v1404 = vpop.f32.mrb[0].mxu0
      %v1405 = vadd.f32 %v1234, %v1404
      %v1406 = vpop.f32.mrb[0].mxu0
      %1407 = vdwg.mxu0
      %s1408 = scalar_lea.vmem %s3, 16
      %v1409 = vld [vmem:[%s1408] sm:$0xf]
      %v1410 = vld [vmem:[%s1408 + $0x4] sm:$0x3]
      %v1413 = vunpack.c.l.b16 %v1409
      %v1414 = vunpack.c.l.b16 %v1410
      %v1415 = vpack.c.b16 %v1414, %v1413
      %v1417 = vsel %vm1072, %v1415, 0
      %1419 = vmatprep.subr.bf16.mxu0 0
      %1420 = vmatpush1.bf16.msra.mxu0 %v1417
      %1421 = vmatprep.subr.bf16.mxu0 0
      %1422 = vmatpush1.bf16.msra.mxu0 0
      %1423 = vmatprep.subr.bf16.mxu0 0
      %1424 = vmatpush1.bf16.msra.mxu0 0
      %1425 = vmatprep.subr.bf16.mxu0 0
      %1426 = vmatpush1.bf16.msra.mxu0 0
      %1427 = vmatprep.subr.bf16.mxu0 0
      %1428 = vmatpush1.bf16.msra.mxu0 0
      %1429 = vmatprep.subr.bf16.mxu0 0
      %1430 = vmatpush1.bf16.msra.mxu0 0
      %1431 = vmatprep.subr.bf16.mxu0 0
      %1432 = vmatpush1.bf16.msra.mxu0 0
      %1433 = vmatprep.subr.bf16.mxu0 0
      %1434 = vmatpush1.bf16.msra.mxu0 0
      %1435 = vmatprep.subr.bf16.mxu0 0
      %1436 = vmatpush1.bf16.msra.mxu0 0
      %1437 = vmatprep.subr.bf16.mxu0 0
      %1438 = vmatpush1.bf16.msra.mxu0 0
      %1439 = vmatprep.subr.bf16.mxu0 0
      %1440 = vmatpush1.bf16.msra.mxu0 0
      %1441 = vmatprep.subr.bf16.mxu0 0
      %1442 = vmatpush1.bf16.msra.mxu0 0
      %1443 = vmatprep.subr.bf16.mxu0 0
      %1444 = vmatpush1.bf16.msra.mxu0 0
      %1445 = vmatprep.subr.bf16.mxu0 0
      %1446 = vmatpush1.bf16.msra.mxu0 0
      %1447 = vmatprep.subr.bf16.mxu0 0
      %1448 = vmatpush1.bf16.msra.mxu0 0
      %1449 = vmatprep.subr.bf16.mxu0 0
      %1450 = vmatpush1.bf16.msra.mxu0 0
      %1451 = vmatprep.mubr.bf16.mxu0 0
      %1452 = vmatmul.mubr.bf16.gmra.mrb[0].mxu0 %v1042
      %v1453 = vpop.f32.mrb[0].mxu0
      %v1454 = vadd.f32 0.0, %v1453
      %v1455 = vpop.f32.mrb[0].mxu0
      %v1456 = vpop.f32.mrb[0].mxu0
      %v1457 = vadd.f32 0.0, %v1456
      %v1458 = vpop.f32.mrb[0].mxu0
      %1459 = vmatprep.mubr.bf16.mxu0 0
      %1460 = vmatmul.mubr.bf16.gmra.mrb[0].mxu0 %v1044
      %v1461 = vpop.f32.mrb[0].mxu0
      %v1462 = vadd.f32 0.0, %v1461
      %v1463 = vpop.f32.mrb[0].mxu0
      %v1464 = vpop.f32.mrb[0].mxu0
      %v1465 = vadd.f32 0.0, %v1464
      %v1466 = vpop.f32.mrb[0].mxu0
      %1467 = vmatprep.mubr.bf16.mxu0 0
      %1468 = vmatmul.mubr.bf16.gmra.mrb[0].mxu0 %v1046
      %v1469 = vpop.f32.mrb[0].mxu0
      %v1470 = vadd.f32 0.0, %v1469
      %v1471 = vpop.f32.mrb[0].mxu0
      %v1472 = vpop.f32.mrb[0].mxu0
      %v1473 = vadd.f32 0.0, %v1472
      %v1474 = vpop.f32.mrb[0].mxu0
      %1475 = vmatprep.mubr.bf16.mxu0 0
      %1476 = vmatmul.mubr.bf16.gmra.mrb[0].mxu0 %v1048
      %v1477 = vpop.f32.mrb[0].mxu0
      %v1478 = vadd.f32 0.0, %v1477
      %v1479 = vpop.f32.mrb[0].mxu0
      %v1480 = vpop.f32.mrb[0].mxu0
      %v1481 = vadd.f32 0.0, %v1480
      %v1482 = vpop.f32.mrb[0].mxu0
      %1483 = vmatprep.mubr.bf16.mxu0 0
      %1484 = vmatmul.mubr.bf16.gmra.mrb[0].mxu0 %v1050
      %v1485 = vpop.f32.mrb[0].mxu0
      %v1486 = vadd.f32 0.0, %v1485
      %v1487 = vpop.f32.mrb[0].mxu0
      %v1488 = vpop.f32.mrb[0].mxu0
      %v1489 = vadd.f32 0.0, %v1488
      %v1490 = vpop.f32.mrb[0].mxu0
      %1491 = vmatprep.mubr.bf16.mxu0 0
      %1492 = vmatmul.mubr.bf16.gmra.mrb[0].mxu0 %v1052
      %v1493 = vpop.f32.mrb[0].mxu0
      %v1494 = vadd.f32 0.0, %v1493
      %v1495 = vpop.f32.mrb[0].mxu0
      %v1496 = vpop.f32.mrb[0].mxu0
      %v1497 = vadd.f32 0.0, %v1496
      %v1498 = vpop.f32.mrb[0].mxu0
      %1499 = vmatprep.mubr.bf16.mxu0 0
      %1500 = vmatmul.mubr.bf16.gmra.mrb[0].mxu0 %v1054
      %v1501 = vpop.f32.mrb[0].mxu0
      %v1502 = vadd.f32 0.0, %v1501
      %v1503 = vpop.f32.mrb[0].mxu0
      %v1504 = vpop.f32.mrb[0].mxu0
      %v1505 = vadd.f32 0.0, %v1504
      %v1506 = vpop.f32.mrb[0].mxu0
      %1507 = vmatprep.mubr.bf16.mxu0 0
      %1508 = vmatmul.mubr.bf16.gmra.mrb[0].mxu0 %v1056
      %v1509 = vpop.f32.mrb[0].mxu0
      %v1510 = vadd.f32 0.0, %v1509
      %v1511 = vpop.f32.mrb[0].mxu0
      %v1512 = vpop.f32.mrb[0].mxu0
      %v1513 = vadd.f32 0.0, %v1512
      %v1514 = vpop.f32.mrb[0].mxu0
      %1515 = vmatprep.mubr.bf16.mxu0 0
      %1516 = vmatmul.mubr.bf16.gmra.mrb[0].mxu0 %v1058
      %v1517 = vpop.f32.mrb[0].mxu0
      %v1518 = vadd.f32 0.0, %v1517
      %v1519 = vpop.f32.mrb[0].mxu0
      %v1520 = vpop.f32.mrb[0].mxu0
      %v1521 = vadd.f32 0.0, %v1520
      %v1522 = vpop.f32.mrb[0].mxu0
      %1523 = vmatprep.mubr.bf16.mxu0 0
      %1524 = vmatmul.mubr.bf16.gmra.mrb[0].mxu0 %v1060
      %v1525 = vpop.f32.mrb[0].mxu0
      %v1526 = vadd.f32 0.0, %v1525
      %v1527 = vpop.f32.mrb[0].mxu0
      %v1528 = vpop.f32.mrb[0].mxu0
      %v1529 = vadd.f32 0.0, %v1528
      %v1530 = vpop.f32.mrb[0].mxu0
      %1531 = vmatprep.mubr.bf16.mxu0 0
      %1532 = vmatmul.mubr.bf16.gmra.mrb[0].mxu0 %v1062
      %v1533 = vpop.f32.mrb[0].mxu0
      %v1534 = vadd.f32 0.0, %v1533
      %v1535 = vpop.f32.mrb[0].mxu0
      %v1536 = vpop.f32.mrb[0].mxu0
      %v1537 = vadd.f32 0.0, %v1536
      %v1538 = vpop.f32.mrb[0].mxu0
      %1539 = vmatprep.mubr.bf16.mxu0 0
      %1540 = vmatmul.mubr.bf16.gmra.mrb[0].mxu0 %v1064
      %v1541 = vpop.f32.mrb[0].mxu0
      %v1542 = vadd.f32 0.0, %v1541
      %v1543 = vpop.f32.mrb[0].mxu0
      %v1544 = vpop.f32.mrb[0].mxu0
      %v1545 = vadd.f32 0.0, %v1544
      %v1546 = vpop.f32.mrb[0].mxu0
      %1547 = vmatprep.mubr.bf16.mxu0 0
      %1548 = vmatmul.mubr.bf16.gmra.mrb[0].mxu0 %v1066
      %v1549 = vpop.f32.mrb[0].mxu0
      %v1550 = vadd.f32 0.0, %v1549
      %v1551 = vpop.f32.mrb[0].mxu0
      %v1552 = vpop.f32.mrb[0].mxu0
      %v1553 = vadd.f32 0.0, %v1552
      %v1554 = vpop.f32.mrb[0].mxu0
      %1555 = vmatprep.mubr.bf16.mxu0 0
      %1556 = vmatmul.mubr.bf16.gmra.mrb[0].mxu0 %v1068
      %v1557 = vpop.f32.mrb[0].mxu0
      %v1558 = vadd.f32 0.0, %v1557
      %v1559 = vpop.f32.mrb[0].mxu0
      %v1560 = vpop.f32.mrb[0].mxu0
      %v1561 = vadd.f32 0.0, %v1560
      %v1562 = vpop.f32.mrb[0].mxu0
      %1563 = vmatprep.mubr.bf16.mxu0 0
      %1564 = vmatmul.mubr.bf16.gmra.mrb[0].mxu0 %v1070
      %v1565 = vpop.f32.mrb[0].mxu0
      %v1566 = vadd.f32 0.0, %v1565
      %v1567 = vpop.f32.mrb[0].mxu0
      %v1568 = vpop.f32.mrb[0].mxu0
      %v1569 = vadd.f32 0.0, %v1568
      %v1570 = vpop.f32.mrb[0].mxu0
      %1571 = vmatprep.mubr.bf16.mxu0 0
      %1572 = vmatmul.mubr.bf16.gmra.mrb[0].mxu0 %v1242
      %v1573 = vpop.f32.mrb[0].mxu0
      %v1574 = vadd.f32 0.0, %v1573
      %v1575 = vpop.f32.mrb[0].mxu0
      %v1576 = vpop.f32.mrb[0].mxu0
      %v1577 = vadd.f32 0.0, %v1576
      %v1578 = vpop.f32.mrb[0].mxu0
      %1579 = vdwg.mxu0
      %v1580 = vadd.f32 %v1282, %v1454
      %v1581 = vadd.f32 %v1285, %v1457
      %v1582 = vadd.f32 %v1290, %v1462
      %v1583 = vadd.f32 %v1293, %v1465
      %v1584 = vadd.f32 %v1298, %v1470
      %v1585 = vadd.f32 %v1301, %v1473
      %v1586 = vadd.f32 %v1306, %v1478
      %v1587 = vadd.f32 %v1309, %v1481
      %v1588 = vadd.f32 %v1314, %v1486
      %v1589 = vadd.f32 %v1317, %v1489
      %v1590 = vadd.f32 %v1322, %v1494
      %v1591 = vadd.f32 %v1325, %v1497
      %v1592 = vadd.f32 %v1330, %v1502
      %v1593 = vadd.f32 %v1333, %v1505
      %v1594 = vadd.f32 %v1338, %v1510
      %v1595 = vadd.f32 %v1341, %v1513
      %v1596 = vadd.f32 %v1346, %v1518
      %v1597 = vadd.f32 %v1349, %v1521
      %v1598 = vadd.f32 %v1354, %v1526
      %v1599 = vadd.f32 %v1357, %v1529
      %v1600 = vadd.f32 %v1362, %v1534
      %v1601 = vadd.f32 %v1365, %v1537
      %v1602 = vadd.f32 %v1370, %v1542
      %v1603 = vadd.f32 %v1373, %v1545
      %v1604 = vadd.f32 %v1378, %v1550
      %v1605 = vadd.f32 %v1381, %v1553
      %v1606 = vadd.f32 %v1386, %v1558
      %v1607 = vadd.f32 %v1389, %v1561
      %v1608 = vadd.f32 %v1394, %v1566
      %v1609 = vadd.f32 %v1397, %v1569
      %v1610 = vadd.f32 %v1402, %v1574
      %v1611 = vadd.f32 %v1405, %v1577
      %v1612 = vpack.c.bf16 %v1581, %v1580
      %v1613 = vpack.c.bf16 %v1583, %v1582
      %v1614 = vpack.c.bf16 %v1585, %v1584
      %v1615 = vpack.c.bf16 %v1587, %v1586
      %v1616 = vpack.c.bf16 %v1589, %v1588
      %v1617 = vpack.c.bf16 %v1591, %v1590
      %v1618 = vpack.c.bf16 %v1593, %v1592
      %v1619 = vpack.c.bf16 %v1595, %v1594
      %v1620 = vpack.c.bf16 %v1597, %v1596
      %v1621 = vpack.c.bf16 %v1599, %v1598
      %v1622 = vpack.c.bf16 %v1601, %v1600
      %v1623 = vpack.c.bf16 %v1603, %v1602
      %v1624 = vpack.c.bf16 %v1605, %v1604
      %v1625 = vpack.c.bf16 %v1607, %v1606
      %v1626 = vpack.c.bf16 %v1609, %v1608
      %v1627 = vpack.c.bf16 %v1611, %v1610
      %v1644 = vunpack.c.l.b16 %v1612
      %v1645 = vunpack.c.h.b16 %v1612
      %v1646 = vunpack.c.l.b16 %v1613
      %v1647 = vunpack.c.h.b16 %v1613
      %v1648 = vunpack.c.l.b16 %v1614
      %v1649 = vunpack.c.h.b16 %v1614
      %v1650 = vunpack.c.l.b16 %v1615
      %v1651 = vunpack.c.h.b16 %v1615
      %v1652 = vunpack.c.l.b16 %v1616
      %v1653 = vunpack.c.h.b16 %v1616
      %v1654 = vunpack.c.l.b16 %v1617
      %v1655 = vunpack.c.h.b16 %v1617
      %v1656 = vunpack.c.l.b16 %v1618
      %v1657 = vunpack.c.h.b16 %v1618
      %v1658 = vunpack.c.l.b16 %v1619
      %v1659 = vunpack.c.h.b16 %v1619
      %v1660 = vunpack.c.l.b16 %v1620
      %v1661 = vunpack.c.h.b16 %v1620
      %v1662 = vunpack.c.l.b16 %v1621
      %v1663 = vunpack.c.h.b16 %v1621
      %v1664 = vunpack.c.l.b16 %v1622
      %v1665 = vunpack.c.h.b16 %v1622
      %v1666 = vunpack.c.l.b16 %v1623
      %v1667 = vunpack.c.h.b16 %v1623
      %v1668 = vunpack.c.l.b16 %v1624
      %v1669 = vunpack.c.h.b16 %v1624
      %v1670 = vunpack.c.l.b16 %v1625
      %v1671 = vunpack.c.h.b16 %v1625
      %v1672 = vunpack.c.l.b16 %v1626
      %v1673 = vunpack.c.h.b16 %v1626
      %v1674 = vunpack.c.l.b16 %v1627
      %v1675 = vunpack.c.h.b16 %v1627
      %v1676 = vpack.c.b16 %v1644, %v1644
      %v1677 = vpack.c.b16 %v1645, %v1645
      %v1678 = vpack.c.b16 %v1646, %v1646
      %v1679 = vpack.c.b16 %v1647, %v1647
      %v1680 = vpack.c.b16 %v1648, %v1648
      %v1681 = vpack.c.b16 %v1649, %v1649
      %v1682 = vpack.c.b16 %v1650, %v1650
      %v1683 = vpack.c.b16 %v1651, %v1651
      %v1684 = vpack.c.b16 %v1652, %v1652
      %v1685 = vpack.c.b16 %v1653, %v1653
      %v1686 = vpack.c.b16 %v1654, %v1654
      %v1687 = vpack.c.b16 %v1655, %v1655
      %v1688 = vpack.c.b16 %v1656, %v1656
      %v1689 = vpack.c.b16 %v1657, %v1657
      %v1690 = vpack.c.b16 %v1658, %v1658
      %v1691 = vpack.c.b16 %v1659, %v1659
      %v1692 = vpack.c.b16 %v1660, %v1660
      %v1693 = vpack.c.b16 %v1661, %v1661
      %v1694 = vpack.c.b16 %v1662, %v1662
      %v1695 = vpack.c.b16 %v1663, %v1663
      %v1696 = vpack.c.b16 %v1664, %v1664
      %v1697 = vpack.c.b16 %v1665, %v1665
      %v1698 = vpack.c.b16 %v1666, %v1666
      %v1699 = vpack.c.b16 %v1667, %v1667
      %v1700 = vpack.c.b16 %v1668, %v1668
      %v1701 = vpack.c.b16 %v1669, %v1669
      %v1702 = vpack.c.b16 %v1670, %v1670
      %v1703 = vpack.c.b16 %v1671, %v1671
      %v1704 = vpack.c.b16 %v1672, %v1672
      %v1705 = vpack.c.b16 %v1673, %v1673
      %v1706 = vpack.c.b16 %v1674, %v1674
      %v1707 = vpack.c.b16 %v1675, %v1675
      %vm1740 = vcmask 27648
      %1741 = vst.msk [vmem:[%s231] sm:$0xf] %vm1740, %v1676
      %1742 = vst.msk [vmem:[%s231 + $0x4] sm:$0xf] %vm1740, %v1677
      %1743 = vst.msk [vmem:[%s231 + $0x8] sm:$0xf] %vm1740, %v1678
      %1744 = vst.msk [vmem:[%s231 + $0xc] sm:$0xf] %vm1740, %v1679
      %1745 = vst.msk [vmem:[%s231 + $0x10] sm:$0xf] %vm1740, %v1680
      %1746 = vst.msk [vmem:[%s231 + $0x14] sm:$0xf] %vm1740, %v1681
      %1747 = vst.msk [vmem:[%s231 + $0x18] sm:$0xf] %vm1740, %v1682
      %1748 = vst.msk [vmem:[%s231 + $0x1c] sm:$0xf] %vm1740, %v1683
      %1749 = vst.msk [vmem:[%s231 + $0x20] sm:$0xf] %vm1740, %v1684
      %1750 = vst.msk [vmem:[%s231 + $0x24] sm:$0xf] %vm1740, %v1685
      %1751 = vst.msk [vmem:[%s231 + $0x28] sm:$0xf] %vm1740, %v1686
      %1752 = vst.msk [vmem:[%s231 + $0x2c] sm:$0xf] %vm1740, %v1687
      %1753 = vst.msk [vmem:[%s231 + $0x30] sm:$0xf] %vm1740, %v1688
      %1754 = vst.msk [vmem:[%s231 + $0x34] sm:$0xf] %vm1740, %v1689
      %1755 = vst.msk [vmem:[%s231 + $0x38] sm:$0xf] %vm1740, %v1690
      %1756 = vst.msk [vmem:[%s231 + $0x3c] sm:$0xf] %vm1740, %v1691
      %1757 = vst.msk [vmem:[%s231 + $0x40] sm:$0xf] %vm1740, %v1692
      %1758 = vst.msk [vmem:[%s231 + $0x44] sm:$0xf] %vm1740, %v1693
      %1759 = vst.msk [vmem:[%s231 + $0x48] sm:$0xf] %vm1740, %v1694
      %1760 = vst.msk [vmem:[%s231 + $0x4c] sm:$0xf] %vm1740, %v1695
      %1761 = vst.msk [vmem:[%s231 + $0x50] sm:$0xf] %vm1740, %v1696
      %1762 = vst.msk [vmem:[%s231 + $0x54] sm:$0xf] %vm1740, %v1697
      %1763 = vst.msk [vmem:[%s231 + $0x58] sm:$0xf] %vm1740, %v1698
      %1764 = vst.msk [vmem:[%s231 + $0x5c] sm:$0xf] %vm1740, %v1699
      %1765 = vst.msk [vmem:[%s231 + $0x60] sm:$0xf] %vm1740, %v1700
      %1766 = vst.msk [vmem:[%s231 + $0x64] sm:$0xf] %vm1740, %v1701
      %1767 = vst.msk [vmem:[%s231 + $0x68] sm:$0xf] %vm1740, %v1702
      %1768 = vst.msk [vmem:[%s231 + $0x6c] sm:$0xf] %vm1740, %v1703
      %1769 = vst.msk [vmem:[%s231 + $0x70] sm:$0xf] %vm1740, %v1704
      %1770 = vst.msk [vmem:[%s231 + $0x74] sm:$0xf] %vm1740, %v1705
      %1771 = vst.msk [vmem:[%s231 + $0x78] sm:$0xf] %vm1740, %v1706
      %1772 = vst.msk [vmem:[%s231 + $0x7c] sm:$0xf] %vm1740, %v1707
      %v1773 = vsel %vm938, %v1580, 0.0
      %v1774 = vsel %vm938, %v1581, 0.0
      %v1775 = vadd.f32 %v1773, %v1774
      %v1776 = vsel %vm938, %v1582, 0.0
      %v1777 = vadd.f32 %v1775, %v1776
      %v1778 = vsel %vm938, %v1583, 0.0
      %v1779 = vadd.f32 %v1777, %v1778
      %v1780 = vsel %vm938, %v1584, 0.0
      %v1781 = vadd.f32 %v1779, %v1780
      %v1782 = vsel %vm938, %v1585, 0.0
      %v1783 = vadd.f32 %v1781, %v1782
      %v1784 = vsel %vm938, %v1586, 0.0
      %v1785 = vadd.f32 %v1783, %v1784
      %v1786 = vsel %vm938, %v1587, 0.0
      %v1787 = vadd.f32 %v1785, %v1786
      %v1788 = vsel %vm938, %v1588, 0.0
      %v1789 = vadd.f32 %v1787, %v1788
      %v1790 = vsel %vm938, %v1589, 0.0
      %v1791 = vadd.f32 %v1789, %v1790
      %v1792 = vsel %vm938, %v1590, 0.0
      %v1793 = vadd.f32 %v1791, %v1792
      %v1794 = vsel %vm938, %v1591, 0.0
      %v1795 = vadd.f32 %v1793, %v1794
      %v1796 = vsel %vm938, %v1592, 0.0
      %v1797 = vadd.f32 %v1795, %v1796
      %v1798 = vsel %vm938, %v1593, 0.0
      %v1799 = vadd.f32 %v1797, %v1798
      %v1800 = vsel %vm938, %v1594, 0.0
      %v1801 = vadd.f32 %v1799, %v1800
      %v1802 = vsel %vm938, %v1595, 0.0
      %v1803 = vadd.f32 %v1801, %v1802
      %v1804 = vsel %vm938, %v1596, 0.0
      %v1805 = vadd.f32 %v1803, %v1804
      %v1806 = vsel %vm938, %v1597, 0.0
      %v1807 = vadd.f32 %v1805, %v1806
      %v1808 = vsel %vm938, %v1598, 0.0
      %v1809 = vadd.f32 %v1807, %v1808
      %v1810 = vsel %vm938, %v1599, 0.0
      %v1811 = vadd.f32 %v1809, %v1810
      %v1812 = vsel %vm938, %v1600, 0.0
      %v1813 = vadd.f32 %v1811, %v1812
      %v1814 = vsel %vm938, %v1601, 0.0
      %v1815 = vadd.f32 %v1813, %v1814
      %v1816 = vsel %vm938, %v1602, 0.0
      %v1817 = vadd.f32 %v1815, %v1816
      %v1818 = vsel %vm938, %v1603, 0.0
      %v1819 = vadd.f32 %v1817, %v1818
      %v1820 = vsel %vm938, %v1604, 0.0
      %v1821 = vadd.f32 %v1819, %v1820
      %v1822 = vsel %vm938, %v1605, 0.0
      %v1823 = vadd.f32 %v1821, %v1822
      %v1824 = vsel %vm938, %v1606, 0.0
      %v1825 = vadd.f32 %v1823, %v1824
      %v1826 = vsel %vm938, %v1607, 0.0
      %v1827 = vadd.f32 %v1825, %v1826
      %v1828 = vsel %vm938, %v1608, 0.0
      %v1829 = vadd.f32 %v1827, %v1828
      %v1830 = vsel %vm938, %v1609, 0.0
      %v1831 = vadd.f32 %v1829, %v1830
      %v1832 = vsel %vm938, %v1610, 0.0
      %v1833 = vadd.f32 %v1831, %v1832
      %v1834 = vsel %vm938, %v1611, 0.0
      %v1835 = vadd.f32 %v1833, %v1834
      %v1836 = vrot.slane %v1835, 4
      %v1837 = vadd.f32 %v1835, %v1836
      %v1838 = vrot.slane %v1837, 2
      %v1839 = vadd.f32 %v1837, %v1838
      %v1840 = vrot.slane %v1839, 1
      %v1841 = vadd.f32 %v1839, %v1840
      %v1842 = vmul.f32 %v1580, %v1580
      %v1843 = vmul.f32 %v1581, %v1581
      %v1844 = vmul.f32 %v1582, %v1582
      %v1845 = vmul.f32 %v1583, %v1583
      %v1846 = vmul.f32 %v1584, %v1584
      %v1847 = vmul.f32 %v1585, %v1585
      %v1848 = vmul.f32 %v1586, %v1586
      %v1849 = vmul.f32 %v1587, %v1587
      %v1850 = vmul.f32 %v1588, %v1588
      %v1851 = vmul.f32 %v1589, %v1589
      %v1852 = vmul.f32 %v1590, %v1590
      %v1853 = vmul.f32 %v1591, %v1591
      %v1854 = vmul.f32 %v1592, %v1592
      %v1855 = vmul.f32 %v1593, %v1593
      %v1856 = vmul.f32 %v1594, %v1594
      %v1857 = vmul.f32 %v1595, %v1595
      %v1858 = vmul.f32 %v1596, %v1596
      %v1859 = vmul.f32 %v1597, %v1597
      %v1860 = vmul.f32 %v1598, %v1598
      %v1861 = vmul.f32 %v1599, %v1599
      %v1862 = vmul.f32 %v1600, %v1600
      %v1863 = vmul.f32 %v1601, %v1601
      %v1864 = vmul.f32 %v1602, %v1602
      %v1865 = vmul.f32 %v1603, %v1603
      %v1866 = vmul.f32 %v1604, %v1604
      %v1867 = vmul.f32 %v1605, %v1605
      %v1868 = vmul.f32 %v1606, %v1606
      %v1869 = vmul.f32 %v1607, %v1607
      %v1870 = vmul.f32 %v1608, %v1608
      %v1871 = vmul.f32 %v1609, %v1609
      %v1872 = vmul.f32 %v1610, %v1610
      %v1873 = vmul.f32 %v1611, %v1611
      %v1874 = vsel %vm938, %v1842, 0.0
      %v1875 = vsel %vm938, %v1843, 0.0
      %v1876 = vadd.f32 %v1874, %v1875
      %v1877 = vsel %vm938, %v1844, 0.0
      %v1878 = vadd.f32 %v1876, %v1877
      %v1879 = vsel %vm938, %v1845, 0.0
      %v1880 = vadd.f32 %v1878, %v1879
      %v1881 = vsel %vm938, %v1846, 0.0
      %v1882 = vadd.f32 %v1880, %v1881
      %v1883 = vsel %vm938, %v1847, 0.0
      %v1884 = vadd.f32 %v1882, %v1883
      %v1885 = vsel %vm938, %v1848, 0.0
      %v1886 = vadd.f32 %v1884, %v1885
      %v1887 = vsel %vm938, %v1849, 0.0
      %v1888 = vadd.f32 %v1886, %v1887
      %v1889 = vsel %vm938, %v1850, 0.0
      %v1890 = vadd.f32 %v1888, %v1889
      %v1891 = vsel %vm938, %v1851, 0.0
      %v1892 = vadd.f32 %v1890, %v1891
      %v1893 = vsel %vm938, %v1852, 0.0
      %v1894 = vadd.f32 %v1892, %v1893
      %v1895 = vsel %vm938, %v1853, 0.0
      %v1896 = vadd.f32 %v1894, %v1895
      %v1897 = vsel %vm938, %v1854, 0.0
      %v1898 = vadd.f32 %v1896, %v1897
      %v1899 = vsel %vm938, %v1855, 0.0
      %v1900 = vadd.f32 %v1898, %v1899
      %v1901 = vsel %vm938, %v1856, 0.0
      %v1902 = vadd.f32 %v1900, %v1901
      %v1903 = vsel %vm938, %v1857, 0.0
      %v1904 = vadd.f32 %v1902, %v1903
      %v1905 = vsel %vm938, %v1858, 0.0
      %v1906 = vadd.f32 %v1904, %v1905
      %v1907 = vsel %vm938, %v1859, 0.0
      %v1908 = vadd.f32 %v1906, %v1907
      %v1909 = vsel %vm938, %v1860, 0.0
      %v1910 = vadd.f32 %v1908, %v1909
      %v1911 = vsel %vm938, %v1861, 0.0
      %v1912 = vadd.f32 %v1910, %v1911
      %v1913 = vsel %vm938, %v1862, 0.0
      %v1914 = vadd.f32 %v1912, %v1913
      %v1915 = vsel %vm938, %v1863, 0.0
      %v1916 = vadd.f32 %v1914, %v1915
      %v1917 = vsel %vm938, %v1864, 0.0
      %v1918 = vadd.f32 %v1916, %v1917
      %v1919 = vsel %vm938, %v1865, 0.0
      %v1920 = vadd.f32 %v1918, %v1919
      %v1921 = vsel %vm938, %v1866, 0.0
      %v1922 = vadd.f32 %v1920, %v1921
      %v1923 = vsel %vm938, %v1867, 0.0
      %v1924 = vadd.f32 %v1922, %v1923
      %v1925 = vsel %vm938, %v1868, 0.0
      %v1926 = vadd.f32 %v1924, %v1925
      %v1927 = vsel %vm938, %v1869, 0.0
      %v1928 = vadd.f32 %v1926, %v1927
      %v1929 = vsel %vm938, %v1870, 0.0
      %v1930 = vadd.f32 %v1928, %v1929
      %v1931 = vsel %vm938, %v1871, 0.0
      %v1932 = vadd.f32 %v1930, %v1931
      %v1933 = vsel %vm938, %v1872, 0.0
      %v1934 = vadd.f32 %v1932, %v1933
      %v1935 = vsel %vm938, %v1873, 0.0
      %v1936 = vadd.f32 %v1934, %v1935
      %v1937 = vrot.slane %v1936, 4
      %v1938 = vadd.f32 %v1936, %v1937
      %v1939 = vrot.slane %v1938, 2
      %v1940 = vadd.f32 %v1938, %v1939
      %v1941 = vrot.slane %v1940, 1
      %v1942 = vadd.f32 %v1940, %v1941
      %vm1943 = vcmask 1040384
      %v1944 = vsel %vm1943, %v1841, %v1942
      %vm1945 = vcmask 25600
      %1946 = vst.msk [vmem:[%s235] sm:$0x3] %vm1945, %v1944
      %p1947 = scmp.lt.s32.totalorder %s17, 1
      %s1948 = scalar_select %p1947, %s17, 1
      %s1949 = smul.addr %s1948, 32
      %s1950 = smul.addr %s1949, 4
      %s1951 = scalar_lea.vmem %s4, %s1950
      %p1952 = scmp.lt.s32.totalorder %s17, 1
      %s1953 = scalar_select %p1952, %s17, 1
      %s1954 = smul.addr %s1953, 2
      %s1955 = scalar_lea.vmem %s5, %s1954
      // Predicated region
      $region37: #{bottleneck_pallas.5} parent=35 // pred_check
        %p1956 = pneg %p124
      $region38: #{bottleneck_pallas.5} parent=35 // pred_check_branch
        %1958 = sbr.rel (%p1956) target = $region40
      $region39: #{bottleneck_pallas.5} parent=35 // pred_region
        _
      $region40: #{bottleneck_pallas.5} parent=35 // pred_fallthru
        _
      // Predicated region
      $region41: #{bottleneck_pallas.5} parent=35 // pred_check
        %p1959 = pneg %p150
      $region42: #{bottleneck_pallas.5} parent=35 // pred_check_branch
        %1961 = sbr.rel (%p1959) target = $region44
      $region43: #{bottleneck_pallas.5} parent=35 // pred_region
        _
      $region44: #{bottleneck_pallas.5} parent=35 // pred_fallthru
        _
    $region36: #{bottleneck_pallas.5} parent=5 // pred_fallthru
      _
    %p1962 = scmp.le.s32.totalorder 2, %s12
    // Predicated region
    $region45: #{bottleneck_pallas.5} parent=5 // pred_check
      %p1963 = pneg %p1962
    $region46: #{bottleneck_pallas.5} parent=5 // pred_check_branch
      %1965 = sbr.rel (%p1963) target = $region48
    $region47: #{bottleneck_pallas.5} parent=5 // pred_region
      %s1966 = ssub.s32 %s12, 2
      // Predicated region
      $region49: #{bottleneck_pallas.5} parent=47 // pred_check
        %p1967 = pneg %p130
      $region50: #{bottleneck_pallas.5} parent=47 // pred_check_branch
        %1969 = sbr.rel (%p1967) target = $region52
      $region51: #{bottleneck_pallas.5} parent=47 // pred_region
        %p1970 = scmp.lt.s32.totalorder %s18, 1
        %s1971 = scalar_select %p1970, %s18, 1
        %s1972 = smul.addr %s1971, 32
        %s1973 = smul.addr %s1972, 4
        %s1974 = scalar_lea.vmem %s4, %s1973
      $region52: #{bottleneck_pallas.5} parent=47 // pred_fallthru
        _
      // Predicated region
      $region53: #{bottleneck_pallas.5} parent=47 // pred_check
        %p1975 = pneg %p156
      $region54: #{bottleneck_pallas.5} parent=47 // pred_check_branch
        %1977 = sbr.rel (%p1975) target = $region56
      $region55: #{bottleneck_pallas.5} parent=47 // pred_region
        %p1978 = scmp.lt.s32.totalorder %s18, 1
        %s1979 = scalar_select %p1978, %s18, 1
        %s1980 = smul.addr %s1979, 2
        %s1981 = scalar_lea.vmem %s5, %s1980
      $region56: #{bottleneck_pallas.5} parent=47 // pred_fallthru
        _
    $region48: #{bottleneck_pallas.5} parent=5 // pred_fallthru
      _
  $region6: #{bottleneck_pallas.5} parent=0 // loop_footer
    %s16 = sadd.s32 1, %s12
  $region7: #{bottleneck_pallas.5} parent=0 // loop_footer_branch
    %11 = sbr.rel target = $region3
  $region8: #{bottleneck_pallas.5} parent=0 // loop_exit
    _

</llo_original>
